<compile_context>
chip_gen: v7x
topology: tpu7x:2x2x1
jax: 0.10.0
libtpu: 0.0.40
codegen_flags: <defaults>
</compile_context>

<pallas_src>
import functools

import jax
import jax.numpy as jnp
from jax.experimental import pallas as pl
from jax.experimental.pallas import tpu as pltpu

EPS = 1e-5      # nn.BatchNorm2d default eps
SLOPE = 0.01    # nn.LeakyReLU default negative_slope
LANE = 128      # TPU vreg lane width


def _round_up(x, m):
    return (x + m - 1) // m * m


# ----------------------------------------------------------------------------
# In-kernel helpers
# ----------------------------------------------------------------------------
def _bias_bn_lrelu(z, p_ref, mask, count):
    """Bias + training-mode BatchNorm + LeakyReLU with one-pass masked stats.

    z:    (M, C) f32 pre-activation; rows where mask == 0 are padding/garbage.
    p_ref:(3, C) f32 = [conv bias; BN gamma; BN beta].
    mask: (M, 1) f32 validity mask; `count` = number of valid rows (static).
    """
    p = p_ref[...].astype(jnp.float32)
    z = z + p[0:1, :]                                   # conv bias
    zm = z * mask                                       # exclude invalid rows
    inv = 1.0 / float(count)
    mean = jnp.sum(zm, axis=0, keepdims=True) * inv
    var = jnp.maximum(
        jnp.sum(zm * z, axis=0, keepdims=True) * inv - mean * mean, 0.0)
    scale = p[1:2, :] * jax.lax.rsqrt(var + EPS)
    shift = p[2:3, :] - mean * scale
    y = z * scale + shift
    return jnp.where(y >= 0.0, y, SLOPE * y)            # LeakyReLU(0.01)


# ----------------------------------------------------------------------------
# Fused HeadBlock kernel (both ConvBlocks in one pallas_call)
# ----------------------------------------------------------------------------
def _headblock_kernel(patches_ref, mask_ref, w1_ref, p1_ref, w2_ref, p2_ref,
                      o_ref, ph_ref, *, n, h, w, chp, slack):
    oh, ow = h // 2, w // 2
    s = (oh + 1) * (ow + 1)        # per-image padded phase-grid size
    ns = n * s
    m1p = 4 * ns                   # rows of the phase-ordered conv1 grid
    mask1 = mask_ref[...]          # (m1p, 1) f32

    # ----------------- ConvBlock 1: 3x3, stride 1, pad 1 -------------------
    # im2col patches are built (phase-ordered, halo rows = zero patches) in
    # the wrapper, so conv1 is a single GEMM with no in-kernel relayout.
    z1 = jnp.dot(patches_ref[...], w1_ref[...],
                 preferred_element_type=jnp.float32)     # (m1p, chp) f32
    h1 = _bias_bn_lrelu(z1, p1_ref, mask1, n * h * w)
    # Single f32->bf16 cast; the mask zeroes the 1-pixel halo rows so conv2's
    # zero padding comes for free.  One full-width contiguous VMEM store.
    ph_ref[pl.ds(0, m1p), :] = (h1 * mask1).astype(jnp.bfloat16)
    # Tiny slack region (only ever read by discarded garbage rows) must be
    # finite so it cannot poison the masked BN statistics.
    ph_ref[pl.ds(m1p, slack), :] = jnp.zeros((slack, chp), jnp.bfloat16)

    # ----------------- ConvBlock 2: 3x3, stride 2, pad 1 -------------------
    # Because conv1's output is stored 2x2-phase-de-interleaved and flat,
    # every tap is a contiguous row-slice of ph_ref (no strided reads, no
    # windowed reshapes, no lane concatenation).  Per-tap GEMMs accumulate in
    # f32; the MXU is underfilled at these widths either way.
    z2 = None
    for i in range(3):
        a, p = i // 2, i % 2
        for j in range(3):
            b, q = j // 2, j % 2
            off = (2 * p + q) * ns + a * (ow + 1) + b
            tap = ph_ref[pl.ds(off, ns), :]                       # (ns, chp)
            wt = w2_ref[pl.ds((i * 3 + j) * chp, chp), :]          # (chp, coutp)
            d = jnp.dot(tap, wt, preferred_element_type=jnp.float32)
            z2 = d if z2 is None else z2 + d
    # Phase (1,1)'s validity pattern is exactly the output-row validity.
    mask2 = mask_ref[pl.ds(3 * ns, ns), :]
    y2 = _bias_bn_lrelu(z2, p2_ref, mask2, n * oh * ow)
    o_ref[...] = y2                      # (ns, coutp): lane-dense, unmasked vst


def _build_call(n, h, w, chp, coutp, slack):
    oh, ow = h // 2, w // 2
    ns = n * (oh + 1) * (ow + 1)
    kern = functools.partial(_headblock_kernel, n=n, h=h, w=w, chp=chp,
                             slack=slack)
    vmem = pl.BlockSpec(memory_space=pltpu.MemorySpace.VMEM)
    return pl.pallas_call(
        kern,
        out_shape=jax.ShapeDtypeStruct((ns, coutp), jnp.float32),
        in_specs=[vmem] * 6,
        out_specs=vmem,
        scratch_shapes=[
            # bf16 phase-de-interleaved conv1 output (+ small zero slack).
            pltpu.VMEM((4 * ns + slack, chp), jnp.bfloat16),
        ],
        # Actual footprint at this test shape is ~2 MiB; 32 MiB is a safe
        # budget on every generation (<= 50% of v7x's 64 MiB / TensorCore).
        compiler_params=pltpu.CompilerParams(vmem_limit_bytes=32 * 1024 * 1024),
    )


@jax.jit
def head_block_pallas(x_nchw, params):
    """HeadBlock forward.  x_nchw: (N, Cin, H, W) f32 -> (N, Cout, H//2, W//2)."""
    w1, w2 = params["w1"], params["w2"]                 # HWIO
    k, _, cin, ch = w1.shape
    cout = w2.shape[3]
    n, _, h, w = x_nchw.shape
    assert k == 3 and h % 2 == 0 and w % 2 == 0
    oh, ow = h // 2, w // 2
    s = (oh + 1) * (ow + 1)
    chp = _round_up(ch, LANE)        # lane-dense intermediate channels
    coutp = _round_up(cout, LANE)    # lane-dense output channels
    slack = _round_up(ow + 2, 8)

    # ---------------- wrapper-side im2col for conv1 (cin is tiny) ----------
    x = jnp.transpose(x_nchw.astype(jnp.float32), (0, 2, 3, 1))     # NHWC
    xp = jnp.pad(x, ((0, 0), (1, 1), (1, 1), (0, 0)))
    patches = jnp.concatenate(
        [xp[:, i:i + h, j:j + w, :] for i in range(3) for j in range(3)],
        axis=-1)                                                    # (n,h,w,9cin)

    # -------- phase-ordered (2x2 de-interleaved, 1-px halo) row layout ------
    # Row index = ((2p+q)*n + img)*s + r*(ow+1) + c  corresponds to conv1
    # output pixel (y, x) = (2r+p-1, 2c+q-1); positions outside the image
    # (the halo) are zero patches with mask 0.
    pp = jnp.zeros((2, 2, n, oh + 1, ow + 1, 9 * cin), jnp.float32)
    mk = jnp.zeros((2, 2, n, oh + 1, ow + 1, 1), jnp.float32)
    for p in (0, 1):
        sr = slice(1, h, 2) if p == 0 else slice(0, h, 2)
        dr = slice(1, oh + 1) if p == 0 else slice(0, oh)
        for q in (0, 1):
            sc = slice(1, w, 2) if q == 0 else slice(0, w, 2)
            dc = slice(1, ow + 1) if q == 0 else slice(0, ow)
            pp = pp.at[p, q, :, dr, dc, :].set(patches[:, sr, sc, :])
            mk = mk.at[p, q, :, dr, dc, :].set(1.0)
    patches1 = pp.reshape(4 * n * s, 9 * cin).astype(jnp.bfloat16)
    mask1 = mk.reshape(4 * n * s, 1)

    # -------- weights / (bias, gamma, beta), zero-padded to lane width ------
    w1p = jnp.zeros((9 * cin, chp), jnp.bfloat16).at[:, :ch].set(
        w1.reshape(9 * cin, ch).astype(jnp.bfloat16))
    p1p = jnp.zeros((3, chp), jnp.float32).at[:, :ch].set(
        jnp.stack([params["b1"], params["g1"], params["be1"]], axis=0))
    w2p = jnp.zeros((3, 3, chp, coutp), jnp.float32).at[:, :, :ch, :cout].set(w2)
    w2p = w2p.reshape(9 * chp, coutp).astype(jnp.bfloat16)
    p2p = jnp.zeros((3, coutp), jnp.float32).at[:, :cout].set(
        jnp.stack([params["b2"], params["g2"], params["be2"]], axis=0))

    out2d = _build_call(n, h, w, chp, coutp, slack)(
        patches1, mask1, w1p, p1p, w2p, p2p)
    out = out2d.reshape(n, oh + 1, ow + 1, coutp)[:, :oh, :ow, :cout]
    return jnp.transpose(out, (0, 3, 1, 2))                      # NHWC -> NCHW


# ----------------------------------------------------------------------------
# Pure-JAX reference (same math, f32 everywhere) and synthetic params
# ----------------------------------------------------------------------------
def _conv_block_ref(x, w, b, g, be, stride):
    z = jax.lax.conv_general_dilated(
        x, w, (stride, stride), ((1, 1), (1, 1)),
        dimension_numbers=("NHWC", "HWIO", "NHWC"))
    z = z + b
    mean = jnp.mean(z, axis=(0, 1, 2), keepdims=True)
    var = jnp.mean(jnp.square(z - mean), axis=(0, 1, 2), keepdims=True)
    y = g * ((z - mean) * jax.lax.rsqrt(var + EPS)) + be
    return jnp.where(y >= 0.0, y, SLOPE * y)


@jax.jit
def head_block_ref(x_nchw, params):
    x = jnp.transpose(x_nchw.astype(jnp.float32), (0, 2, 3, 1))
    h1 = _conv_block_ref(x, params["w1"], params["b1"], params["g1"],
                         params["be1"], 1)
    y = _conv_block_ref(h1, params["w2"], params["b2"], params["g2"],
                        params["be2"], 2)
    return jnp.transpose(y, (0, 3, 1, 2))


def init_head_block(key, in_channel, out_channel):
    assert out_channel % 2 == 0
    ch = out_channel // 2
    ks = jax.random.split(key, 8)

    def conv_p(kw, kb, kg, kbe, cin, cout, ksz):
        fan_in = float(cin * ksz * ksz)
        return (jax.random.normal(kw, (ksz, ksz, cin, cout), jnp.float32)
                / jnp.sqrt(fan_in),
                0.01 * jax.random.normal(kb, (cout,), jnp.float32),
                1.0 + 0.1 * jax.random.normal(kg, (cout,), jnp.float32),
                0.1 * jax.random.normal(kbe, (cout,), jnp.float32))

    w1, b1, g1, be1 = conv_p(ks[0], ks[1], ks[2], ks[3], in_channel, ch, 3)
    w2, b2, g2, be2 = conv_p(ks[4], ks[5], ks[6], ks[7], ch, out_channel, 3)
    return dict(w1=w1, b1=b1, g1=g1, be1=be1, w2=w2, b2=b2, g2=g2, be2=be2)


# ----------------------------------------------------------------------------
if __name__ == "__main__":
    key = jax.random.PRNGKey(0)
    k_param, k_x = jax.random.split(key)

    N, CIN, H, W, COUT = 2, 4, 16, 16, 64
    x = jax.random.normal(k_x, (N, CIN, H, W), jnp.float32)          # NCHW
    params = init_head_block(k_param, CIN, COUT)

    y = jax.block_until_ready(head_block_pallas(x, params))
    y_ref = jax.block_until_ready(head_block_ref(x, params))

    assert y.shape == (N, COUT, H // 2, W // 2), y.shape
    assert bool(jnp.isfinite(y).all())
    err = float(jnp.max(jnp.abs(y - y_ref)))
    # Two chained bf16-operand GEMMs (8-bit mantissa) on ~unit-variance
    # post-BN activations: expected max |err| ~2e-2 vs the f32 reference.
    assert err < 8e-2, f"max |err| = {err}"
    print("KERNEL_OK")
</pallas_src>

<mosaic_0001>
module attributes {stable_mosaic.version = 11 : i64} {
  func.func @_headblock_kernel(%arg0: memref<648x36xbf16, #tpu.memory_space<vmem>>, %arg1: memref<648x1xf32, #tpu.memory_space<vmem>>, %arg2: memref<36x128xbf16, #tpu.memory_space<vmem>>, %arg3: memref<3x128xf32, #tpu.memory_space<vmem>>, %arg4: memref<1152x128xbf16, #tpu.memory_space<vmem>>, %arg5: memref<3x128xf32, #tpu.memory_space<vmem>>, %arg6: memref<162x128xf32, #tpu.memory_space<vmem>>, %arg7: memref<664x128xbf16, #tpu.memory_space<vmem>>) attributes {dimension_semantics = [], scalar_prefetch = 0 : i64, scratch_operands = 1 : i64, tpu.core_type = #tpu.core_type<tc>} {
    %c0 = arith.constant 0 : index
    %c0_0 = arith.constant 0 : index
    %0 = vector.load %arg1[%c0, %c0_0] : memref<648x1xf32, #tpu.memory_space<vmem>>, vector<648x1xf32>
    %c0_1 = arith.constant 0 : index
    %c0_2 = arith.constant 0 : index
    %1 = vector.load %arg0[%c0_1, %c0_2] : memref<648x36xbf16, #tpu.memory_space<vmem>>, vector<648x36xbf16>
    %c0_3 = arith.constant 0 : index
    %c0_4 = arith.constant 0 : index
    %2 = vector.load %arg2[%c0_3, %c0_4] : memref<36x128xbf16, #tpu.memory_space<vmem>>, vector<36x128xbf16>
    %cst = arith.constant dense<0.000000e+00> : vector<648x128xf32>
    %3 = tpu.matmul %1, %2, %cst {dimension_numbers = #tpu.dot_dimension_numbers<[1], [0], [0], [1], [0, 0, 1, 1], [], []>} : vector<648x36xbf16>, vector<36x128xbf16>, vector<648x128xf32> -> vector<648x128xf32>
    %c0_5 = arith.constant 0 : index
    %c0_6 = arith.constant 0 : index
    %4 = vector.load %arg3[%c0_5, %c0_6] : memref<3x128xf32, #tpu.memory_space<vmem>>, vector<3x128xf32>
    %5 = vector.extract_strided_slice %4 {offsets = [0, 0], sizes = [1, 128], strides = [1, 1]} : vector<3x128xf32> to vector<1x128xf32>
    %6 = vector.broadcast %5 : vector<1x128xf32> to vector<648x128xf32>
    %7 = arith.addf %3, %6 : vector<648x128xf32>
    %8 = vector.broadcast %0 : vector<648x1xf32> to vector<648x128xf32>
    %9 = arith.mulf %7, %8 : vector<648x128xf32>
    %cst_7 = arith.constant dense<0.000000e+00> : vector<128xf32>
    %10 = vector.multi_reduction <add>, %9, %cst_7 [0] : vector<648x128xf32> to vector<128xf32>
    %11 = vector.shape_cast %10 : vector<128xf32> to vector<1x128xf32>
    %cst_8 = arith.constant 0.001953125 : f32
    %12 = vector.broadcast %cst_8 : f32 to vector<1x128xf32>
    %13 = arith.mulf %11, %12 : vector<1x128xf32>
    %14 = arith.mulf %9, %7 : vector<648x128xf32>
    %cst_9 = arith.constant dense<0.000000e+00> : vector<128xf32>
    %15 = vector.multi_reduction <add>, %14, %cst_9 [0] : vector<648x128xf32> to vector<128xf32>
    %16 = vector.shape_cast %15 : vector<128xf32> to vector<1x128xf32>
    %cst_10 = arith.constant 0.001953125 : f32
    %17 = vector.broadcast %cst_10 : f32 to vector<1x128xf32>
    %18 = arith.mulf %16, %17 : vector<1x128xf32>
    %19 = arith.mulf %13, %13 : vector<1x128xf32>
    %20 = arith.subf %18, %19 : vector<1x128xf32>
    %cst_11 = arith.constant 0.000000e+00 : f32
    %21 = vector.broadcast %cst_11 : f32 to vector<1x128xf32>
    %22 = arith.maximumf %20, %21 : vector<1x128xf32>
    %23 = vector.extract_strided_slice %4 {offsets = [1, 0], sizes = [1, 128], strides = [1, 1]} : vector<3x128xf32> to vector<1x128xf32>
    %cst_12 = arith.constant 9.99999974E-6 : f32
    %24 = vector.broadcast %cst_12 : f32 to vector<1x128xf32>
    %25 = arith.addf %22, %24 : vector<1x128xf32>
    %26 = math.rsqrt %25 : vector<1x128xf32>
    %27 = arith.mulf %23, %26 : vector<1x128xf32>
    %28 = vector.extract_strided_slice %4 {offsets = [2, 0], sizes = [1, 128], strides = [1, 1]} : vector<3x128xf32> to vector<1x128xf32>
    %29 = arith.mulf %13, %27 : vector<1x128xf32>
    %30 = arith.subf %28, %29 : vector<1x128xf32>
    %31 = vector.broadcast %27 : vector<1x128xf32> to vector<648x128xf32>
    %32 = arith.mulf %7, %31 : vector<648x128xf32>
    %33 = vector.broadcast %30 : vector<1x128xf32> to vector<648x128xf32>
    %34 = arith.addf %32, %33 : vector<648x128xf32>
    %cst_13 = arith.constant 0.000000e+00 : f32
    %35 = vector.broadcast %cst_13 : f32 to vector<648x128xf32>
    %36 = arith.cmpf oge, %34, %35 : vector<648x128xf32>
    %cst_14 = arith.constant 0.00999999977 : f32
    %37 = vector.broadcast %cst_14 : f32 to vector<648x128xf32>
    %38 = arith.mulf %37, %34 : vector<648x128xf32>
    %39 = arith.select %36, %34, %38 : vector<648x128xi1>, vector<648x128xf32>
    %40 = vector.broadcast %0 : vector<648x1xf32> to vector<648x128xf32>
    %41 = arith.mulf %39, %40 : vector<648x128xf32>
    %42 = arith.truncf %41 : vector<648x128xf32> to vector<648x128xbf16>
    %c0_15 = arith.constant 0 : index
    %c0_16 = arith.constant 0 : index
    %43 = vector.load %arg7[%c0_15, %c0_16] : memref<664x128xbf16, #tpu.memory_space<vmem>>, vector<648x128xbf16>
    tpu.vector_store %arg7[%c0_15, %c0_16], %42 {strides = array<i32>} : memref<664x128xbf16, #tpu.memory_space<vmem>>, vector<648x128xbf16>,
    %cst_17 = arith.constant 0.000000e+00 : bf16
    %44 = vector.broadcast %cst_17 : bf16 to vector<16x128xbf16>
    %c648 = arith.constant 648 : index
    %c0_18 = arith.constant 0 : index
    %45 = vector.load %arg7[%c648, %c0_18] : memref<664x128xbf16, #tpu.memory_space<vmem>>, vector<16x128xbf16>
    tpu.vector_store %arg7[%c648, %c0_18], %44 {strides = array<i32>} : memref<664x128xbf16, #tpu.memory_space<vmem>>, vector<16x128xbf16>,
    %c0_19 = arith.constant 0 : index
    %c0_20 = arith.constant 0 : index
    %46 = vector.load %arg7[%c0_19, %c0_20] : memref<664x128xbf16, #tpu.memory_space<vmem>>, vector<162x128xbf16>
    %c0_21 = arith.constant 0 : index
    %c0_22 = arith.constant 0 : index
    %47 = vector.load %arg4[%c0_21, %c0_22] : memref<1152x128xbf16, #tpu.memory_space<vmem>>, vector<128x128xbf16>
    %cst_23 = arith.constant dense<0.000000e+00> : vector<162x128xf32>
    %48 = tpu.matmul %46, %47, %cst_23 {dimension_numbers = #tpu.dot_dimension_numbers<[1], [0], [0], [1], [0, 0, 1, 1], [], []>} : vector<162x128xbf16>, vector<128x128xbf16>, vector<162x128xf32> -> vector<162x128xf32>
    %c162 = arith.constant 162 : index
    %c0_24 = arith.constant 0 : index
    %49 = vector.load %arg7[%c162, %c0_24] : memref<664x128xbf16, #tpu.memory_space<vmem>>, vector<162x128xbf16>
    %c128 = arith.constant 128 : index
    %c0_25 = arith.constant 0 : index
    %50 = vector.load %arg4[%c128, %c0_25] : memref<1152x128xbf16, #tpu.memory_space<vmem>>, vector<128x128xbf16>
    %cst_26 = arith.constant dense<0.000000e+00> : vector<162x128xf32>
    %51 = tpu.matmul %49, %50, %cst_26 {dimension_numbers = #tpu.dot_dimension_numbers<[1], [0], [0], [1], [0, 0, 1, 1], [], []>} : vector<162x128xbf16>, vector<128x128xbf16>, vector<162x128xf32> -> vector<162x128xf32>
    %52 = arith.addf %48, %51 : vector<162x128xf32>
    %c1 = arith.constant 1 : index
    %c0_27 = arith.constant 0 : index
    %53 = vector.load %arg7[%c1, %c0_27] : memref<664x128xbf16, #tpu.memory_space<vmem>>, vector<162x128xbf16>
    %c256 = arith.constant 256 : index
    %c0_28 = arith.constant 0 : index
    %54 = vector.load %arg4[%c256, %c0_28] : memref<1152x128xbf16, #tpu.memory_space<vmem>>, vector<128x128xbf16>
    %cst_29 = arith.constant dense<0.000000e+00> : vector<162x128xf32>
    %55 = tpu.matmul %53, %54, %cst_29 {dimension_numbers = #tpu.dot_dimension_numbers<[1], [0], [0], [1], [0, 0, 1, 1], [], []>} : vector<162x128xbf16>, vector<128x128xbf16>, vector<162x128xf32> -> vector<162x128xf32>
    %56 = arith.addf %52, %55 : vector<162x128xf32>
    %c324 = arith.constant 324 : index
    %c0_30 = arith.constant 0 : index
    %57 = vector.load %arg7[%c324, %c0_30] : memref<664x128xbf16, #tpu.memory_space<vmem>>, vector<162x128xbf16>
    %c384 = arith.constant 384 : index
    %c0_31 = arith.constant 0 : index
    %58 = vector.load %arg4[%c384, %c0_31] : memref<1152x128xbf16, #tpu.memory_space<vmem>>, vector<128x128xbf16>
    %cst_32 = arith.constant dense<0.000000e+00> : vector<162x128xf32>
    %59 = tpu.matmul %57, %58, %cst_32 {dimension_numbers = #tpu.dot_dimension_numbers<[1], [0], [0], [1], [0, 0, 1, 1], [], []>} : vector<162x128xbf16>, vector<128x128xbf16>, vector<162x128xf32> -> vector<162x128xf32>
    %60 = arith.addf %56, %59 : vector<162x128xf32>
    %c486 = arith.constant 486 : index
    %c0_33 = arith.constant 0 : index
    %61 = vector.load %arg7[%c486, %c0_33] : memref<664x128xbf16, #tpu.memory_space<vmem>>, vector<162x128xbf16>
    %c512 = arith.constant 512 : index
    %c0_34 = arith.constant 0 : index
    %62 = vector.load %arg4[%c512, %c0_34] : memref<1152x128xbf16, #tpu.memory_space<vmem>>, vector<128x128xbf16>
    %cst_35 = arith.constant dense<0.000000e+00> : vector<162x128xf32>
    %63 = tpu.matmul %61, %62, %cst_35 {dimension_numbers = #tpu.dot_dimension_numbers<[1], [0], [0], [1], [0, 0, 1, 1], [], []>} : vector<162x128xbf16>, vector<128x128xbf16>, vector<162x128xf32> -> vector<162x128xf32>
    %64 = arith.addf %60, %63 : vector<162x128xf32>
    %c325 = arith.constant 325 : index
    %c0_36 = arith.constant 0 : index
    %65 = vector.load %arg7[%c325, %c0_36] : memref<664x128xbf16, #tpu.memory_space<vmem>>, vector<162x128xbf16>
    %c640 = arith.constant 640 : index
    %c0_37 = arith.constant 0 : index
    %66 = vector.load %arg4[%c640, %c0_37] : memref<1152x128xbf16, #tpu.memory_space<vmem>>, vector<128x128xbf16>
    %cst_38 = arith.constant dense<0.000000e+00> : vector<162x128xf32>
    %67 = tpu.matmul %65, %66, %cst_38 {dimension_numbers = #tpu.dot_dimension_numbers<[1], [0], [0], [1], [0, 0, 1, 1], [], []>} : vector<162x128xbf16>, vector<128x128xbf16>, vector<162x128xf32> -> vector<162x128xf32>
    %68 = arith.addf %64, %67 : vector<162x128xf32>
    %c9 = arith.constant 9 : index
    %c0_39 = arith.constant 0 : index
    %69 = vector.load %arg7[%c9, %c0_39] : memref<664x128xbf16, #tpu.memory_space<vmem>>, vector<162x128xbf16>
    %c768 = arith.constant 768 : index
    %c0_40 = arith.constant 0 : index
    %70 = vector.load %arg4[%c768, %c0_40] : memref<1152x128xbf16, #tpu.memory_space<vmem>>, vector<128x128xbf16>
    %cst_41 = arith.constant dense<0.000000e+00> : vector<162x128xf32>
    %71 = tpu.matmul %69, %70, %cst_41 {dimension_numbers = #tpu.dot_dimension_numbers<[1], [0], [0], [1], [0, 0, 1, 1], [], []>} : vector<162x128xbf16>, vector<128x128xbf16>, vector<162x128xf32> -> vector<162x128xf32>
    %72 = arith.addf %68, %71 : vector<162x128xf32>
    %c171 = arith.constant 171 : index
    %c0_42 = arith.constant 0 : index
    %73 = vector.load %arg7[%c171, %c0_42] : memref<664x128xbf16, #tpu.memory_space<vmem>>, vector<162x128xbf16>
    %c896 = arith.constant 896 : index
    %c0_43 = arith.constant 0 : index
    %74 = vector.load %arg4[%c896, %c0_43] : memref<1152x128xbf16, #tpu.memory_space<vmem>>, vector<128x128xbf16>
    %cst_44 = arith.constant dense<0.000000e+00> : vector<162x128xf32>
    %75 = tpu.matmul %73, %74, %cst_44 {dimension_numbers = #tpu.dot_dimension_numbers<[1], [0], [0], [1], [0, 0, 1, 1], [], []>} : vector<162x128xbf16>, vector<128x128xbf16>, vector<162x128xf32> -> vector<162x128xf32>
    %76 = arith.addf %72, %75 : vector<162x128xf32>
    %c10 = arith.constant 10 : index
    %c0_45 = arith.constant 0 : index
    %77 = vector.load %arg7[%c10, %c0_45] : memref<664x128xbf16, #tpu.memory_space<vmem>>, vector<162x128xbf16>
    %c1024 = arith.constant 1024 : index
    %c0_46 = arith.constant 0 : index
    %78 = vector.load %arg4[%c1024, %c0_46] : memref<1152x128xbf16, #tpu.memory_space<vmem>>, vector<128x128xbf16>
    %cst_47 = arith.constant dense<0.000000e+00> : vector<162x128xf32>
    %79 = tpu.matmul %77, %78, %cst_47 {dimension_numbers = #tpu.dot_dimension_numbers<[1], [0], [0], [1], [0, 0, 1, 1], [], []>} : vector<162x128xbf16>, vector<128x128xbf16>, vector<162x128xf32> -> vector<162x128xf32>
    %80 = arith.addf %76, %79 : vector<162x128xf32>
    %c486_48 = arith.constant 486 : index
    %c0_49 = arith.constant 0 : index
    %81 = vector.load %arg1[%c486_48, %c0_49] : memref<648x1xf32, #tpu.memory_space<vmem>>, vector<162x1xf32>
    %c0_50 = arith.constant 0 : index
    %c0_51 = arith.constant 0 : index
    %82 = vector.load %arg5[%c0_50, %c0_51] : memref<3x128xf32, #tpu.memory_space<vmem>>, vector<3x128xf32>
    %83 = vector.extract_strided_slice %82 {offsets = [0, 0], sizes = [1, 128], strides = [1, 1]} : vector<3x128xf32> to vector<1x128xf32>
    %84 = vector.broadcast %83 : vector<1x128xf32> to vector<162x128xf32>
    %85 = arith.addf %80, %84 : vector<162x128xf32>
    %86 = vector.broadcast %81 : vector<162x1xf32> to vector<162x128xf32>
    %87 = arith.mulf %85, %86 : vector<162x128xf32>
    %cst_52 = arith.constant dense<0.000000e+00> : vector<128xf32>
    %88 = vector.multi_reduction <add>, %87, %cst_52 [0] : vector<162x128xf32> to vector<128xf32>
    %89 = vector.shape_cast %88 : vector<128xf32> to vector<1x128xf32>
    %cst_53 = arith.constant 7.812500e-03 : f32
    %90 = vector.broadcast %cst_53 : f32 to vector<1x128xf32>
    %91 = arith.mulf %89, %90 : vector<1x128xf32>
    %92 = arith.mulf %87, %85 : vector<162x128xf32>
    %cst_54 = arith.constant dense<0.000000e+00> : vector<128xf32>
    %93 = vector.multi_reduction <add>, %92, %cst_54 [0] : vector<162x128xf32> to vector<128xf32>
    %94 = vector.shape_cast %93 : vector<128xf32> to vector<1x128xf32>
    %cst_55 = arith.constant 7.812500e-03 : f32
    %95 = vector.broadcast %cst_55 : f32 to vector<1x128xf32>
    %96 = arith.mulf %94, %95 : vector<1x128xf32>
    %97 = arith.mulf %91, %91 : vector<1x128xf32>
    %98 = arith.subf %96, %97 : vector<1x128xf32>
    %cst_56 = arith.constant 0.000000e+00 : f32
    %99 = vector.broadcast %cst_56 : f32 to vector<1x128xf32>
    %100 = arith.maximumf %98, %99 : vector<1x128xf32>
    %101 = vector.extract_strided_slice %82 {offsets = [1, 0], sizes = [1, 128], strides = [1, 1]} : vector<3x128xf32> to vector<1x128xf32>
    %cst_57 = arith.constant 9.99999974E-6 : f32
    %102 = vector.broadcast %cst_57 : f32 to vector<1x128xf32>
    %103 = arith.addf %100, %102 : vector<1x128xf32>
    %104 = math.rsqrt %103 : vector<1x128xf32>
    %105 = arith.mulf %101, %104 : vector<1x128xf32>
    %106 = vector.extract_strided_slice %82 {offsets = [2, 0], sizes = [1, 128], strides = [1, 1]} : vector<3x128xf32> to vector<1x128xf32>
    %107 = arith.mulf %91, %105 : vector<1x128xf32>
    %108 = arith.subf %106, %107 : vector<1x128xf32>
    %109 = vector.broadcast %105 : vector<1x128xf32> to vector<162x128xf32>
    %110 = arith.mulf %85, %109 : vector<162x128xf32>
    %111 = vector.broadcast %108 : vector<1x128xf32> to vector<162x128xf32>
    %112 = arith.addf %110, %111 : vector<162x128xf32>
    %cst_58 = arith.constant 0.000000e+00 : f32
    %113 = vector.broadcast %cst_58 : f32 to vector<162x128xf32>
    %114 = arith.cmpf oge, %112, %113 : vector<162x128xf32>
    %cst_59 = arith.constant 0.00999999977 : f32
    %115 = vector.broadcast %cst_59 : f32 to vector<162x128xf32>
    %116 = arith.mulf %115, %112 : vector<162x128xf32>
    %117 = arith.select %114, %112, %116 : vector<162x128xi1>, vector<162x128xf32>
    %c0_60 = arith.constant 0 : index
    %c0_61 = arith.constant 0 : index
    %118 = vector.load %arg6[%c0_60, %c0_61] : memref<162x128xf32, #tpu.memory_space<vmem>>, vector<162x128xf32>
    tpu.vector_store %arg6[%c0_60, %c0_61], %117 {strides = array<i32>} : memref<162x128xf32, #tpu.memory_space<vmem>>, vector<162x128xf32>,
    return
  }
}

</mosaic_0001>

<llo_original>
// kernel: head_block_pallas.1
$region0: #{head_block_pallas.1}
  #allocation0 [shape = 'u32[]', space=smem, size = 0x4, offset = 0x4, fixed_abs, tag = 'smem constant byte address 0x4 - core index']
  #allocation1 [shape = 'u32[144,128]{1,0:T(1,128)}', space=vmem, size = 0x12000, scoped, tag = 'internal scratch']
  #allocation2 [shape = 'bf16[664,128]{1,0:T(8,128)(2,1)}', space=vmem, size = 0x29800, scoped, tag = 'scratch operand']
  %s0 = inlined_call_operand.vmem [shape: bf16[648,36], index: 0, kind: input, shape index: {}]
  %s1 = inlined_call_operand.vmem [shape: f32[648,1], index: 1, kind: input, shape index: {}]
  %s2 = inlined_call_operand.vmem [shape: bf16[36,128], index: 2, kind: input, shape index: {}]
  %s3 = inlined_call_operand.vmem [shape: f32[3,128], index: 3, kind: input, shape index: {}]
  %s4 = inlined_call_operand.vmem [shape: bf16[1152,128], index: 4, kind: input, shape index: {}]
  %s5 = inlined_call_operand.vmem [shape: f32[3,128], index: 5, kind: input, shape index: {}]
  %s6 = inlined_call_operand.vmem [shape: f32[162,128], index: 6, kind: output, shape index: {}]
  %s7 = sld [smem:[#allocation0]]
  $region34: #{head_block_pallas.1} parent=0
    _
  %s9 = ssub.s32 1, %s7
  %s10 = scalar_select 0, %s9, %s7
  // Predicated region
  $region2: #{head_block_pallas.1} parent=0 // pred_check
    _
  $region3: #{head_block_pallas.1} parent=0 // pred_check_branch
    %12 = sbr.rel (0) target = $region5
  $region4: #{head_block_pallas.1} parent=0 // pred_region
    _
  $region5: #{head_block_pallas.1} parent=0 // pred_fallthru
    _
  // Predicated region
  $region6: #{head_block_pallas.1} parent=0 // pred_check
    _
  $region7: #{head_block_pallas.1} parent=0 // pred_check_branch
    %14 = sbr.rel (0) target = $region9
  $region8: #{head_block_pallas.1} parent=0 // pred_region
    _
  $region9: #{head_block_pallas.1} parent=0 // pred_fallthru
    _
  // Predicated region
  $region10: #{head_block_pallas.1} parent=0 // pred_check
    _
  $region11: #{head_block_pallas.1} parent=0 // pred_check_branch
    %16 = sbr.rel (0) target = $region13
  $region12: #{head_block_pallas.1} parent=0 // pred_region
    _
  $region13: #{head_block_pallas.1} parent=0 // pred_fallthru
    _
  // Predicated region
  $region14: #{head_block_pallas.1} parent=0 // pred_check
    _
  $region15: #{head_block_pallas.1} parent=0 // pred_check_branch
    %18 = sbr.rel (0) target = $region17
  $region16: #{head_block_pallas.1} parent=0 // pred_region
    _
  $region17: #{head_block_pallas.1} parent=0 // pred_fallthru
    _
  // Predicated region
  $region18: #{head_block_pallas.1} parent=0 // pred_check
    _
  $region19: #{head_block_pallas.1} parent=0 // pred_check_branch
    %20 = sbr.rel (0) target = $region21
  $region20: #{head_block_pallas.1} parent=0 // pred_region
    _
  $region21: #{head_block_pallas.1} parent=0 // pred_fallthru
    _
  // Predicated region
  $region22: #{head_block_pallas.1} parent=0 // pred_check
    _
  $region23: #{head_block_pallas.1} parent=0 // pred_check_branch
    %22 = sbr.rel (0) target = $region25
  $region24: #{head_block_pallas.1} parent=0 // pred_region
    _
  $region25: #{head_block_pallas.1} parent=0 // pred_fallthru
    _
  %v24 = vld [vmem:[%s1] sm:$0xff]
  %v25 = vld [vmem:[%s1 + $0x8] sm:$0xff]
  %v26 = vld [vmem:[%s1 + $0x10] sm:$0xff]
  %v27 = vld [vmem:[%s1 + $0x18] sm:$0xff]
  %v28 = vld [vmem:[%s1 + $0x20] sm:$0xff]
  %v29 = vld [vmem:[%s1 + $0x28] sm:$0xff]
  %v30 = vld [vmem:[%s1 + $0x30] sm:$0xff]
  %v31 = vld [vmem:[%s1 + $0x38] sm:$0xff]
  %v32 = vld [vmem:[%s1 + $0x40] sm:$0xff]
  %v33 = vld [vmem:[%s1 + $0x48] sm:$0xff]
  %v34 = vld [vmem:[%s1 + $0x50] sm:$0xff]
  %v35 = vld [vmem:[%s1 + $0x58] sm:$0xff]
  %v36 = vld [vmem:[%s1 + $0x60] sm:$0xff]
  %v37 = vld [vmem:[%s1 + $0x68] sm:$0xff]
  %v38 = vld [vmem:[%s1 + $0x70] sm:$0xff]
  %v39 = vld [vmem:[%s1 + $0x78] sm:$0xff]
  %v40 = vld [vmem:[%s1 + $0x80] sm:$0xff]
  %v41 = vld [vmem:[%s1 + $0x88] sm:$0xff]
  %v42 = vld [vmem:[%s1 + $0x90] sm:$0xff]
  %v43 = vld [vmem:[%s1 + $0x98] sm:$0xff]
  %v44 = vld [vmem:[%s1 + $0xa0] sm:$0xff]
  %v45 = vld [vmem:[%s1 + $0xa8] sm:$0xff]
  %v46 = vld [vmem:[%s1 + $0xb0] sm:$0xff]
  %v47 = vld [vmem:[%s1 + $0xb8] sm:$0xff]
  %v48 = vld [vmem:[%s1 + $0xc0] sm:$0xff]
  %v49 = vld [vmem:[%s1 + $0xc8] sm:$0xff]
  %v50 = vld [vmem:[%s1 + $0xd0] sm:$0xff]
  %v51 = vld [vmem:[%s1 + $0xd8] sm:$0xff]
  %v52 = vld [vmem:[%s1 + $0xe0] sm:$0xff]
  %v53 = vld [vmem:[%s1 + $0xe8] sm:$0xff]
  %v54 = vld [vmem:[%s1 + $0xf0] sm:$0xff]
  %v55 = vld [vmem:[%s1 + $0xf8] sm:$0xff]
  %v56 = vld [vmem:[%s1 + $0x100] sm:$0xff]
  %v57 = vld [vmem:[%s1 + $0x108] sm:$0xff]
  %v58 = vld [vmem:[%s1 + $0x110] sm:$0xff]
  %v59 = vld [vmem:[%s1 + $0x118] sm:$0xff]
  %v60 = vld [vmem:[%s1 + $0x120] sm:$0xff]
  %v61 = vld [vmem:[%s1 + $0x128] sm:$0xff]
  %v62 = vld [vmem:[%s1 + $0x130] sm:$0xff]
  %v63 = vld [vmem:[%s1 + $0x138] sm:$0xff]
  %v64 = vld [vmem:[%s1 + $0x140] sm:$0xff]
  %v65 = vld [vmem:[%s1 + $0x148] sm:$0xff]
  %v66 = vld [vmem:[%s1 + $0x150] sm:$0xff]
  %v67 = vld [vmem:[%s1 + $0x158] sm:$0xff]
  %v68 = vld [vmem:[%s1 + $0x160] sm:$0xff]
  %v69 = vld [vmem:[%s1 + $0x168] sm:$0xff]
  %v70 = vld [vmem:[%s1 + $0x170] sm:$0xff]
  %v71 = vld [vmem:[%s1 + $0x178] sm:$0xff]
  %v72 = vld [vmem:[%s1 + $0x180] sm:$0xff]
  %v73 = vld [vmem:[%s1 + $0x188] sm:$0xff]
  %v74 = vld [vmem:[%s1 + $0x190] sm:$0xff]
  %v75 = vld [vmem:[%s1 + $0x198] sm:$0xff]
  %v76 = vld [vmem:[%s1 + $0x1a0] sm:$0xff]
  %v77 = vld [vmem:[%s1 + $0x1a8] sm:$0xff]
  %v78 = vld [vmem:[%s1 + $0x1b0] sm:$0xff]
  %v79 = vld [vmem:[%s1 + $0x1b8] sm:$0xff]
  %v80 = vld [vmem:[%s1 + $0x1c0] sm:$0xff]
  %v81 = vld [vmem:[%s1 + $0x1c8] sm:$0xff]
  %v82 = vld [vmem:[%s1 + $0x1d0] sm:$0xff]
  %v83 = vld [vmem:[%s1 + $0x1d8] sm:$0xff]
  %v84 = vld [vmem:[%s1 + $0x1e0] sm:$0xff]
  %v85 = vld [vmem:[%s1 + $0x1e8] sm:$0xff]
  %v86 = vld [vmem:[%s1 + $0x1f0] sm:$0xff]
  %v87 = vld [vmem:[%s1 + $0x1f8] sm:$0xff]
  %v88 = vld [vmem:[%s1 + $0x200] sm:$0xff]
  %v89 = vld [vmem:[%s1 + $0x208] sm:$0xff]
  %v90 = vld [vmem:[%s1 + $0x210] sm:$0xff]
  %v91 = vld [vmem:[%s1 + $0x218] sm:$0xff]
  %v92 = vld [vmem:[%s1 + $0x220] sm:$0xff]
  %v93 = vld [vmem:[%s1 + $0x228] sm:$0xff]
  %v94 = vld [vmem:[%s1 + $0x230] sm:$0xff]
  %v95 = vld [vmem:[%s1 + $0x238] sm:$0xff]
  %v96 = vld [vmem:[%s1 + $0x240] sm:$0xff]
  %v97 = vld [vmem:[%s1 + $0x248] sm:$0xff]
  %v98 = vld [vmem:[%s1 + $0x250] sm:$0xff]
  %v99 = vld [vmem:[%s1 + $0x258] sm:$0xff]
  %v100 = vld [vmem:[%s1 + $0x260] sm:$0xff]
  %v101 = vld [vmem:[%s1 + $0x268] sm:$0xff]
  %v102 = vld [vmem:[%s1 + $0x270] sm:$0xff]
  %v103 = vld [vmem:[%s1 + $0x278] sm:$0xff]
  %v104 = vld [vmem:[%s1 + $0x280] sm:$0xff]
  %v105 = vld [vmem:[%s0] sm:$0xf]
  %v106 = vld [vmem:[%s0 + $0x4] sm:$0xf]
  %v107 = vld [vmem:[%s0 + $0x8] sm:$0xf]
  %v108 = vld [vmem:[%s0 + $0xc] sm:$0xf]
  %v109 = vld [vmem:[%s0 + $0x10] sm:$0xf]
  %v110 = vld [vmem:[%s0 + $0x14] sm:$0xf]
  %v111 = vld [vmem:[%s0 + $0x18] sm:$0xf]
  %v112 = vld [vmem:[%s0 + $0x1c] sm:$0xf]
  %v113 = vld [vmem:[%s0 + $0x20] sm:$0xf]
  %v114 = vld [vmem:[%s0 + $0x24] sm:$0xf]
  %v115 = vld [vmem:[%s0 + $0x28] sm:$0xf]
  %v116 = vld [vmem:[%s0 + $0x2c] sm:$0xf]
  %v117 = vld [vmem:[%s0 + $0x30] sm:$0xf]
  %v118 = vld [vmem:[%s0 + $0x34] sm:$0xf]
  %v119 = vld [vmem:[%s0 + $0x38] sm:$0xf]
  %v120 = vld [vmem:[%s0 + $0x3c] sm:$0xf]
  %v121 = vld [vmem:[%s0 + $0x40] sm:$0xf]
  %v122 = vld [vmem:[%s0 + $0x44] sm:$0xf]
  %v123 = vld [vmem:[%s0 + $0x48] sm:$0xf]
  %v124 = vld [vmem:[%s0 + $0x4c] sm:$0xf]
  %v125 = vld [vmem:[%s0 + $0x50] sm:$0xf]
  %v126 = vld [vmem:[%s0 + $0x54] sm:$0xf]
  %v127 = vld [vmem:[%s0 + $0x58] sm:$0xf]
  %v128 = vld [vmem:[%s0 + $0x5c] sm:$0xf]
  %v129 = vld [vmem:[%s0 + $0x60] sm:$0xf]
  %v130 = vld [vmem:[%s0 + $0x64] sm:$0xf]
  %v131 = vld [vmem:[%s0 + $0x68] sm:$0xf]
  %v132 = vld [vmem:[%s0 + $0x6c] sm:$0xf]
  %v133 = vld [vmem:[%s0 + $0x70] sm:$0xf]
  %v134 = vld [vmem:[%s0 + $0x74] sm:$0xf]
  %v135 = vld [vmem:[%s0 + $0x78] sm:$0xf]
  %v136 = vld [vmem:[%s0 + $0x7c] sm:$0xf]
  %v137 = vld [vmem:[%s0 + $0x80] sm:$0xf]
  %v138 = vld [vmem:[%s0 + $0x84] sm:$0xf]
  %v139 = vld [vmem:[%s0 + $0x88] sm:$0xf]
  %v140 = vld [vmem:[%s0 + $0x8c] sm:$0xf]
  %v141 = vld [vmem:[%s0 + $0x90] sm:$0xf]
  %v142 = vld [vmem:[%s0 + $0x94] sm:$0xf]
  %v143 = vld [vmem:[%s0 + $0x98] sm:$0xf]
  %v144 = vld [vmem:[%s0 + $0x9c] sm:$0xf]
  %v145 = vld [vmem:[%s0 + $0xa0] sm:$0xf]
  %v146 = vld [vmem:[%s0 + $0xa4] sm:$0xf]
  %v147 = vld [vmem:[%s0 + $0xa8] sm:$0xf]
  %v148 = vld [vmem:[%s0 + $0xac] sm:$0xf]
  %v149 = vld [vmem:[%s0 + $0xb0] sm:$0xf]
  %v150 = vld [vmem:[%s0 + $0xb4] sm:$0xf]
  %v151 = vld [vmem:[%s0 + $0xb8] sm:$0xf]
  %v152 = vld [vmem:[%s0 + $0xbc] sm:$0xf]
  %v153 = vld [vmem:[%s0 + $0xc0] sm:$0xf]
  %v154 = vld [vmem:[%s0 + $0xc4] sm:$0xf]
  %v155 = vld [vmem:[%s0 + $0xc8] sm:$0xf]
  %v156 = vld [vmem:[%s0 + $0xcc] sm:$0xf]
  %v157 = vld [vmem:[%s0 + $0xd0] sm:$0xf]
  %v158 = vld [vmem:[%s0 + $0xd4] sm:$0xf]
  %v159 = vld [vmem:[%s0 + $0xd8] sm:$0xf]
  %v160 = vld [vmem:[%s0 + $0xdc] sm:$0xf]
  %v161 = vld [vmem:[%s0 + $0xe0] sm:$0xf]
  %v162 = vld [vmem:[%s0 + $0xe4] sm:$0xf]
  %v163 = vld [vmem:[%s0 + $0xe8] sm:$0xf]
  %v164 = vld [vmem:[%s0 + $0xec] sm:$0xf]
  %v165 = vld [vmem:[%s0 + $0xf0] sm:$0xf]
  %v166 = vld [vmem:[%s0 + $0xf4] sm:$0xf]
  %v167 = vld [vmem:[%s0 + $0xf8] sm:$0xf]
  %v168 = vld [vmem:[%s0 + $0xfc] sm:$0xf]
  %v169 = vld [vmem:[%s0 + $0x100] sm:$0xf]
  %v170 = vld [vmem:[%s0 + $0x104] sm:$0xf]
  %v171 = vld [vmem:[%s0 + $0x108] sm:$0xf]
  %v172 = vld [vmem:[%s0 + $0x10c] sm:$0xf]
  %v173 = vld [vmem:[%s0 + $0x110] sm:$0xf]
  %v174 = vld [vmem:[%s0 + $0x114] sm:$0xf]
  %v175 = vld [vmem:[%s0 + $0x118] sm:$0xf]
  %v176 = vld [vmem:[%s0 + $0x11c] sm:$0xf]
  %v177 = vld [vmem:[%s0 + $0x120] sm:$0xf]
  %v178 = vld [vmem:[%s0 + $0x124] sm:$0xf]
  %v179 = vld [vmem:[%s0 + $0x128] sm:$0xf]
  %v180 = vld [vmem:[%s0 + $0x12c] sm:$0xf]
  %v181 = vld [vmem:[%s0 + $0x130] sm:$0xf]
  %v182 = vld [vmem:[%s0 + $0x134] sm:$0xf]
  %v183 = vld [vmem:[%s0 + $0x138] sm:$0xf]
  %v184 = vld [vmem:[%s0 + $0x13c] sm:$0xf]
  %v185 = vld [vmem:[%s0 + $0x140] sm:$0xf]
  %v186 = vld [vmem:[%s2] sm:$0xf]
  %v187 = vld [vmem:[%s2 + $0x4] sm:$0xf]
  %v188 = vld [vmem:[%s2 + $0x8] sm:$0xf]
  %v189 = vld [vmem:[%s2 + $0xc] sm:$0xf]
  %v190 = vld [vmem:[%s2 + $0x10] sm:$0x3]
  %v191 = vld [vmem:[%s3] sm:$0x7]
  %v192 = vlaneseq
  %v193 = vshrl.u32 %v192, 7
  %v194 = vsub.s32 0, %v193
  %v195 = vrot.slane %v191, %v194
  %v277 = vunpack.c.l.b16 %v105
  %v278 = vunpack.c.l.b16 %v106
  %v279 = vunpack.c.l.b16 %v107
  %v280 = vunpack.c.l.b16 %v108
  %v281 = vunpack.c.l.b16 %v109
  %v282 = vunpack.c.l.b16 %v110
  %v283 = vunpack.c.l.b16 %v111
  %v284 = vunpack.c.l.b16 %v112
  %v285 = vunpack.c.l.b16 %v113
  %v286 = vunpack.c.l.b16 %v114
  %v287 = vunpack.c.l.b16 %v115
  %v288 = vunpack.c.l.b16 %v116
  %v289 = vunpack.c.l.b16 %v117
  %v290 = vunpack.c.l.b16 %v118
  %v291 = vunpack.c.l.b16 %v119
  %v292 = vunpack.c.l.b16 %v120
  %v293 = vunpack.c.l.b16 %v121
  %v294 = vunpack.c.l.b16 %v122
  %v295 = vunpack.c.l.b16 %v123
  %v296 = vunpack.c.l.b16 %v124
  %v297 = vunpack.c.l.b16 %v125
  %v298 = vunpack.c.l.b16 %v126
  %v299 = vunpack.c.l.b16 %v127
  %v300 = vunpack.c.l.b16 %v128
  %v301 = vunpack.c.l.b16 %v129
  %v302 = vunpack.c.l.b16 %v130
  %v303 = vunpack.c.l.b16 %v131
  %v304 = vunpack.c.l.b16 %v132
  %v305 = vunpack.c.l.b16 %v133
  %v306 = vunpack.c.l.b16 %v134
  %v307 = vunpack.c.l.b16 %v135
  %v308 = vunpack.c.l.b16 %v136
  %v309 = vunpack.c.l.b16 %v137
  %v310 = vunpack.c.l.b16 %v138
  %v311 = vunpack.c.l.b16 %v139
  %v312 = vunpack.c.l.b16 %v140
  %v313 = vunpack.c.l.b16 %v141
  %v314 = vunpack.c.l.b16 %v142
  %v315 = vunpack.c.l.b16 %v143
  %v316 = vunpack.c.l.b16 %v144
  %v317 = vunpack.c.l.b16 %v145
  %v318 = vunpack.c.l.b16 %v146
  %v319 = vunpack.c.l.b16 %v147
  %v320 = vunpack.c.l.b16 %v148
  %v321 = vunpack.c.l.b16 %v149
  %v322 = vunpack.c.l.b16 %v150
  %v323 = vunpack.c.l.b16 %v151
  %v324 = vunpack.c.l.b16 %v152
  %v325 = vunpack.c.l.b16 %v153
  %v326 = vunpack.c.l.b16 %v154
  %v327 = vunpack.c.l.b16 %v155
  %v328 = vunpack.c.l.b16 %v156
  %v329 = vunpack.c.l.b16 %v157
  %v330 = vunpack.c.l.b16 %v158
  %v331 = vunpack.c.l.b16 %v159
  %v332 = vunpack.c.l.b16 %v160
  %v333 = vunpack.c.l.b16 %v161
  %v334 = vunpack.c.l.b16 %v162
  %v335 = vunpack.c.l.b16 %v163
  %v336 = vunpack.c.l.b16 %v164
  %v337 = vunpack.c.l.b16 %v165
  %v338 = vunpack.c.l.b16 %v166
  %v339 = vunpack.c.l.b16 %v167
  %v340 = vunpack.c.l.b16 %v168
  %v341 = vunpack.c.l.b16 %v169
  %v342 = vunpack.c.l.b16 %v170
  %v343 = vunpack.c.l.b16 %v171
  %v344 = vunpack.c.l.b16 %v172
  %v345 = vunpack.c.l.b16 %v173
  %v346 = vunpack.c.l.b16 %v174
  %v347 = vunpack.c.l.b16 %v175
  %v348 = vunpack.c.l.b16 %v176
  %v349 = vunpack.c.l.b16 %v177
  %v350 = vunpack.c.l.b16 %v178
  %v351 = vunpack.c.l.b16 %v179
  %v352 = vunpack.c.l.b16 %v180
  %v353 = vunpack.c.l.b16 %v181
  %v354 = vunpack.c.l.b16 %v182
  %v355 = vunpack.c.l.b16 %v183
  %v356 = vunpack.c.l.b16 %v184
  %v357 = vunpack.c.l.b16 %v185
  %v358 = vpack.c.b16 %v278, %v277
  %v359 = vpack.c.b16 %v280, %v279
  %v360 = vpack.c.b16 %v282, %v281
  %v361 = vpack.c.b16 %v284, %v283
  %v362 = vpack.c.b16 %v286, %v285
  %v363 = vpack.c.b16 %v288, %v287
  %v364 = vpack.c.b16 %v290, %v289
  %v365 = vpack.c.b16 %v292, %v291
  %v366 = vpack.c.b16 %v294, %v293
  %v367 = vpack.c.b16 %v296, %v295
  %v368 = vpack.c.b16 %v298, %v297
  %v369 = vpack.c.b16 %v300, %v299
  %v370 = vpack.c.b16 %v302, %v301
  %v371 = vpack.c.b16 %v304, %v303
  %v372 = vpack.c.b16 %v306, %v305
  %v373 = vpack.c.b16 %v308, %v307
  %v374 = vpack.c.b16 %v310, %v309
  %v375 = vpack.c.b16 %v312, %v311
  %v376 = vpack.c.b16 %v314, %v313
  %v377 = vpack.c.b16 %v316, %v315
  %v378 = vpack.c.b16 %v318, %v317
  %v379 = vpack.c.b16 %v320, %v319
  %v380 = vpack.c.b16 %v322, %v321
  %v381 = vpack.c.b16 %v324, %v323
  %v382 = vpack.c.b16 %v326, %v325
  %v383 = vpack.c.b16 %v328, %v327
  %v384 = vpack.c.b16 %v330, %v329
  %v385 = vpack.c.b16 %v332, %v331
  %v386 = vpack.c.b16 %v334, %v333
  %v387 = vpack.c.b16 %v336, %v335
  %v388 = vpack.c.b16 %v338, %v337
  %v389 = vpack.c.b16 %v340, %v339
  %v390 = vpack.c.b16 %v342, %v341
  %v391 = vpack.c.b16 %v344, %v343
  %v392 = vpack.c.b16 %v346, %v345
  %v393 = vpack.c.b16 %v348, %v347
  %v394 = vpack.c.b16 %v350, %v349
  %v395 = vpack.c.b16 %v352, %v351
  %v396 = vpack.c.b16 %v354, %v353
  %v397 = vpack.c.b16 %v356, %v355
  %v398 = vpack.c.b16 %v357, %v357
  %v404 = vunpack.c.l.b16 %v186
  %v405 = vunpack.c.l.b16 %v187
  %v406 = vunpack.c.l.b16 %v188
  %v407 = vunpack.c.l.b16 %v189
  %v408 = vunpack.c.l.b16 %v190
  %v409 = vpack.c.b16 %v405, %v404
  %v410 = vpack.c.b16 %v407, %v406
  %v411 = vpack.c.b16 %v408, %v408
  %vm414 = vcmask 293888
  %v416 = vsel %vm414, %v358, 0
  %v419 = vsel %vm414, %v359, 0
  %v422 = vsel %vm414, %v360, 0
  %v425 = vsel %vm414, %v361, 0
  %v428 = vsel %vm414, %v362, 0
  %v431 = vsel %vm414, %v363, 0
  %v434 = vsel %vm414, %v364, 0
  %v437 = vsel %vm414, %v365, 0
  %v440 = vsel %vm414, %v366, 0
  %v443 = vsel %vm414, %v367, 0
  %v446 = vsel %vm414, %v368, 0
  %v449 = vsel %vm414, %v369, 0
  %v452 = vsel %vm414, %v370, 0
  %v455 = vsel %vm414, %v371, 0
  %v458 = vsel %vm414, %v372, 0
  %v461 = vsel %vm414, %v373, 0
  %v464 = vsel %vm414, %v374, 0
  %v467 = vsel %vm414, %v375, 0
  %v470 = vsel %vm414, %v376, 0
  %v473 = vsel %vm414, %v377, 0
  %v476 = vsel %vm414, %v378, 0
  %v479 = vsel %vm414, %v379, 0
  %v482 = vsel %vm414, %v380, 0
  %v485 = vsel %vm414, %v381, 0
  %v488 = vsel %vm414, %v382, 0
  %v491 = vsel %vm414, %v383, 0
  %v494 = vsel %vm414, %v384, 0
  %v497 = vsel %vm414, %v385, 0
  %v500 = vsel %vm414, %v386, 0
  %v503 = vsel %vm414, %v387, 0
  %v506 = vsel %vm414, %v388, 0
  %v509 = vsel %vm414, %v389, 0
  %v512 = vsel %vm414, %v390, 0
  %v515 = vsel %vm414, %v391, 0
  %v518 = vsel %vm414, %v392, 0
  %v521 = vsel %vm414, %v393, 0
  %v524 = vsel %vm414, %v394, 0
  %v527 = vsel %vm414, %v395, 0
  %v530 = vsel %vm414, %v396, 0
  %v533 = vsel %vm414, %v397, 0
  %v536 = vsel %vm414, %v398, 0
  %vm538 = vcmask 1041408
  %v540 = vsel %vm538, %v411, 0
  %542 = vmatprep.subr.bf16.mxu0 0
  %543 = vmatpush1.bf16.msra.mxu0 %v409
  %544 = vmatprep.subr.bf16.mxu0 0
  %545 = vmatpush1.bf16.msra.mxu0 %v410
  %546 = vmatprep.subr.bf16.mxu0 0
  %547 = vmatpush1.bf16.msra.mxu0 %v540
  %548 = vmatprep.subr.bf16.mxu0 0
  %549 = vmatpush1.bf16.msra.mxu0 0
  %550 = vmatprep.subr.bf16.mxu0 0
  %551 = vmatpush1.bf16.msra.mxu0 0
  %552 = vmatprep.subr.bf16.mxu0 0
  %553 = vmatpush1.bf16.msra.mxu0 0
  %554 = vmatprep.subr.bf16.mxu0 0
  %555 = vmatpush1.bf16.msra.mxu0 0
  %556 = vmatprep.subr.bf16.mxu0 0
  %557 = vmatpush1.bf16.msra.mxu0 0
  %558 = vmatprep.subr.bf16.mxu0 0
  %559 = vmatpush1.bf16.msra.mxu0 0
  %560 = vmatprep.subr.bf16.mxu0 0
  %561 = vmatpush1.bf16.msra.mxu0 0
  %562 = vmatprep.subr.bf16.mxu0 0
  %563 = vmatpush1.bf16.msra.mxu0 0
  %564 = vmatprep.subr.bf16.mxu0 0
  %565 = vmatpush1.bf16.msra.mxu0 0
  %566 = vmatprep.subr.bf16.mxu0 0
  %567 = vmatpush1.bf16.msra.mxu0 0
  %568 = vmatprep.subr.bf16.mxu0 0
  %569 = vmatpush1.bf16.msra.mxu0 0
  %570 = vmatprep.subr.bf16.mxu0 0
  %571 = vmatpush1.bf16.msra.mxu0 0
  %572 = vmatprep.subr.bf16.mxu0 0
  %573 = vmatpush1.bf16.msra.mxu0 0
  %574 = vmatprep.mubr.bf16.mxu0 0
  %575 = vmatmul.mubr.bf16.gmra.mrb[0].mxu0 %v416
  %v576 = vpop.f32.mrb[0].mxu0
  %v577 = vadd.f32 %v195, %v576
  %v578 = vpop.f32.mrb[0].mxu0
  %v579 = vpop.f32.mrb[0].mxu0
  %v580 = vadd.f32 %v195, %v579
  %v581 = vpop.f32.mrb[0].mxu0
  %582 = vmatprep.mubr.bf16.mxu0 0
  %583 = vmatmul.mubr.bf16.gmra.mrb[0].mxu0 %v419
  %v584 = vpop.f32.mrb[0].mxu0
  %v585 = vadd.f32 %v195, %v584
  %v586 = vpop.f32.mrb[0].mxu0
  %v587 = vpop.f32.mrb[0].mxu0
  %v588 = vadd.f32 %v195, %v587
  %v589 = vpop.f32.mrb[0].mxu0
  %590 = vmatprep.mubr.bf16.mxu0 0
  %591 = vmatmul.mubr.bf16.gmra.mrb[0].mxu0 %v422
  %v592 = vpop.f32.mrb[0].mxu0
  %v593 = vadd.f32 %v195, %v592
  %v594 = vpop.f32.mrb[0].mxu0
  %v595 = vpop.f32.mrb[0].mxu0
  %v596 = vadd.f32 %v195, %v595
  %v597 = vpop.f32.mrb[0].mxu0
  %598 = vmatprep.mubr.bf16.mxu0 0
  %599 = vmatmul.mubr.bf16.gmra.mrb[0].mxu0 %v425
  %v600 = vpop.f32.mrb[0].mxu0
  %v601 = vadd.f32 %v195, %v600
  %v602 = vpop.f32.mrb[0].mxu0
  %v603 = vpop.f32.mrb[0].mxu0
  %v604 = vadd.f32 %v195, %v603
  %v605 = vpop.f32.mrb[0].mxu0
  %606 = vmatprep.mubr.bf16.mxu0 0
  %607 = vmatmul.mubr.bf16.gmra.mrb[0].mxu0 %v428
  %v608 = vpop.f32.mrb[0].mxu0
  %v609 = vadd.f32 %v195, %v608
  %v610 = vpop.f32.mrb[0].mxu0
  %v611 = vpop.f32.mrb[0].mxu0
  %v612 = vadd.f32 %v195, %v611
  %v613 = vpop.f32.mrb[0].mxu0
  %614 = vmatprep.mubr.bf16.mxu0 0
  %615 = vmatmul.mubr.bf16.gmra.mrb[0].mxu0 %v431
  %v616 = vpop.f32.mrb[0].mxu0
  %v617 = vadd.f32 %v195, %v616
  %v618 = vpop.f32.mrb[0].mxu0
  %v619 = vpop.f32.mrb[0].mxu0
  %v620 = vadd.f32 %v195, %v619
  %v621 = vpop.f32.mrb[0].mxu0
  %622 = vmatprep.mubr.bf16.mxu0 0
  %623 = vmatmul.mubr.bf16.gmra.mrb[0].mxu0 %v434
  %v624 = vpop.f32.mrb[0].mxu0
  %v625 = vadd.f32 %v195, %v624
  %v626 = vpop.f32.mrb[0].mxu0
  %v627 = vpop.f32.mrb[0].mxu0
  %v628 = vadd.f32 %v195, %v627
  %v629 = vpop.f32.mrb[0].mxu0
  %630 = vmatprep.mubr.bf16.mxu0 0
  %631 = vmatmul.mubr.bf16.gmra.mrb[0].mxu0 %v437
  %v632 = vpop.f32.mrb[0].mxu0
  %v633 = vadd.f32 %v195, %v632
  %v634 = vpop.f32.mrb[0].mxu0
  %v635 = vpop.f32.mrb[0].mxu0
  %v636 = vadd.f32 %v195, %v635
  %v637 = vpop.f32.mrb[0].mxu0
  %638 = vmatprep.mubr.bf16.mxu0 0
  %639 = vmatmul.mubr.bf16.gmra.mrb[0].mxu0 %v440
  %v640 = vpop.f32.mrb[0].mxu0
  %v641 = vadd.f32 %v195, %v640
  %v642 = vpop.f32.mrb[0].mxu0
  %v643 = vpop.f32.mrb[0].mxu0
  %v644 = vadd.f32 %v195, %v643
  %v645 = vpop.f32.mrb[0].mxu0
  %646 = vmatprep.mubr.bf16.mxu0 0
  %647 = vmatmul.mubr.bf16.gmra.mrb[0].mxu0 %v443
  %v648 = vpop.f32.mrb[0].mxu0
  %v649 = vadd.f32 %v195, %v648
  %v650 = vpop.f32.mrb[0].mxu0
  %v651 = vpop.f32.mrb[0].mxu0
  %v652 = vadd.f32 %v195, %v651
  %v653 = vpop.f32.mrb[0].mxu0
  %654 = vmatprep.mubr.bf16.mxu0 0
  %655 = vmatmul.mubr.bf16.gmra.mrb[0].mxu0 %v446
  %v656 = vpop.f32.mrb[0].mxu0
  %v657 = vadd.f32 %v195, %v656
  %v658 = vpop.f32.mrb[0].mxu0
  %v659 = vpop.f32.mrb[0].mxu0
  %v660 = vadd.f32 %v195, %v659
  %v661 = vpop.f32.mrb[0].mxu0
  %662 = vmatprep.mubr.bf16.mxu0 0
  %663 = vmatmul.mubr.bf16.gmra.mrb[0].mxu0 %v449
  %v664 = vpop.f32.mrb[0].mxu0
  %v665 = vadd.f32 %v195, %v664
  %v666 = vpop.f32.mrb[0].mxu0
  %v667 = vpop.f32.mrb[0].mxu0
  %v668 = vadd.f32 %v195, %v667
  %v669 = vpop.f32.mrb[0].mxu0
  %670 = vmatprep.mubr.bf16.mxu0 0
  %671 = vmatmul.mubr.bf16.gmra.mrb[0].mxu0 %v452
  %v672 = vpop.f32.mrb[0].mxu0
  %v673 = vadd.f32 %v195, %v672
  %v674 = vpop.f32.mrb[0].mxu0
  %v675 = vpop.f32.mrb[0].mxu0
  %v676 = vadd.f32 %v195, %v675
  %v677 = vpop.f32.mrb[0].mxu0
  %678 = vmatprep.mubr.bf16.mxu0 0
  %679 = vmatmul.mubr.bf16.gmra.mrb[0].mxu0 %v455
  %v680 = vpop.f32.mrb[0].mxu0
  %v681 = vadd.f32 %v195, %v680
  %v682 = vpop.f32.mrb[0].mxu0
  %v683 = vpop.f32.mrb[0].mxu0
  %v684 = vadd.f32 %v195, %v683
  %v685 = vpop.f32.mrb[0].mxu0
  %686 = vmatprep.mubr.bf16.mxu0 0
  %687 = vmatmul.mubr.bf16.gmra.mrb[0].mxu0 %v458
  %v688 = vpop.f32.mrb[0].mxu0
  %v689 = vadd.f32 %v195, %v688
  %v690 = vpop.f32.mrb[0].mxu0
  %v691 = vpop.f32.mrb[0].mxu0
  %v692 = vadd.f32 %v195, %v691
  %v693 = vpop.f32.mrb[0].mxu0
  %694 = vmatprep.mubr.bf16.mxu0 0
  %695 = vmatmul.mubr.bf16.gmra.mrb[0].mxu0 %v461
  %v696 = vpop.f32.mrb[0].mxu0
  %v697 = vadd.f32 %v195, %v696
  %v698 = vpop.f32.mrb[0].mxu0
  %v699 = vpop.f32.mrb[0].mxu0
  %v700 = vadd.f32 %v195, %v699
  %v701 = vpop.f32.mrb[0].mxu0
  %702 = vmatprep.mubr.bf16.mxu0 0
  %703 = vmatmul.mubr.bf16.gmra.mrb[0].mxu0 %v464
  %v704 = vpop.f32.mrb[0].mxu0
  %v705 = vadd.f32 %v195, %v704
  %v706 = vpop.f32.mrb[0].mxu0
  %v707 = vpop.f32.mrb[0].mxu0
  %v708 = vadd.f32 %v195, %v707
  %v709 = vpop.f32.mrb[0].mxu0
  %710 = vmatprep.mubr.bf16.mxu0 0
  %711 = vmatmul.mubr.bf16.gmra.mrb[0].mxu0 %v467
  %v712 = vpop.f32.mrb[0].mxu0
  %v713 = vadd.f32 %v195, %v712
  %v714 = vpop.f32.mrb[0].mxu0
  %v715 = vpop.f32.mrb[0].mxu0
  %v716 = vadd.f32 %v195, %v715
  %v717 = vpop.f32.mrb[0].mxu0
  %718 = vmatprep.mubr.bf16.mxu0 0
  %719 = vmatmul.mubr.bf16.gmra.mrb[0].mxu0 %v470
  %v720 = vpop.f32.mrb[0].mxu0
  %v721 = vadd.f32 %v195, %v720
  %v722 = vpop.f32.mrb[0].mxu0
  %v723 = vpop.f32.mrb[0].mxu0
  %v724 = vadd.f32 %v195, %v723
  %v725 = vpop.f32.mrb[0].mxu0
  %726 = vmatprep.mubr.bf16.mxu0 0
  %727 = vmatmul.mubr.bf16.gmra.mrb[0].mxu0 %v473
  %v728 = vpop.f32.mrb[0].mxu0
  %v729 = vadd.f32 %v195, %v728
  %v730 = vpop.f32.mrb[0].mxu0
  %v731 = vpop.f32.mrb[0].mxu0
  %v732 = vadd.f32 %v195, %v731
  %v733 = vpop.f32.mrb[0].mxu0
  %734 = vmatprep.mubr.bf16.mxu0 0
  %735 = vmatmul.mubr.bf16.gmra.mrb[0].mxu0 %v476
  %v736 = vpop.f32.mrb[0].mxu0
  %v737 = vadd.f32 %v195, %v736
  %v738 = vpop.f32.mrb[0].mxu0
  %v739 = vpop.f32.mrb[0].mxu0
  %v740 = vadd.f32 %v195, %v739
  %v741 = vpop.f32.mrb[0].mxu0
  %742 = vmatprep.mubr.bf16.mxu0 0
  %743 = vmatmul.mubr.bf16.gmra.mrb[0].mxu0 %v479
  %v744 = vpop.f32.mrb[0].mxu0
  %v745 = vadd.f32 %v195, %v744
  %v746 = vpop.f32.mrb[0].mxu0
  %v747 = vpop.f32.mrb[0].mxu0
  %v748 = vadd.f32 %v195, %v747
  %v749 = vpop.f32.mrb[0].mxu0
  %750 = vmatprep.mubr.bf16.mxu0 0
  %751 = vmatmul.mubr.bf16.gmra.mrb[0].mxu0 %v482
  %v752 = vpop.f32.mrb[0].mxu0
  %v753 = vadd.f32 %v195, %v752
  %v754 = vpop.f32.mrb[0].mxu0
  %v755 = vpop.f32.mrb[0].mxu0
  %v756 = vadd.f32 %v195, %v755
  %v757 = vpop.f32.mrb[0].mxu0
  %758 = vmatprep.mubr.bf16.mxu0 0
  %759 = vmatmul.mubr.bf16.gmra.mrb[0].mxu0 %v485
  %v760 = vpop.f32.mrb[0].mxu0
  %v761 = vadd.f32 %v195, %v760
  %v762 = vpop.f32.mrb[0].mxu0
  %v763 = vpop.f32.mrb[0].mxu0
  %v764 = vadd.f32 %v195, %v763
  %v765 = vpop.f32.mrb[0].mxu0
  %766 = vmatprep.mubr.bf16.mxu0 0
  %767 = vmatmul.mubr.bf16.gmra.mrb[0].mxu0 %v488
  %v768 = vpop.f32.mrb[0].mxu0
  %v769 = vadd.f32 %v195, %v768
  %v770 = vpop.f32.mrb[0].mxu0
  %v771 = vpop.f32.mrb[0].mxu0
  %v772 = vadd.f32 %v195, %v771
  %v773 = vpop.f32.mrb[0].mxu0
  %774 = vmatprep.mubr.bf16.mxu0 0
  %775 = vmatmul.mubr.bf16.gmra.mrb[0].mxu0 %v491
  %v776 = vpop.f32.mrb[0].mxu0
  %v777 = vadd.f32 %v195, %v776
  %v778 = vpop.f32.mrb[0].mxu0
  %v779 = vpop.f32.mrb[0].mxu0
  %v780 = vadd.f32 %v195, %v779
  %v781 = vpop.f32.mrb[0].mxu0
  %782 = vmatprep.mubr.bf16.mxu0 0
  %783 = vmatmul.mubr.bf16.gmra.mrb[0].mxu0 %v494
  %v784 = vpop.f32.mrb[0].mxu0
  %v785 = vadd.f32 %v195, %v784
  %v786 = vpop.f32.mrb[0].mxu0
  %v787 = vpop.f32.mrb[0].mxu0
  %v788 = vadd.f32 %v195, %v787
  %v789 = vpop.f32.mrb[0].mxu0
  %790 = vmatprep.mubr.bf16.mxu0 0
  %791 = vmatmul.mubr.bf16.gmra.mrb[0].mxu0 %v497
  %v792 = vpop.f32.mrb[0].mxu0
  %v793 = vadd.f32 %v195, %v792
  %v794 = vpop.f32.mrb[0].mxu0
  %v795 = vpop.f32.mrb[0].mxu0
  %v796 = vadd.f32 %v195, %v795
  %v797 = vpop.f32.mrb[0].mxu0
  %798 = vmatprep.mubr.bf16.mxu0 0
  %799 = vmatmul.mubr.bf16.gmra.mrb[0].mxu0 %v500
  %v800 = vpop.f32.mrb[0].mxu0
  %v801 = vadd.f32 %v195, %v800
  %v802 = vpop.f32.mrb[0].mxu0
  %v803 = vpop.f32.mrb[0].mxu0
  %v804 = vadd.f32 %v195, %v803
  %v805 = vpop.f32.mrb[0].mxu0
  %806 = vmatprep.mubr.bf16.mxu0 0
  %807 = vmatmul.mubr.bf16.gmra.mrb[0].mxu0 %v503
  %v808 = vpop.f32.mrb[0].mxu0
  %v809 = vadd.f32 %v195, %v808
  %v810 = vpop.f32.mrb[0].mxu0
  %v811 = vpop.f32.mrb[0].mxu0
  %v812 = vadd.f32 %v195, %v811
  %v813 = vpop.f32.mrb[0].mxu0
  %814 = vmatprep.mubr.bf16.mxu0 0
  %815 = vmatmul.mubr.bf16.gmra.mrb[0].mxu0 %v506
  %v816 = vpop.f32.mrb[0].mxu0
  %v817 = vadd.f32 %v195, %v816
  %v818 = vpop.f32.mrb[0].mxu0
  %v819 = vpop.f32.mrb[0].mxu0
  %v820 = vadd.f32 %v195, %v819
  %v821 = vpop.f32.mrb[0].mxu0
  %822 = vmatprep.mubr.bf16.mxu0 0
  %823 = vmatmul.mubr.bf16.gmra.mrb[0].mxu0 %v509
  %v824 = vpop.f32.mrb[0].mxu0
  %v825 = vadd.f32 %v195, %v824
  %v826 = vpop.f32.mrb[0].mxu0
  %v827 = vpop.f32.mrb[0].mxu0
  %v828 = vadd.f32 %v195, %v827
  %v829 = vpop.f32.mrb[0].mxu0
  %830 = vmatprep.mubr.bf16.mxu0 0
  %831 = vmatmul.mubr.bf16.gmra.mrb[0].mxu0 %v512
  %v832 = vpop.f32.mrb[0].mxu0
  %v833 = vadd.f32 %v195, %v832
  %v834 = vpop.f32.mrb[0].mxu0
  %v835 = vpop.f32.mrb[0].mxu0
  %v836 = vadd.f32 %v195, %v835
  %v837 = vpop.f32.mrb[0].mxu0
  %838 = vmatprep.mubr.bf16.mxu0 0
  %839 = vmatmul.mubr.bf16.gmra.mrb[0].mxu0 %v515
  %v840 = vpop.f32.mrb[0].mxu0
  %v841 = vadd.f32 %v195, %v840
  %v842 = vpop.f32.mrb[0].mxu0
  %v843 = vpop.f32.mrb[0].mxu0
  %v844 = vadd.f32 %v195, %v843
  %v845 = vpop.f32.mrb[0].mxu0
  %846 = vmatprep.mubr.bf16.mxu0 0
  %847 = vmatmul.mubr.bf16.gmra.mrb[0].mxu0 %v518
  %v848 = vpop.f32.mrb[0].mxu0
  %v849 = vadd.f32 %v195, %v848
  %v850 = vpop.f32.mrb[0].mxu0
  %v851 = vpop.f32.mrb[0].mxu0
  %v852 = vadd.f32 %v195, %v851
  %v853 = vpop.f32.mrb[0].mxu0
  %854 = vmatprep.mubr.bf16.mxu0 0
  %855 = vmatmul.mubr.bf16.gmra.mrb[0].mxu0 %v521
  %v856 = vpop.f32.mrb[0].mxu0
  %v857 = vadd.f32 %v195, %v856
  %v858 = vpop.f32.mrb[0].mxu0
  %v859 = vpop.f32.mrb[0].mxu0
  %v860 = vadd.f32 %v195, %v859
  %v861 = vpop.f32.mrb[0].mxu0
  %862 = vmatprep.mubr.bf16.mxu0 0
  %863 = vmatmul.mubr.bf16.gmra.mrb[0].mxu0 %v524
  %v864 = vpop.f32.mrb[0].mxu0
  %v865 = vadd.f32 %v195, %v864
  %v866 = vpop.f32.mrb[0].mxu0
  %v867 = vpop.f32.mrb[0].mxu0
  %v868 = vadd.f32 %v195, %v867
  %v869 = vpop.f32.mrb[0].mxu0
  %870 = vmatprep.mubr.bf16.mxu0 0
  %871 = vmatmul.mubr.bf16.gmra.mrb[0].mxu0 %v527
  %v872 = vpop.f32.mrb[0].mxu0
  %v873 = vadd.f32 %v195, %v872
  %v874 = vpop.f32.mrb[0].mxu0
  %v875 = vpop.f32.mrb[0].mxu0
  %v876 = vadd.f32 %v195, %v875
  %v877 = vpop.f32.mrb[0].mxu0
  %878 = vmatprep.mubr.bf16.mxu0 0
  %879 = vmatmul.mubr.bf16.gmra.mrb[0].mxu0 %v530
  %v880 = vpop.f32.mrb[0].mxu0
  %v881 = vadd.f32 %v195, %v880
  %v882 = vpop.f32.mrb[0].mxu0
  %v883 = vpop.f32.mrb[0].mxu0
  %v884 = vadd.f32 %v195, %v883
  %v885 = vpop.f32.mrb[0].mxu0
  %886 = vmatprep.mubr.bf16.mxu0 0
  %887 = vmatmul.mubr.bf16.gmra.mrb[0].mxu0 %v533
  %v888 = vpop.f32.mrb[0].mxu0
  %v889 = vadd.f32 %v195, %v888
  %v890 = vpop.f32.mrb[0].mxu0
  %v891 = vpop.f32.mrb[0].mxu0
  %v892 = vadd.f32 %v195, %v891
  %v893 = vpop.f32.mrb[0].mxu0
  %894 = vmatprep.mubr.bf16.mxu0 0
  %895 = vmatmul.mubr.bf16.gmra.mrb[0].mxu0 %v536
  %v896 = vpop.f32.mrb[0].mxu0
  %v897 = vadd.f32 %v195, %v896
  %v898 = vpop.f32.mrb[0].mxu0
  %v899 = vpop.f32.mrb[0].mxu0
  %v900 = vpop.f32.mrb[0].mxu0
  %901 = vdwg.mxu0
  %903 = vset.pattern.permute.xlu0 0
  %904 = vperm.xlu0 %903, %v24
  %v905 = vpop.permute.xlu0 %904
  %908 = vset.pattern.permute.xlu0 0
  %909 = vperm.xlu0 %908, %v25
  %v910 = vpop.permute.xlu0 %909
  %913 = vset.pattern.permute.xlu0 0
  %914 = vperm.xlu0 %913, %v26
  %v915 = vpop.permute.xlu0 %914
  %918 = vset.pattern.permute.xlu0 0
  %919 = vperm.xlu0 %918, %v27
  %v920 = vpop.permute.xlu0 %919
  %923 = vset.pattern.permute.xlu0 0
  %924 = vperm.xlu0 %923, %v28
  %v925 = vpop.permute.xlu0 %924
  %928 = vset.pattern.permute.xlu0 0
  %929 = vperm.xlu0 %928, %v29
  %v930 = vpop.permute.xlu0 %929
  %933 = vset.pattern.permute.xlu0 0
  %934 = vperm.xlu0 %933, %v30
  %v935 = vpop.permute.xlu0 %934
  %938 = vset.pattern.permute.xlu0 0
  %939 = vperm.xlu0 %938, %v31
  %v940 = vpop.permute.xlu0 %939
  %943 = vset.pattern.permute.xlu0 0
  %944 = vperm.xlu0 %943, %v32
  %v945 = vpop.permute.xlu0 %944
  %948 = vset.pattern.permute.xlu0 0
  %949 = vperm.xlu0 %948, %v33
  %v950 = vpop.permute.xlu0 %949
  %953 = vset.pattern.permute.xlu0 0
  %954 = vperm.xlu0 %953, %v34
  %v955 = vpop.permute.xlu0 %954
  %958 = vset.pattern.permute.xlu0 0
  %959 = vperm.xlu0 %958, %v35
  %v960 = vpop.permute.xlu0 %959
  %963 = vset.pattern.permute.xlu0 0
  %964 = vperm.xlu0 %963, %v36
  %v965 = vpop.permute.xlu0 %964
  %968 = vset.pattern.permute.xlu0 0
  %969 = vperm.xlu0 %968, %v37
  %v970 = vpop.permute.xlu0 %969
  %973 = vset.pattern.permute.xlu0 0
  %974 = vperm.xlu0 %973, %v38
  %v975 = vpop.permute.xlu0 %974
  %978 = vset.pattern.permute.xlu0 0
  %979 = vperm.xlu0 %978, %v39
  %v980 = vpop.permute.xlu0 %979
  %983 = vset.pattern.permute.xlu0 0
  %984 = vperm.xlu0 %983, %v40
  %v985 = vpop.permute.xlu0 %984
  %988 = vset.pattern.permute.xlu0 0
  %989 = vperm.xlu0 %988, %v41
  %v990 = vpop.permute.xlu0 %989
  %993 = vset.pattern.permute.xlu0 0
  %994 = vperm.xlu0 %993, %v42
  %v995 = vpop.permute.xlu0 %994
  %998 = vset.pattern.permute.xlu0 0
  %999 = vperm.xlu0 %998, %v43
  %v1000 = vpop.permute.xlu0 %999
  %1003 = vset.pattern.permute.xlu0 0
  %1004 = vperm.xlu0 %1003, %v44
  %v1005 = vpop.permute.xlu0 %1004
  %1008 = vset.pattern.permute.xlu0 0
  %1009 = vperm.xlu0 %1008, %v45
  %v1010 = vpop.permute.xlu0 %1009
  %1013 = vset.pattern.permute.xlu0 0
  %1014 = vperm.xlu0 %1013, %v46
  %v1015 = vpop.permute.xlu0 %1014
  %1018 = vset.pattern.permute.xlu0 0
  %1019 = vperm.xlu0 %1018, %v47
  %v1020 = vpop.permute.xlu0 %1019
  %1023 = vset.pattern.permute.xlu0 0
  %1024 = vperm.xlu0 %1023, %v48
  %v1025 = vpop.permute.xlu0 %1024
  %1028 = vset.pattern.permute.xlu0 0
  %1029 = vperm.xlu0 %1028, %v49
  %v1030 = vpop.permute.xlu0 %1029
  %1033 = vset.pattern.permute.xlu0 0
  %1034 = vperm.xlu0 %1033, %v50
  %v1035 = vpop.permute.xlu0 %1034
  %1038 = vset.pattern.permute.xlu0 0
  %1039 = vperm.xlu0 %1038, %v51
  %v1040 = vpop.permute.xlu0 %1039
  %1043 = vset.pattern.permute.xlu0 0
  %1044 = vperm.xlu0 %1043, %v52
  %v1045 = vpop.permute.xlu0 %1044
  %1048 = vset.pattern.permute.xlu0 0
  %1049 = vperm.xlu0 %1048, %v53
  %v1050 = vpop.permute.xlu0 %1049
  %1053 = vset.pattern.permute.xlu0 0
  %1054 = vperm.xlu0 %1053, %v54
  %v1055 = vpop.permute.xlu0 %1054
  %1058 = vset.pattern.permute.xlu0 0
  %1059 = vperm.xlu0 %1058, %v55
  %v1060 = vpop.permute.xlu0 %1059
  %1063 = vset.pattern.permute.xlu0 0
  %1064 = vperm.xlu0 %1063, %v56
  %v1065 = vpop.permute.xlu0 %1064
  %1068 = vset.pattern.permute.xlu0 0
  %1069 = vperm.xlu0 %1068, %v57
  %v1070 = vpop.permute.xlu0 %1069
  %1073 = vset.pattern.permute.xlu0 0
  %1074 = vperm.xlu0 %1073, %v58
  %v1075 = vpop.permute.xlu0 %1074
  %1078 = vset.pattern.permute.xlu0 0
  %1079 = vperm.xlu0 %1078, %v59
  %v1080 = vpop.permute.xlu0 %1079
  %1083 = vset.pattern.permute.xlu0 0
  %1084 = vperm.xlu0 %1083, %v60
  %v1085 = vpop.permute.xlu0 %1084
  %1088 = vset.pattern.permute.xlu0 0
  %1089 = vperm.xlu0 %1088, %v61
  %v1090 = vpop.permute.xlu0 %1089
  %1093 = vset.pattern.permute.xlu0 0
  %1094 = vperm.xlu0 %1093, %v62
  %v1095 = vpop.permute.xlu0 %1094
  %1098 = vset.pattern.permute.xlu0 0
  %1099 = vperm.xlu0 %1098, %v63
  %v1100 = vpop.permute.xlu0 %1099
  %1103 = vset.pattern.permute.xlu0 0
  %1104 = vperm.xlu0 %1103, %v64
  %v1105 = vpop.permute.xlu0 %1104
  %1108 = vset.pattern.permute.xlu0 0
  %1109 = vperm.xlu0 %1108, %v65
  %v1110 = vpop.permute.xlu0 %1109
  %1113 = vset.pattern.permute.xlu0 0
  %1114 = vperm.xlu0 %1113, %v66
  %v1115 = vpop.permute.xlu0 %1114
  %1118 = vset.pattern.permute.xlu0 0
  %1119 = vperm.xlu0 %1118, %v67
  %v1120 = vpop.permute.xlu0 %1119
  %1123 = vset.pattern.permute.xlu0 0
  %1124 = vperm.xlu0 %1123, %v68
  %v1125 = vpop.permute.xlu0 %1124
  %1128 = vset.pattern.permute.xlu0 0
  %1129 = vperm.xlu0 %1128, %v69
  %v1130 = vpop.permute.xlu0 %1129
  %1133 = vset.pattern.permute.xlu0 0
  %1134 = vperm.xlu0 %1133, %v70
  %v1135 = vpop.permute.xlu0 %1134
  %1138 = vset.pattern.permute.xlu0 0
  %1139 = vperm.xlu0 %1138, %v71
  %v1140 = vpop.permute.xlu0 %1139
  %1143 = vset.pattern.permute.xlu0 0
  %1144 = vperm.xlu0 %1143, %v72
  %v1145 = vpop.permute.xlu0 %1144
  %1148 = vset.pattern.permute.xlu0 0
  %1149 = vperm.xlu0 %1148, %v73
  %v1150 = vpop.permute.xlu0 %1149
  %1153 = vset.pattern.permute.xlu0 0
  %1154 = vperm.xlu0 %1153, %v74
  %v1155 = vpop.permute.xlu0 %1154
  %1158 = vset.pattern.permute.xlu0 0
  %1159 = vperm.xlu0 %1158, %v75
  %v1160 = vpop.permute.xlu0 %1159
  %1163 = vset.pattern.permute.xlu0 0
  %1164 = vperm.xlu0 %1163, %v76
  %v1165 = vpop.permute.xlu0 %1164
  %1168 = vset.pattern.permute.xlu0 0
  %1169 = vperm.xlu0 %1168, %v77
  %v1170 = vpop.permute.xlu0 %1169
  %1173 = vset.pattern.permute.xlu0 0
  %1174 = vperm.xlu0 %1173, %v78
  %v1175 = vpop.permute.xlu0 %1174
  %1178 = vset.pattern.permute.xlu0 0
  %1179 = vperm.xlu0 %1178, %v79
  %v1180 = vpop.permute.xlu0 %1179
  %1183 = vset.pattern.permute.xlu0 0
  %1184 = vperm.xlu0 %1183, %v80
  %v1185 = vpop.permute.xlu0 %1184
  %1188 = vset.pattern.permute.xlu0 0
  %1189 = vperm.xlu0 %1188, %v81
  %v1190 = vpop.permute.xlu0 %1189
  %1193 = vset.pattern.permute.xlu0 0
  %1194 = vperm.xlu0 %1193, %v82
  %v1195 = vpop.permute.xlu0 %1194
  %1198 = vset.pattern.permute.xlu0 0
  %1199 = vperm.xlu0 %1198, %v83
  %v1200 = vpop.permute.xlu0 %1199
  %1203 = vset.pattern.permute.xlu0 0
  %1204 = vperm.xlu0 %1203, %v84
  %v1205 = vpop.permute.xlu0 %1204
  %1208 = vset.pattern.permute.xlu0 0
  %1209 = vperm.xlu0 %1208, %v85
  %v1210 = vpop.permute.xlu0 %1209
  %1213 = vset.pattern.permute.xlu0 0
  %1214 = vperm.xlu0 %1213, %v86
  %v1215 = vpop.permute.xlu0 %1214
  %1218 = vset.pattern.permute.xlu0 0
  %1219 = vperm.xlu0 %1218, %v87
  %v1220 = vpop.permute.xlu0 %1219
  %1223 = vset.pattern.permute.xlu0 0
  %1224 = vperm.xlu0 %1223, %v88
  %v1225 = vpop.permute.xlu0 %1224
  %1228 = vset.pattern.permute.xlu0 0
  %1229 = vperm.xlu0 %1228, %v89
  %v1230 = vpop.permute.xlu0 %1229
  %1233 = vset.pattern.permute.xlu0 0
  %1234 = vperm.xlu0 %1233, %v90
  %v1235 = vpop.permute.xlu0 %1234
  %1238 = vset.pattern.permute.xlu0 0
  %1239 = vperm.xlu0 %1238, %v91
  %v1240 = vpop.permute.xlu0 %1239
  %1243 = vset.pattern.permute.xlu0 0
  %1244 = vperm.xlu0 %1243, %v92
  %v1245 = vpop.permute.xlu0 %1244
  %1248 = vset.pattern.permute.xlu0 0
  %1249 = vperm.xlu0 %1248, %v93
  %v1250 = vpop.permute.xlu0 %1249
  %1253 = vset.pattern.permute.xlu0 0
  %1254 = vperm.xlu0 %1253, %v94
  %v1255 = vpop.permute.xlu0 %1254
  %1258 = vset.pattern.permute.xlu0 0
  %1259 = vperm.xlu0 %1258, %v95
  %v1260 = vpop.permute.xlu0 %1259
  %1263 = vset.pattern.permute.xlu0 0
  %1264 = vperm.xlu0 %1263, %v96
  %v1265 = vpop.permute.xlu0 %1264
  %1268 = vset.pattern.permute.xlu0 0
  %1269 = vperm.xlu0 %1268, %v97
  %v1270 = vpop.permute.xlu0 %1269
  %1273 = vset.pattern.permute.xlu0 0
  %1274 = vperm.xlu0 %1273, %v98
  %v1275 = vpop.permute.xlu0 %1274
  %1278 = vset.pattern.permute.xlu0 0
  %1279 = vperm.xlu0 %1278, %v99
  %v1280 = vpop.permute.xlu0 %1279
  %1283 = vset.pattern.permute.xlu0 0
  %1284 = vperm.xlu0 %1283, %v100
  %v1285 = vpop.permute.xlu0 %1284
  %1288 = vset.pattern.permute.xlu0 0
  %1289 = vperm.xlu0 %1288, %v101
  %v1290 = vpop.permute.xlu0 %1289
  %1293 = vset.pattern.permute.xlu0 0
  %1294 = vperm.xlu0 %1293, %v102
  %v1295 = vpop.permute.xlu0 %1294
  %1298 = vset.pattern.permute.xlu0 0
  %1299 = vperm.xlu0 %1298, %v103
  %v1300 = vpop.permute.xlu0 %1299
  %1303 = vset.pattern.permute.xlu0 0
  %1304 = vperm.xlu0 %1303, %v104
  %v1305 = vpop.permute.xlu0 %1304
  %v1307 = vmul.f32 %v577, %v905
  %v1308 = vmul.f32 %v580, %v910
  %v1309 = vmul.f32 %v585, %v915
  %v1310 = vmul.f32 %v588, %v920
  %v1311 = vmul.f32 %v593, %v925
  %v1312 = vmul.f32 %v596, %v930
  %v1313 = vmul.f32 %v601, %v935
  %v1314 = vmul.f32 %v604, %v940
  %v1315 = vmul.f32 %v609, %v945
  %v1316 = vmul.f32 %v612, %v950
  %v1317 = vmul.f32 %v617, %v955
  %v1318 = vmul.f32 %v620, %v960
  %v1319 = vmul.f32 %v625, %v965
  %v1320 = vmul.f32 %v628, %v970
  %v1321 = vmul.f32 %v633, %v975
  %v1322 = vmul.f32 %v636, %v980
  %v1323 = vmul.f32 %v641, %v985
  %v1324 = vmul.f32 %v644, %v990
  %v1325 = vmul.f32 %v649, %v995
  %v1326 = vmul.f32 %v652, %v1000
  %v1327 = vmul.f32 %v657, %v1005
  %v1328 = vmul.f32 %v660, %v1010
  %v1329 = vmul.f32 %v665, %v1015
  %v1330 = vmul.f32 %v668, %v1020
  %v1331 = vmul.f32 %v673, %v1025
  %v1332 = vmul.f32 %v676, %v1030
  %v1333 = vmul.f32 %v681, %v1035
  %v1334 = vmul.f32 %v684, %v1040
  %v1335 = vmul.f32 %v689, %v1045
  %v1336 = vmul.f32 %v692, %v1050
  %v1337 = vmul.f32 %v697, %v1055
  %v1338 = vmul.f32 %v700, %v1060
  %v1339 = vmul.f32 %v705, %v1065
  %v1340 = vmul.f32 %v708, %v1070
  %v1341 = vmul.f32 %v713, %v1075
  %v1342 = vmul.f32 %v716, %v1080
  %v1343 = vmul.f32 %v721, %v1085
  %v1344 = vmul.f32 %v724, %v1090
  %v1345 = vmul.f32 %v729, %v1095
  %v1346 = vmul.f32 %v732, %v1100
  %v1347 = vmul.f32 %v737, %v1105
  %v1348 = vmul.f32 %v740, %v1110
  %v1349 = vmul.f32 %v745, %v1115
  %v1350 = vmul.f32 %v748, %v1120
  %v1351 = vmul.f32 %v753, %v1125
  %v1352 = vmul.f32 %v756, %v1130
  %v1353 = vmul.f32 %v761, %v1135
  %v1354 = vmul.f32 %v764, %v1140
  %v1355 = vmul.f32 %v769, %v1145
  %v1356 = vmul.f32 %v772, %v1150
  %v1357 = vmul.f32 %v777, %v1155
  %v1358 = vmul.f32 %v780, %v1160
  %v1359 = vmul.f32 %v785, %v1165
  %v1360 = vmul.f32 %v788, %v1170
  %v1361 = vmul.f32 %v793, %v1175
  %v1362 = vmul.f32 %v796, %v1180
  %v1363 = vmul.f32 %v801, %v1185
  %v1364 = vmul.f32 %v804, %v1190
  %v1365 = vmul.f32 %v809, %v1195
  %v1366 = vmul.f32 %v812, %v1200
  %v1367 = vmul.f32 %v817, %v1205
  %v1368 = vmul.f32 %v820, %v1210
  %v1369 = vmul.f32 %v825, %v1215
  %v1370 = vmul.f32 %v828, %v1220
  %v1371 = vmul.f32 %v833, %v1225
  %v1372 = vmul.f32 %v836, %v1230
  %v1373 = vmul.f32 %v841, %v1235
  %v1374 = vmul.f32 %v844, %v1240
  %v1375 = vmul.f32 %v849, %v1245
  %v1376 = vmul.f32 %v852, %v1250
  %v1377 = vmul.f32 %v857, %v1255
  %v1378 = vmul.f32 %v860, %v1260
  %v1379 = vmul.f32 %v865, %v1265
  %v1380 = vmul.f32 %v868, %v1270
  %v1381 = vmul.f32 %v873, %v1275
  %v1382 = vmul.f32 %v876, %v1280
  %v1383 = vmul.f32 %v881, %v1285
  %v1384 = vmul.f32 %v884, %v1290
  %v1385 = vmul.f32 %v889, %v1295
  %v1386 = vmul.f32 %v892, %v1300
  %v1387 = vmul.f32 %v897, %v1305
  %v1388 = vadd.f32 %v1307, %v1308
  %v1389 = vadd.f32 %v1388, %v1309
  %v1390 = vadd.f32 %v1389, %v1310
  %v1391 = vadd.f32 %v1390, %v1311
  %v1392 = vadd.f32 %v1391, %v1312
  %v1393 = vadd.f32 %v1392, %v1313
  %v1394 = vadd.f32 %v1393, %v1314
  %v1395 = vadd.f32 %v1394, %v1315
  %v1396 = vadd.f32 %v1395, %v1316
  %v1397 = vadd.f32 %v1396, %v1317
  %v1398 = vadd.f32 %v1397, %v1318
  %v1399 = vadd.f32 %v1398, %v1319
  %v1400 = vadd.f32 %v1399, %v1320
  %v1401 = vadd.f32 %v1400, %v1321
  %v1402 = vadd.f32 %v1401, %v1322
  %v1403 = vadd.f32 %v1402, %v1323
  %v1404 = vadd.f32 %v1403, %v1324
  %v1405 = vadd.f32 %v1404, %v1325
  %v1406 = vadd.f32 %v1405, %v1326
  %v1407 = vadd.f32 %v1406, %v1327
  %v1408 = vadd.f32 %v1407, %v1328
  %v1409 = vadd.f32 %v1408, %v1329
  %v1410 = vadd.f32 %v1409, %v1330
  %v1411 = vadd.f32 %v1410, %v1331
  %v1412 = vadd.f32 %v1411, %v1332
  %v1413 = vadd.f32 %v1412, %v1333
  %v1414 = vadd.f32 %v1413, %v1334
  %v1415 = vadd.f32 %v1414, %v1335
  %v1416 = vadd.f32 %v1415, %v1336
  %v1417 = vadd.f32 %v1416, %v1337
  %v1418 = vadd.f32 %v1417, %v1338
  %v1419 = vadd.f32 %v1418, %v1339
  %v1420 = vadd.f32 %v1419, %v1340
  %v1421 = vadd.f32 %v1420, %v1341
  %v1422 = vadd.f32 %v1421, %v1342
  %v1423 = vadd.f32 %v1422, %v1343
  %v1424 = vadd.f32 %v1423, %v1344
  %v1425 = vadd.f32 %v1424, %v1345
  %v1426 = vadd.f32 %v1425, %v1346
  %v1427 = vadd.f32 %v1426, %v1347
  %v1428 = vadd.f32 %v1427, %v1348
  %v1429 = vadd.f32 %v1428, %v1349
  %v1430 = vadd.f32 %v1429, %v1350
  %v1431 = vadd.f32 %v1430, %v1351
  %v1432 = vadd.f32 %v1431, %v1352
  %v1433 = vadd.f32 %v1432, %v1353
  %v1434 = vadd.f32 %v1433, %v1354
  %v1435 = vadd.f32 %v1434, %v1355
  %v1436 = vadd.f32 %v1435, %v1356
  %v1437 = vadd.f32 %v1436, %v1357
  %v1438 = vadd.f32 %v1437, %v1358
  %v1439 = vadd.f32 %v1438, %v1359
  %v1440 = vadd.f32 %v1439, %v1360
  %v1441 = vadd.f32 %v1440, %v1361
  %v1442 = vadd.f32 %v1441, %v1362
  %v1443 = vadd.f32 %v1442, %v1363
  %v1444 = vadd.f32 %v1443, %v1364
  %v1445 = vadd.f32 %v1444, %v1365
  %v1446 = vadd.f32 %v1445, %v1366
  %v1447 = vadd.f32 %v1446, %v1367
  %v1448 = vadd.f32 %v1447, %v1368
  %v1449 = vadd.f32 %v1448, %v1369
  %v1450 = vadd.f32 %v1449, %v1370
  %v1451 = vadd.f32 %v1450, %v1371
  %v1452 = vadd.f32 %v1451, %v1372
  %v1453 = vadd.f32 %v1452, %v1373
  %v1454 = vadd.f32 %v1453, %v1374
  %v1455 = vadd.f32 %v1454, %v1375
  %v1456 = vadd.f32 %v1455, %v1376
  %v1457 = vadd.f32 %v1456, %v1377
  %v1458 = vadd.f32 %v1457, %v1378
  %v1459 = vadd.f32 %v1458, %v1379
  %v1460 = vadd.f32 %v1459, %v1380
  %v1461 = vadd.f32 %v1460, %v1381
  %v1462 = vadd.f32 %v1461, %v1382
  %v1463 = vadd.f32 %v1462, %v1383
  %v1464 = vadd.f32 %v1463, %v1384
  %v1465 = vadd.f32 %v1464, %v1385
  %v1466 = vadd.f32 %v1465, %v1386
  %v1467 = vadd.f32 %v1466, %v1387
  %v1468 = vrot.slane %v1467, 4
  %v1469 = vadd.f32 %v1467, %v1468
  %v1470 = vrot.slane %v1469, 2
  %v1471 = vadd.f32 %v1469, %v1470
  %v1472 = vrot.slane %v1471, 1
  %v1473 = vadd.f32 %v1471, %v1472
  %v1474 = vmul.f32 %v1473, 0.001953125
  %v1475 = vmul.f32 %v1307, %v577
  %v1476 = vmul.f32 %v1308, %v580
  %v1477 = vmul.f32 %v1309, %v585
  %v1478 = vmul.f32 %v1310, %v588
  %v1479 = vmul.f32 %v1311, %v593
  %v1480 = vmul.f32 %v1312, %v596
  %v1481 = vmul.f32 %v1313, %v601
  %v1482 = vmul.f32 %v1314, %v604
  %v1483 = vmul.f32 %v1315, %v609
  %v1484 = vmul.f32 %v1316, %v612
  %v1485 = vmul.f32 %v1317, %v617
  %v1486 = vmul.f32 %v1318, %v620
  %v1487 = vmul.f32 %v1319, %v625
  %v1488 = vmul.f32 %v1320, %v628
  %v1489 = vmul.f32 %v1321, %v633
  %v1490 = vmul.f32 %v1322, %v636
  %v1491 = vmul.f32 %v1323, %v641
  %v1492 = vmul.f32 %v1324, %v644
  %v1493 = vmul.f32 %v1325, %v649
  %v1494 = vmul.f32 %v1326, %v652
  %v1495 = vmul.f32 %v1327, %v657
  %v1496 = vmul.f32 %v1328, %v660
  %v1497 = vmul.f32 %v1329, %v665
  %v1498 = vmul.f32 %v1330, %v668
  %v1499 = vmul.f32 %v1331, %v673
  %v1500 = vmul.f32 %v1332, %v676
  %v1501 = vmul.f32 %v1333, %v681
  %v1502 = vmul.f32 %v1334, %v684
  %v1503 = vmul.f32 %v1335, %v689
  %v1504 = vmul.f32 %v1336, %v692
  %v1505 = vmul.f32 %v1337, %v697
  %v1506 = vmul.f32 %v1338, %v700
  %v1507 = vmul.f32 %v1339, %v705
  %v1508 = vmul.f32 %v1340, %v708
  %v1509 = vmul.f32 %v1341, %v713
  %v1510 = vmul.f32 %v1342, %v716
  %v1511 = vmul.f32 %v1343, %v721
  %v1512 = vmul.f32 %v1344, %v724
  %v1513 = vmul.f32 %v1345, %v729
  %v1514 = vmul.f32 %v1346, %v732
  %v1515 = vmul.f32 %v1347, %v737
  %v1516 = vmul.f32 %v1348, %v740
  %v1517 = vmul.f32 %v1349, %v745
  %v1518 = vmul.f32 %v1350, %v748
  %v1519 = vmul.f32 %v1351, %v753
  %v1520 = vmul.f32 %v1352, %v756
  %v1521 = vmul.f32 %v1353, %v761
  %v1522 = vmul.f32 %v1354, %v764
  %v1523 = vmul.f32 %v1355, %v769
  %v1524 = vmul.f32 %v1356, %v772
  %v1525 = vmul.f32 %v1357, %v777
  %v1526 = vmul.f32 %v1358, %v780
  %v1527 = vmul.f32 %v1359, %v785
  %v1528 = vmul.f32 %v1360, %v788
  %v1529 = vmul.f32 %v1361, %v793
  %v1530 = vmul.f32 %v1362, %v796
  %v1531 = vmul.f32 %v1363, %v801
  %v1532 = vmul.f32 %v1364, %v804
  %v1533 = vmul.f32 %v1365, %v809
  %v1534 = vmul.f32 %v1366, %v812
  %v1535 = vmul.f32 %v1367, %v817
  %v1536 = vmul.f32 %v1368, %v820
  %v1537 = vmul.f32 %v1369, %v825
  %v1538 = vmul.f32 %v1370, %v828
  %v1539 = vmul.f32 %v1371, %v833
  %v1540 = vmul.f32 %v1372, %v836
  %v1541 = vmul.f32 %v1373, %v841
  %v1542 = vmul.f32 %v1374, %v844
  %v1543 = vmul.f32 %v1375, %v849
  %v1544 = vmul.f32 %v1376, %v852
  %v1545 = vmul.f32 %v1377, %v857
  %v1546 = vmul.f32 %v1378, %v860
  %v1547 = vmul.f32 %v1379, %v865
  %v1548 = vmul.f32 %v1380, %v868
  %v1549 = vmul.f32 %v1381, %v873
  %v1550 = vmul.f32 %v1382, %v876
  %v1551 = vmul.f32 %v1383, %v881
  %v1552 = vmul.f32 %v1384, %v884
  %v1553 = vmul.f32 %v1385, %v889
  %v1554 = vmul.f32 %v1386, %v892
  %v1555 = vmul.f32 %v1387, %v897
  %v1556 = vadd.f32 %v1475, %v1476
  %v1557 = vadd.f32 %v1556, %v1477
  %v1558 = vadd.f32 %v1557, %v1478
  %v1559 = vadd.f32 %v1558, %v1479
  %v1560 = vadd.f32 %v1559, %v1480
  %v1561 = vadd.f32 %v1560, %v1481
  %v1562 = vadd.f32 %v1561, %v1482
  %v1563 = vadd.f32 %v1562, %v1483
  %v1564 = vadd.f32 %v1563, %v1484
  %v1565 = vadd.f32 %v1564, %v1485
  %v1566 = vadd.f32 %v1565, %v1486
  %v1567 = vadd.f32 %v1566, %v1487
  %v1568 = vadd.f32 %v1567, %v1488
  %v1569 = vadd.f32 %v1568, %v1489
  %v1570 = vadd.f32 %v1569, %v1490
  %v1571 = vadd.f32 %v1570, %v1491
  %v1572 = vadd.f32 %v1571, %v1492
  %v1573 = vadd.f32 %v1572, %v1493
  %v1574 = vadd.f32 %v1573, %v1494
  %v1575 = vadd.f32 %v1574, %v1495
  %v1576 = vadd.f32 %v1575, %v1496
  %v1577 = vadd.f32 %v1576, %v1497
  %v1578 = vadd.f32 %v1577, %v1498
  %v1579 = vadd.f32 %v1578, %v1499
  %v1580 = vadd.f32 %v1579, %v1500
  %v1581 = vadd.f32 %v1580, %v1501
  %v1582 = vadd.f32 %v1581, %v1502
  %v1583 = vadd.f32 %v1582, %v1503
  %v1584 = vadd.f32 %v1583, %v1504
  %v1585 = vadd.f32 %v1584, %v1505
  %v1586 = vadd.f32 %v1585, %v1506
  %v1587 = vadd.f32 %v1586, %v1507
  %v1588 = vadd.f32 %v1587, %v1508
  %v1589 = vadd.f32 %v1588, %v1509
  %v1590 = vadd.f32 %v1589, %v1510
  %v1591 = vadd.f32 %v1590, %v1511
  %v1592 = vadd.f32 %v1591, %v1512
  %v1593 = vadd.f32 %v1592, %v1513
  %v1594 = vadd.f32 %v1593, %v1514
  %v1595 = vadd.f32 %v1594, %v1515
  %v1596 = vadd.f32 %v1595, %v1516
  %v1597 = vadd.f32 %v1596, %v1517
  %v1598 = vadd.f32 %v1597, %v1518
  %v1599 = vadd.f32 %v1598, %v1519
  %v1600 = vadd.f32 %v1599, %v1520
  %v1601 = vadd.f32 %v1600, %v1521
  %v1602 = vadd.f32 %v1601, %v1522
  %v1603 = vadd.f32 %v1602, %v1523
  %v1604 = vadd.f32 %v1603, %v1524
  %v1605 = vadd.f32 %v1604, %v1525
  %v1606 = vadd.f32 %v1605, %v1526
  %v1607 = vadd.f32 %v1606, %v1527
  %v1608 = vadd.f32 %v1607, %v1528
  %v1609 = vadd.f32 %v1608, %v1529
  %v1610 = vadd.f32 %v1609, %v1530
  %v1611 = vadd.f32 %v1610, %v1531
  %v1612 = vadd.f32 %v1611, %v1532
  %v1613 = vadd.f32 %v1612, %v1533
  %v1614 = vadd.f32 %v1613, %v1534
  %v1615 = vadd.f32 %v1614, %v1535
  %v1616 = vadd.f32 %v1615, %v1536
  %v1617 = vadd.f32 %v1616, %v1537
  %v1618 = vadd.f32 %v1617, %v1538
  %v1619 = vadd.f32 %v1618, %v1539
  %v1620 = vadd.f32 %v1619, %v1540
  %v1621 = vadd.f32 %v1620, %v1541
  %v1622 = vadd.f32 %v1621, %v1542
  %v1623 = vadd.f32 %v1622, %v1543
  %v1624 = vadd.f32 %v1623, %v1544
  %v1625 = vadd.f32 %v1624, %v1545
  %v1626 = vadd.f32 %v1625, %v1546
  %v1627 = vadd.f32 %v1626, %v1547
  %v1628 = vadd.f32 %v1627, %v1548
  %v1629 = vadd.f32 %v1628, %v1549
  %v1630 = vadd.f32 %v1629, %v1550
  %v1631 = vadd.f32 %v1630, %v1551
  %v1632 = vadd.f32 %v1631, %v1552
  %v1633 = vadd.f32 %v1632, %v1553
  %v1634 = vadd.f32 %v1633, %v1554
  %v1635 = vadd.f32 %v1634, %v1555
  %v1636 = vrot.slane %v1635, 4
  %v1637 = vadd.f32 %v1635, %v1636
  %v1638 = vrot.slane %v1637, 2
  %v1639 = vadd.f32 %v1637, %v1638
  %v1640 = vrot.slane %v1639, 1
  %v1641 = vadd.f32 %v1639, %v1640
  %v1642 = vmul.f32 %v1641, 0.001953125
  %v1643 = vmul.f32 %v1474, %v1474
  %v1644 = vsub.f32 %v1642, %v1643
  %v1645 = vmax.f32 %v1644, 0.0
  %v1646 = vadd.f32 %v1645, 1e-05
  %v1647 = vrsqrt.pop %v1646
  %v1648 = vmul.f32 %v191, %v1647
  %v1649 = vmul.f32 %v1474, %v1648
  %v1651 = vrot.slane %v1649, 7
  %v1653 = vsub.f32 %v191, %v1651
  %v1654 = vlaneseq
  %v1655 = vshrl.u32 %v1654, 7
  %v1656 = vsub.s32 1, %v1655
  %v1657 = vrot.slane %v1648, %v1656
  %v1658 = vmul.f32 %v577, %v1657
  %v1659 = vmul.f32 %v580, %v1657
  %v1660 = vmul.f32 %v585, %v1657
  %v1661 = vmul.f32 %v588, %v1657
  %v1662 = vmul.f32 %v593, %v1657
  %v1663 = vmul.f32 %v596, %v1657
  %v1664 = vmul.f32 %v601, %v1657
  %v1665 = vmul.f32 %v604, %v1657
  %v1666 = vmul.f32 %v609, %v1657
  %v1667 = vmul.f32 %v612, %v1657
  %v1668 = vmul.f32 %v617, %v1657
  %v1669 = vmul.f32 %v620, %v1657
  %v1670 = vmul.f32 %v625, %v1657
  %v1671 = vmul.f32 %v628, %v1657
  %v1672 = vmul.f32 %v633, %v1657
  %v1673 = vmul.f32 %v636, %v1657
  %v1674 = vmul.f32 %v641, %v1657
  %v1675 = vmul.f32 %v644, %v1657
  %v1676 = vmul.f32 %v649, %v1657
  %v1677 = vmul.f32 %v652, %v1657
  %v1678 = vmul.f32 %v657, %v1657
  %v1679 = vmul.f32 %v660, %v1657
  %v1680 = vmul.f32 %v665, %v1657
  %v1681 = vmul.f32 %v668, %v1657
  %v1682 = vmul.f32 %v673, %v1657
  %v1683 = vmul.f32 %v676, %v1657
  %v1684 = vmul.f32 %v681, %v1657
  %v1685 = vmul.f32 %v684, %v1657
  %v1686 = vmul.f32 %v689, %v1657
  %v1687 = vmul.f32 %v692, %v1657
  %v1688 = vmul.f32 %v697, %v1657
  %v1689 = vmul.f32 %v700, %v1657
  %v1690 = vmul.f32 %v705, %v1657
  %v1691 = vmul.f32 %v708, %v1657
  %v1692 = vmul.f32 %v713, %v1657
  %v1693 = vmul.f32 %v716, %v1657
  %v1694 = vmul.f32 %v721, %v1657
  %v1695 = vmul.f32 %v724, %v1657
  %v1696 = vmul.f32 %v729, %v1657
  %v1697 = vmul.f32 %v732, %v1657
  %v1698 = vmul.f32 %v737, %v1657
  %v1699 = vmul.f32 %v740, %v1657
  %v1700 = vmul.f32 %v745, %v1657
  %v1701 = vmul.f32 %v748, %v1657
  %v1702 = vmul.f32 %v753, %v1657
  %v1703 = vmul.f32 %v756, %v1657
  %v1704 = vmul.f32 %v761, %v1657
  %v1705 = vmul.f32 %v764, %v1657
  %v1706 = vmul.f32 %v769, %v1657
  %v1707 = vmul.f32 %v772, %v1657
  %v1708 = vmul.f32 %v777, %v1657
  %v1709 = vmul.f32 %v780, %v1657
  %v1710 = vmul.f32 %v785, %v1657
  %v1711 = vmul.f32 %v788, %v1657
  %v1712 = vmul.f32 %v793, %v1657
  %v1713 = vmul.f32 %v796, %v1657
  %v1714 = vmul.f32 %v801, %v1657
  %v1715 = vmul.f32 %v804, %v1657
  %v1716 = vmul.f32 %v809, %v1657
  %v1717 = vmul.f32 %v812, %v1657
  %v1718 = vmul.f32 %v817, %v1657
  %v1719 = vmul.f32 %v820, %v1657
  %v1720 = vmul.f32 %v825, %v1657
  %v1721 = vmul.f32 %v828, %v1657
  %v1722 = vmul.f32 %v833, %v1657
  %v1723 = vmul.f32 %v836, %v1657
  %v1724 = vmul.f32 %v841, %v1657
  %v1725 = vmul.f32 %v844, %v1657
  %v1726 = vmul.f32 %v849, %v1657
  %v1727 = vmul.f32 %v852, %v1657
  %v1728 = vmul.f32 %v857, %v1657
  %v1729 = vmul.f32 %v860, %v1657
  %v1730 = vmul.f32 %v865, %v1657
  %v1731 = vmul.f32 %v868, %v1657
  %v1732 = vmul.f32 %v873, %v1657
  %v1733 = vmul.f32 %v876, %v1657
  %v1734 = vmul.f32 %v881, %v1657
  %v1735 = vmul.f32 %v884, %v1657
  %v1736 = vmul.f32 %v889, %v1657
  %v1737 = vmul.f32 %v892, %v1657
  %v1738 = vmul.f32 %v897, %v1657
  %v1739 = vlaneseq
  %v1740 = vshrl.u32 %v1739, 7
  %v1741 = vsub.s32 2, %v1740
  %v1742 = vrot.slane %v1653, %v1741
  %v1743 = vadd.f32 %v1658, %v1742
  %v1744 = vadd.f32 %v1659, %v1742
  %v1745 = vadd.f32 %v1660, %v1742
  %v1746 = vadd.f32 %v1661, %v1742
  %v1747 = vadd.f32 %v1662, %v1742
  %v1748 = vadd.f32 %v1663, %v1742
  %v1749 = vadd.f32 %v1664, %v1742
  %v1750 = vadd.f32 %v1665, %v1742
  %v1751 = vadd.f32 %v1666, %v1742
  %v1752 = vadd.f32 %v1667, %v1742
  %v1753 = vadd.f32 %v1668, %v1742
  %v1754 = vadd.f32 %v1669, %v1742
  %v1755 = vadd.f32 %v1670, %v1742
  %v1756 = vadd.f32 %v1671, %v1742
  %v1757 = vadd.f32 %v1672, %v1742
  %v1758 = vadd.f32 %v1673, %v1742
  %v1759 = vadd.f32 %v1674, %v1742
  %v1760 = vadd.f32 %v1675, %v1742
  %v1761 = vadd.f32 %v1676, %v1742
  %v1762 = vadd.f32 %v1677, %v1742
  %v1763 = vadd.f32 %v1678, %v1742
  %v1764 = vadd.f32 %v1679, %v1742
  %v1765 = vadd.f32 %v1680, %v1742
  %v1766 = vadd.f32 %v1681, %v1742
  %v1767 = vadd.f32 %v1682, %v1742
  %v1768 = vadd.f32 %v1683, %v1742
  %v1769 = vadd.f32 %v1684, %v1742
  %v1770 = vadd.f32 %v1685, %v1742
  %v1771 = vadd.f32 %v1686, %v1742
  %v1772 = vadd.f32 %v1687, %v1742
  %v1773 = vadd.f32 %v1688, %v1742
  %v1774 = vadd.f32 %v1689, %v1742
  %v1775 = vadd.f32 %v1690, %v1742
  %v1776 = vadd.f32 %v1691, %v1742
  %v1777 = vadd.f32 %v1692, %v1742
  %v1778 = vadd.f32 %v1693, %v1742
  %v1779 = vadd.f32 %v1694, %v1742
  %v1780 = vadd.f32 %v1695, %v1742
  %v1781 = vadd.f32 %v1696, %v1742
  %v1782 = vadd.f32 %v1697, %v1742
  %v1783 = vadd.f32 %v1698, %v1742
  %v1784 = vadd.f32 %v1699, %v1742
  %v1785 = vadd.f32 %v1700, %v1742
  %v1786 = vadd.f32 %v1701, %v1742
  %v1787 = vadd.f32 %v1702, %v1742
  %v1788 = vadd.f32 %v1703, %v1742
  %v1789 = vadd.f32 %v1704, %v1742
  %v1790 = vadd.f32 %v1705, %v1742
  %v1791 = vadd.f32 %v1706, %v1742
  %v1792 = vadd.f32 %v1707, %v1742
  %v1793 = vadd.f32 %v1708, %v1742
  %v1794 = vadd.f32 %v1709, %v1742
  %v1795 = vadd.f32 %v1710, %v1742
  %v1796 = vadd.f32 %v1711, %v1742
  %v1797 = vadd.f32 %v1712, %v1742
  %v1798 = vadd.f32 %v1713, %v1742
  %v1799 = vadd.f32 %v1714, %v1742
  %v1800 = vadd.f32 %v1715, %v1742
  %v1801 = vadd.f32 %v1716, %v1742
  %v1802 = vadd.f32 %v1717, %v1742
  %v1803 = vadd.f32 %v1718, %v1742
  %v1804 = vadd.f32 %v1719, %v1742
  %v1805 = vadd.f32 %v1720, %v1742
  %v1806 = vadd.f32 %v1721, %v1742
  %v1807 = vadd.f32 %v1722, %v1742
  %v1808 = vadd.f32 %v1723, %v1742
  %v1809 = vadd.f32 %v1724, %v1742
  %v1810 = vadd.f32 %v1725, %v1742
  %v1811 = vadd.f32 %v1726, %v1742
  %v1812 = vadd.f32 %v1727, %v1742
  %v1813 = vadd.f32 %v1728, %v1742
  %v1814 = vadd.f32 %v1729, %v1742
  %v1815 = vadd.f32 %v1730, %v1742
  %v1816 = vadd.f32 %v1731, %v1742
  %v1817 = vadd.f32 %v1732, %v1742
  %v1818 = vadd.f32 %v1733, %v1742
  %v1819 = vadd.f32 %v1734, %v1742
  %v1820 = vadd.f32 %v1735, %v1742
  %v1821 = vadd.f32 %v1736, %v1742
  %v1822 = vadd.f32 %v1737, %v1742
  %v1823 = vadd.f32 %v1738, %v1742
  %vm1824 = vcmp.ge.f32.partialorder %v1743, 0.0
  %vm1825 = vcmp.ge.f32.partialorder %v1744, 0.0
  %vm1826 = vcmp.ge.f32.partialorder %v1745, 0.0
  %vm1827 = vcmp.ge.f32.partialorder %v1746, 0.0
  %vm1828 = vcmp.ge.f32.partialorder %v1747, 0.0
  %vm1829 = vcmp.ge.f32.partialorder %v1748, 0.0
  %vm1830 = vcmp.ge.f32.partialorder %v1749, 0.0
  %vm1831 = vcmp.ge.f32.partialorder %v1750, 0.0
  %vm1832 = vcmp.ge.f32.partialorder %v1751, 0.0
  %vm1833 = vcmp.ge.f32.partialorder %v1752, 0.0
  %vm1834 = vcmp.ge.f32.partialorder %v1753, 0.0
  %vm1835 = vcmp.ge.f32.partialorder %v1754, 0.0
  %vm1836 = vcmp.ge.f32.partialorder %v1755, 0.0
  %vm1837 = vcmp.ge.f32.partialorder %v1756, 0.0
  %vm1838 = vcmp.ge.f32.partialorder %v1757, 0.0
  %vm1839 = vcmp.ge.f32.partialorder %v1758, 0.0
  %vm1840 = vcmp.ge.f32.partialorder %v1759, 0.0
  %vm1841 = vcmp.ge.f32.partialorder %v1760, 0.0
  %vm1842 = vcmp.ge.f32.partialorder %v1761, 0.0
  %vm1843 = vcmp.ge.f32.partialorder %v1762, 0.0
  %vm1844 = vcmp.ge.f32.partialorder %v1763, 0.0
  %vm1845 = vcmp.ge.f32.partialorder %v1764, 0.0
  %vm1846 = vcmp.ge.f32.partialorder %v1765, 0.0
  %vm1847 = vcmp.ge.f32.partialorder %v1766, 0.0
  %vm1848 = vcmp.ge.f32.partialorder %v1767, 0.0
  %vm1849 = vcmp.ge.f32.partialorder %v1768, 0.0
  %vm1850 = vcmp.ge.f32.partialorder %v1769, 0.0
  %vm1851 = vcmp.ge.f32.partialorder %v1770, 0.0
  %vm1852 = vcmp.ge.f32.partialorder %v1771, 0.0
  %vm1853 = vcmp.ge.f32.partialorder %v1772, 0.0
  %vm1854 = vcmp.ge.f32.partialorder %v1773, 0.0
  %vm1855 = vcmp.ge.f32.partialorder %v1774, 0.0
  %vm1856 = vcmp.ge.f32.partialorder %v1775, 0.0
  %vm1857 = vcmp.ge.f32.partialorder %v1776, 0.0
  %vm1858 = vcmp.ge.f32.partialorder %v1777, 0.0
  %vm1859 = vcmp.ge.f32.partialorder %v1778, 0.0
  %vm1860 = vcmp.ge.f32.partialorder %v1779, 0.0
  %vm1861 = vcmp.ge.f32.partialorder %v1780, 0.0
  %vm1862 = vcmp.ge.f32.partialorder %v1781, 0.0
  %vm1863 = vcmp.ge.f32.partialorder %v1782, 0.0
  %vm1864 = vcmp.ge.f32.partialorder %v1783, 0.0
  %vm1865 = vcmp.ge.f32.partialorder %v1784, 0.0
  %vm1866 = vcmp.ge.f32.partialorder %v1785, 0.0
  %vm1867 = vcmp.ge.f32.partialorder %v1786, 0.0
  %vm1868 = vcmp.ge.f32.partialorder %v1787, 0.0
  %vm1869 = vcmp.ge.f32.partialorder %v1788, 0.0
  %vm1870 = vcmp.ge.f32.partialorder %v1789, 0.0
  %vm1871 = vcmp.ge.f32.partialorder %v1790, 0.0
  %vm1872 = vcmp.ge.f32.partialorder %v1791, 0.0
  %vm1873 = vcmp.ge.f32.partialorder %v1792, 0.0
  %vm1874 = vcmp.ge.f32.partialorder %v1793, 0.0
  %vm1875 = vcmp.ge.f32.partialorder %v1794, 0.0
  %vm1876 = vcmp.ge.f32.partialorder %v1795, 0.0
  %vm1877 = vcmp.ge.f32.partialorder %v1796, 0.0
  %vm1878 = vcmp.ge.f32.partialorder %v1797, 0.0
  %vm1879 = vcmp.ge.f32.partialorder %v1798, 0.0
  %vm1880 = vcmp.ge.f32.partialorder %v1799, 0.0
  %vm1881 = vcmp.ge.f32.partialorder %v1800, 0.0
  %vm1882 = vcmp.ge.f32.partialorder %v1801, 0.0
  %vm1883 = vcmp.ge.f32.partialorder %v1802, 0.0
  %vm1884 = vcmp.ge.f32.partialorder %v1803, 0.0
  %vm1885 = vcmp.ge.f32.partialorder %v1804, 0.0
  %vm1886 = vcmp.ge.f32.partialorder %v1805, 0.0
  %vm1887 = vcmp.ge.f32.partialorder %v1806, 0.0
  %vm1888 = vcmp.ge.f32.partialorder %v1807, 0.0
  %vm1889 = vcmp.ge.f32.partialorder %v1808, 0.0
  %vm1890 = vcmp.ge.f32.partialorder %v1809, 0.0
  %vm1891 = vcmp.ge.f32.partialorder %v1810, 0.0
  %vm1892 = vcmp.ge.f32.partialorder %v1811, 0.0
  %vm1893 = vcmp.ge.f32.partialorder %v1812, 0.0
  %vm1894 = vcmp.ge.f32.partialorder %v1813, 0.0
  %vm1895 = vcmp.ge.f32.partialorder %v1814, 0.0
  %vm1896 = vcmp.ge.f32.partialorder %v1815, 0.0
  %vm1897 = vcmp.ge.f32.partialorder %v1816, 0.0
  %vm1898 = vcmp.ge.f32.partialorder %v1817, 0.0
  %vm1899 = vcmp.ge.f32.partialorder %v1818, 0.0
  %vm1900 = vcmp.ge.f32.partialorder %v1819, 0.0
  %vm1901 = vcmp.ge.f32.partialorder %v1820, 0.0
  %vm1902 = vcmp.ge.f32.partialorder %v1821, 0.0
  %vm1903 = vcmp.ge.f32.partialorder %v1822, 0.0
  %vm1904 = vcmp.ge.f32.partialorder %v1823, 0.0
  %v1905 = vmul.f32 %v1743, 0.01
  %v1906 = vmul.f32 %v1744, 0.01
  %v1907 = vmul.f32 %v1745, 0.01
  %v1908 = vmul.f32 %v1746, 0.01
  %v1909 = vmul.f32 %v1747, 0.01
  %v1910 = vmul.f32 %v1748, 0.01
  %v1911 = vmul.f32 %v1749, 0.01
  %v1912 = vmul.f32 %v1750, 0.01
  %v1913 = vmul.f32 %v1751, 0.01
  %v1914 = vmul.f32 %v1752, 0.01
  %v1915 = vmul.f32 %v1753, 0.01
  %v1916 = vmul.f32 %v1754, 0.01
  %v1917 = vmul.f32 %v1755, 0.01
  %v1918 = vmul.f32 %v1756, 0.01
  %v1919 = vmul.f32 %v1757, 0.01
  %v1920 = vmul.f32 %v1758, 0.01
  %v1921 = vmul.f32 %v1759, 0.01
  %v1922 = vmul.f32 %v1760, 0.01
  %v1923 = vmul.f32 %v1761, 0.01
  %v1924 = vmul.f32 %v1762, 0.01
  %v1925 = vmul.f32 %v1763, 0.01
  %v1926 = vmul.f32 %v1764, 0.01
  %v1927 = vmul.f32 %v1765, 0.01
  %v1928 = vmul.f32 %v1766, 0.01
  %v1929 = vmul.f32 %v1767, 0.01
  %v1930 = vmul.f32 %v1768, 0.01
  %v1931 = vmul.f32 %v1769, 0.01
  %v1932 = vmul.f32 %v1770, 0.01
  %v1933 = vmul.f32 %v1771, 0.01
  %v1934 = vmul.f32 %v1772, 0.01
  %v1935 = vmul.f32 %v1773, 0.01
  %v1936 = vmul.f32 %v1774, 0.01
  %v1937 = vmul.f32 %v1775, 0.01
  %v1938 = vmul.f32 %v1776, 0.01
  %v1939 = vmul.f32 %v1777, 0.01
  %v1940 = vmul.f32 %v1778, 0.01
  %v1941 = vmul.f32 %v1779, 0.01
  %v1942 = vmul.f32 %v1780, 0.01
  %v1943 = vmul.f32 %v1781, 0.01
  %v1944 = vmul.f32 %v1782, 0.01
  %v1945 = vmul.f32 %v1783, 0.01
  %v1946 = vmul.f32 %v1784, 0.01
  %v1947 = vmul.f32 %v1785, 0.01
  %v1948 = vmul.f32 %v1786, 0.01
  %v1949 = vmul.f32 %v1787, 0.01
  %v1950 = vmul.f32 %v1788, 0.01
  %v1951 = vmul.f32 %v1789, 0.01
  %v1952 = vmul.f32 %v1790, 0.01
  %v1953 = vmul.f32 %v1791, 0.01
  %v1954 = vmul.f32 %v1792, 0.01
  %v1955 = vmul.f32 %v1793, 0.01
  %v1956 = vmul.f32 %v1794, 0.01
  %v1957 = vmul.f32 %v1795, 0.01
  %v1958 = vmul.f32 %v1796, 0.01
  %v1959 = vmul.f32 %v1797, 0.01
  %v1960 = vmul.f32 %v1798, 0.01
  %v1961 = vmul.f32 %v1799, 0.01
  %v1962 = vmul.f32 %v1800, 0.01
  %v1963 = vmul.f32 %v1801, 0.01
  %v1964 = vmul.f32 %v1802, 0.01
  %v1965 = vmul.f32 %v1803, 0.01
  %v1966 = vmul.f32 %v1804, 0.01
  %v1967 = vmul.f32 %v1805, 0.01
  %v1968 = vmul.f32 %v1806, 0.01
  %v1969 = vmul.f32 %v1807, 0.01
  %v1970 = vmul.f32 %v1808, 0.01
  %v1971 = vmul.f32 %v1809, 0.01
  %v1972 = vmul.f32 %v1810, 0.01
  %v1973 = vmul.f32 %v1811, 0.01
  %v1974 = vmul.f32 %v1812, 0.01
  %v1975 = vmul.f32 %v1813, 0.01
  %v1976 = vmul.f32 %v1814, 0.01
  %v1977 = vmul.f32 %v1815, 0.01
  %v1978 = vmul.f32 %v1816, 0.01
  %v1979 = vmul.f32 %v1817, 0.01
  %v1980 = vmul.f32 %v1818, 0.01
  %v1981 = vmul.f32 %v1819, 0.01
  %v1982 = vmul.f32 %v1820, 0.01
  %v1983 = vmul.f32 %v1821, 0.01
  %v1984 = vmul.f32 %v1822, 0.01
  %v1985 = vmul.f32 %v1823, 0.01
  %v1986 = vsel %vm1824, %v1743, %v1905
  %v1987 = vsel %vm1825, %v1744, %v1906
  %v1988 = vsel %vm1826, %v1745, %v1907
  %v1989 = vsel %vm1827, %v1746, %v1908
  %v1990 = vsel %vm1828, %v1747, %v1909
  %v1991 = vsel %vm1829, %v1748, %v1910
  %v1992 = vsel %vm1830, %v1749, %v1911
  %v1993 = vsel %vm1831, %v1750, %v1912
  %v1994 = vsel %vm1832, %v1751, %v1913
  %v1995 = vsel %vm1833, %v1752, %v1914
  %v1996 = vsel %vm1834, %v1753, %v1915
  %v1997 = vsel %vm1835, %v1754, %v1916
  %v1998 = vsel %vm1836, %v1755, %v1917
  %v1999 = vsel %vm1837, %v1756, %v1918
  %v2000 = vsel %vm1838, %v1757, %v1919
  %v2001 = vsel %vm1839, %v1758, %v1920
  %v2002 = vsel %vm1840, %v1759, %v1921
  %v2003 = vsel %vm1841, %v1760, %v1922
  %v2004 = vsel %vm1842, %v1761, %v1923
  %v2005 = vsel %vm1843, %v1762, %v1924
  %v2006 = vsel %vm1844, %v1763, %v1925
  %v2007 = vsel %vm1845, %v1764, %v1926
  %v2008 = vsel %vm1846, %v1765, %v1927
  %v2009 = vsel %vm1847, %v1766, %v1928
  %v2010 = vsel %vm1848, %v1767, %v1929
  %v2011 = vsel %vm1849, %v1768, %v1930
  %v2012 = vsel %vm1850, %v1769, %v1931
  %v2013 = vsel %vm1851, %v1770, %v1932
  %v2014 = vsel %vm1852, %v1771, %v1933
  %v2015 = vsel %vm1853, %v1772, %v1934
  %v2016 = vsel %vm1854, %v1773, %v1935
  %v2017 = vsel %vm1855, %v1774, %v1936
  %v2018 = vsel %vm1856, %v1775, %v1937
  %v2019 = vsel %vm1857, %v1776, %v1938
  %v2020 = vsel %vm1858, %v1777, %v1939
  %v2021 = vsel %vm1859, %v1778, %v1940
  %v2022 = vsel %vm1860, %v1779, %v1941
  %v2023 = vsel %vm1861, %v1780, %v1942
  %v2024 = vsel %vm1862, %v1781, %v1943
  %v2025 = vsel %vm1863, %v1782, %v1944
  %v2026 = vsel %vm1864, %v1783, %v1945
  %v2027 = vsel %vm1865, %v1784, %v1946
  %v2028 = vsel %vm1866, %v1785, %v1947
  %v2029 = vsel %vm1867, %v1786, %v1948
  %v2030 = vsel %vm1868, %v1787, %v1949
  %v2031 = vsel %vm1869, %v1788, %v1950
  %v2032 = vsel %vm1870, %v1789, %v1951
  %v2033 = vsel %vm1871, %v1790, %v1952
  %v2034 = vsel %vm1872, %v1791, %v1953
  %v2035 = vsel %vm1873, %v1792, %v1954
  %v2036 = vsel %vm1874, %v1793, %v1955
  %v2037 = vsel %vm1875, %v1794, %v1956
  %v2038 = vsel %vm1876, %v1795, %v1957
  %v2039 = vsel %vm1877, %v1796, %v1958
  %v2040 = vsel %vm1878, %v1797, %v1959
  %v2041 = vsel %vm1879, %v1798, %v1960
  %v2042 = vsel %vm1880, %v1799, %v1961
  %v2043 = vsel %vm1881, %v1800, %v1962
  %v2044 = vsel %vm1882, %v1801, %v1963
  %v2045 = vsel %vm1883, %v1802, %v1964
  %v2046 = vsel %vm1884, %v1803, %v1965
  %v2047 = vsel %vm1885, %v1804, %v1966
  %v2048 = vsel %vm1886, %v1805, %v1967
  %v2049 = vsel %vm1887, %v1806, %v1968
  %v2050 = vsel %vm1888, %v1807, %v1969
  %v2051 = vsel %vm1889, %v1808, %v1970
  %v2052 = vsel %vm1890, %v1809, %v1971
  %v2053 = vsel %vm1891, %v1810, %v1972
  %v2054 = vsel %vm1892, %v1811, %v1973
  %v2055 = vsel %vm1893, %v1812, %v1974
  %v2056 = vsel %vm1894, %v1813, %v1975
  %v2057 = vsel %vm1895, %v1814, %v1976
  %v2058 = vsel %vm1896, %v1815, %v1977
  %v2059 = vsel %vm1897, %v1816, %v1978
  %v2060 = vsel %vm1898, %v1817, %v1979
  %v2061 = vsel %vm1899, %v1818, %v1980
  %v2062 = vsel %vm1900, %v1819, %v1981
  %v2063 = vsel %vm1901, %v1820, %v1982
  %v2064 = vsel %vm1902, %v1821, %v1983
  %v2065 = vsel %vm1903, %v1822, %v1984
  %v2066 = vsel %vm1904, %v1823, %v1985
  %v2067 = vmul.f32 %v1986, %v905
  %v2068 = vmul.f32 %v1987, %v910
  %v2069 = vmul.f32 %v1988, %v915
  %v2070 = vmul.f32 %v1989, %v920
  %v2071 = vmul.f32 %v1990, %v925
  %v2072 = vmul.f32 %v1991, %v930
  %v2073 = vmul.f32 %v1992, %v935
  %v2074 = vmul.f32 %v1993, %v940
  %v2075 = vmul.f32 %v1994, %v945
  %v2076 = vmul.f32 %v1995, %v950
  %v2077 = vmul.f32 %v1996, %v955
  %v2078 = vmul.f32 %v1997, %v960
  %v2079 = vmul.f32 %v1998, %v965
  %v2080 = vmul.f32 %v1999, %v970
  %v2081 = vmul.f32 %v2000, %v975
  %v2082 = vmul.f32 %v2001, %v980
  %v2083 = vmul.f32 %v2002, %v985
  %v2084 = vmul.f32 %v2003, %v990
  %v2085 = vmul.f32 %v2004, %v995
  %v2086 = vmul.f32 %v2005, %v1000
  %v2087 = vmul.f32 %v2006, %v1005
  %v2088 = vmul.f32 %v2007, %v1010
  %v2089 = vmul.f32 %v2008, %v1015
  %v2090 = vmul.f32 %v2009, %v1020
  %v2091 = vmul.f32 %v2010, %v1025
  %v2092 = vmul.f32 %v2011, %v1030
  %v2093 = vmul.f32 %v2012, %v1035
  %v2094 = vmul.f32 %v2013, %v1040
  %v2095 = vmul.f32 %v2014, %v1045
  %v2096 = vmul.f32 %v2015, %v1050
  %v2097 = vmul.f32 %v2016, %v1055
  %v2098 = vmul.f32 %v2017, %v1060
  %v2099 = vmul.f32 %v2018, %v1065
  %v2100 = vmul.f32 %v2019, %v1070
  %v2101 = vmul.f32 %v2020, %v1075
  %v2102 = vmul.f32 %v2021, %v1080
  %v2103 = vmul.f32 %v2022, %v1085
  %v2104 = vmul.f32 %v2023, %v1090
  %v2105 = vmul.f32 %v2024, %v1095
  %v2106 = vmul.f32 %v2025, %v1100
  %v2107 = vmul.f32 %v2026, %v1105
  %v2108 = vmul.f32 %v2027, %v1110
  %v2109 = vmul.f32 %v2028, %v1115
  %v2110 = vmul.f32 %v2029, %v1120
  %v2111 = vmul.f32 %v2030, %v1125
  %v2112 = vmul.f32 %v2031, %v1130
  %v2113 = vmul.f32 %v2032, %v1135
  %v2114 = vmul.f32 %v2033, %v1140
  %v2115 = vmul.f32 %v2034, %v1145
  %v2116 = vmul.f32 %v2035, %v1150
  %v2117 = vmul.f32 %v2036, %v1155
  %v2118 = vmul.f32 %v2037, %v1160
  %v2119 = vmul.f32 %v2038, %v1165
  %v2120 = vmul.f32 %v2039, %v1170
  %v2121 = vmul.f32 %v2040, %v1175
  %v2122 = vmul.f32 %v2041, %v1180
  %v2123 = vmul.f32 %v2042, %v1185
  %v2124 = vmul.f32 %v2043, %v1190
  %v2125 = vmul.f32 %v2044, %v1195
  %v2126 = vmul.f32 %v2045, %v1200
  %v2127 = vmul.f32 %v2046, %v1205
  %v2128 = vmul.f32 %v2047, %v1210
  %v2129 = vmul.f32 %v2048, %v1215
  %v2130 = vmul.f32 %v2049, %v1220
  %v2131 = vmul.f32 %v2050, %v1225
  %v2132 = vmul.f32 %v2051, %v1230
  %v2133 = vmul.f32 %v2052, %v1235
  %v2134 = vmul.f32 %v2053, %v1240
  %v2135 = vmul.f32 %v2054, %v1245
  %v2136 = vmul.f32 %v2055, %v1250
  %v2137 = vmul.f32 %v2056, %v1255
  %v2138 = vmul.f32 %v2057, %v1260
  %v2139 = vmul.f32 %v2058, %v1265
  %v2140 = vmul.f32 %v2059, %v1270
  %v2141 = vmul.f32 %v2060, %v1275
  %v2142 = vmul.f32 %v2061, %v1280
  %v2143 = vmul.f32 %v2062, %v1285
  %v2144 = vmul.f32 %v2063, %v1290
  %v2145 = vmul.f32 %v2064, %v1295
  %v2146 = vmul.f32 %v2065, %v1300
  %v2147 = vmul.f32 %v2066, %v1305
  %v2148 = vpack.c.bf16 %v2068, %v2067
  %v2149 = vpack.c.bf16 %v2070, %v2069
  %v2150 = vpack.c.bf16 %v2072, %v2071
  %v2151 = vpack.c.bf16 %v2074, %v2073
  %v2152 = vpack.c.bf16 %v2076, %v2075
  %v2153 = vpack.c.bf16 %v2078, %v2077
  %v2154 = vpack.c.bf16 %v2080, %v2079
  %v2155 = vpack.c.bf16 %v2082, %v2081
  %v2156 = vpack.c.bf16 %v2084, %v2083
  %v2157 = vpack.c.bf16 %v2086, %v2085
  %v2158 = vpack.c.bf16 %v2088, %v2087
  %v2159 = vpack.c.bf16 %v2090, %v2089
  %v2160 = vpack.c.bf16 %v2092, %v2091
  %v2161 = vpack.c.bf16 %v2094, %v2093
  %v2162 = vpack.c.bf16 %v2096, %v2095
  %v2163 = vpack.c.bf16 %v2098, %v2097
  %v2164 = vpack.c.bf16 %v2100, %v2099
  %v2165 = vpack.c.bf16 %v2102, %v2101
  %v2166 = vpack.c.bf16 %v2104, %v2103
  %v2167 = vpack.c.bf16 %v2106, %v2105
  %v2168 = vpack.c.bf16 %v2108, %v2107
  %v2169 = vpack.c.bf16 %v2110, %v2109
  %v2170 = vpack.c.bf16 %v2112, %v2111
  %v2171 = vpack.c.bf16 %v2114, %v2113
  %v2172 = vpack.c.bf16 %v2116, %v2115
  %v2173 = vpack.c.bf16 %v2118, %v2117
  %v2174 = vpack.c.bf16 %v2120, %v2119
  %v2175 = vpack.c.bf16 %v2122, %v2121
  %v2176 = vpack.c.bf16 %v2124, %v2123
  %v2177 = vpack.c.bf16 %v2126, %v2125
  %v2178 = vpack.c.bf16 %v2128, %v2127
  %v2179 = vpack.c.bf16 %v2130, %v2129
  %v2180 = vpack.c.bf16 %v2132, %v2131
  %v2181 = vpack.c.bf16 %v2134, %v2133
  %v2182 = vpack.c.bf16 %v2136, %v2135
  %v2183 = vpack.c.bf16 %v2138, %v2137
  %v2184 = vpack.c.bf16 %v2140, %v2139
  %v2185 = vpack.c.bf16 %v2142, %v2141
  %v2186 = vpack.c.bf16 %v2144, %v2143
  %v2187 = vpack.c.bf16 %v2146, %v2145
  %v2188 = vpack.c.bf16 %v2147, %v2147
  %v2230 = vunpack.c.l.b16 %v2148
  %v2231 = vunpack.c.h.b16 %v2148
  %v2232 = vunpack.c.l.b16 %v2149
  %v2233 = vunpack.c.h.b16 %v2149
  %v2234 = vunpack.c.l.b16 %v2150
  %v2235 = vunpack.c.h.b16 %v2150
  %v2236 = vunpack.c.l.b16 %v2151
  %v2237 = vunpack.c.h.b16 %v2151
  %v2238 = vunpack.c.l.b16 %v2152
  %v2239 = vunpack.c.h.b16 %v2152
  %v2240 = vunpack.c.l.b16 %v2153
  %v2241 = vunpack.c.h.b16 %v2153
  %v2242 = vunpack.c.l.b16 %v2154
  %v2243 = vunpack.c.h.b16 %v2154
  %v2244 = vunpack.c.l.b16 %v2155
  %v2245 = vunpack.c.h.b16 %v2155
  %v2246 = vunpack.c.l.b16 %v2156
  %v2247 = vunpack.c.h.b16 %v2156
  %v2248 = vunpack.c.l.b16 %v2157
  %v2249 = vunpack.c.h.b16 %v2157
  %v2250 = vunpack.c.l.b16 %v2158
  %v2251 = vunpack.c.h.b16 %v2158
  %v2252 = vunpack.c.l.b16 %v2159
  %v2253 = vunpack.c.h.b16 %v2159
  %v2254 = vunpack.c.l.b16 %v2160
  %v2255 = vunpack.c.h.b16 %v2160
  %v2256 = vunpack.c.l.b16 %v2161
  %v2257 = vunpack.c.h.b16 %v2161
  %v2258 = vunpack.c.l.b16 %v2162
  %v2259 = vunpack.c.h.b16 %v2162
  %v2260 = vunpack.c.l.b16 %v2163
  %v2261 = vunpack.c.h.b16 %v2163
  %v2262 = vunpack.c.l.b16 %v2164
  %v2263 = vunpack.c.h.b16 %v2164
  %v2264 = vunpack.c.l.b16 %v2165
  %v2265 = vunpack.c.h.b16 %v2165
  %v2266 = vunpack.c.l.b16 %v2166
  %v2267 = vunpack.c.h.b16 %v2166
  %v2268 = vunpack.c.l.b16 %v2167
  %v2269 = vunpack.c.h.b16 %v2167
  %v2270 = vunpack.c.l.b16 %v2168
  %v2271 = vunpack.c.h.b16 %v2168
  %v2272 = vunpack.c.l.b16 %v2169
  %v2273 = vunpack.c.h.b16 %v2169
  %v2274 = vunpack.c.l.b16 %v2170
  %v2275 = vunpack.c.h.b16 %v2170
  %v2276 = vunpack.c.l.b16 %v2171
  %v2277 = vunpack.c.h.b16 %v2171
  %v2278 = vunpack.c.l.b16 %v2172
  %v2279 = vunpack.c.h.b16 %v2172
  %v2280 = vunpack.c.l.b16 %v2173
  %v2281 = vunpack.c.h.b16 %v2173
  %v2282 = vunpack.c.l.b16 %v2174
  %v2283 = vunpack.c.h.b16 %v2174
  %v2284 = vunpack.c.l.b16 %v2175
  %v2285 = vunpack.c.h.b16 %v2175
  %v2286 = vunpack.c.l.b16 %v2176
  %v2287 = vunpack.c.h.b16 %v2176
  %v2288 = vunpack.c.l.b16 %v2177
  %v2289 = vunpack.c.h.b16 %v2177
  %v2290 = vunpack.c.l.b16 %v2178
  %v2291 = vunpack.c.h.b16 %v2178
  %v2292 = vunpack.c.l.b16 %v2179
  %v2293 = vunpack.c.h.b16 %v2179
  %v2294 = vunpack.c.l.b16 %v2180
  %v2295 = vunpack.c.h.b16 %v2180
  %v2296 = vunpack.c.l.b16 %v2181
  %v2297 = vunpack.c.h.b16 %v2181
  %v2298 = vunpack.c.l.b16 %v2182
  %v2299 = vunpack.c.h.b16 %v2182
  %v2300 = vunpack.c.l.b16 %v2183
  %v2301 = vunpack.c.h.b16 %v2183
  %v2302 = vunpack.c.l.b16 %v2184
  %v2303 = vunpack.c.h.b16 %v2184
  %v2304 = vunpack.c.l.b16 %v2185
  %v2305 = vunpack.c.h.b16 %v2185
  %v2306 = vunpack.c.l.b16 %v2186
  %v2307 = vunpack.c.h.b16 %v2186
  %v2308 = vunpack.c.l.b16 %v2187
  %v2309 = vunpack.c.h.b16 %v2187
  %v2310 = vunpack.c.l.b16 %v2188
  %v2311 = vpack.c.b16 %v2230, %v2230
  %v2312 = vpack.c.b16 %v2231, %v2231
  %v2313 = vpack.c.b16 %v2232, %v2232
  %v2314 = vpack.c.b16 %v2233, %v2233
  %v2315 = vpack.c.b16 %v2234, %v2234
  %v2316 = vpack.c.b16 %v2235, %v2235
  %v2317 = vpack.c.b16 %v2236, %v2236
  %v2318 = vpack.c.b16 %v2237, %v2237
  %v2319 = vpack.c.b16 %v2238, %v2238
  %v2320 = vpack.c.b16 %v2239, %v2239
  %v2321 = vpack.c.b16 %v2240, %v2240
  %v2322 = vpack.c.b16 %v2241, %v2241
  %v2323 = vpack.c.b16 %v2242, %v2242
  %v2324 = vpack.c.b16 %v2243, %v2243
  %v2325 = vpack.c.b16 %v2244, %v2244
  %v2326 = vpack.c.b16 %v2245, %v2245
  %v2327 = vpack.c.b16 %v2246, %v2246
  %v2328 = vpack.c.b16 %v2247, %v2247
  %v2329 = vpack.c.b16 %v2248, %v2248
  %v2330 = vpack.c.b16 %v2249, %v2249
  %v2331 = vpack.c.b16 %v2250, %v2250
  %v2332 = vpack.c.b16 %v2251, %v2251
  %v2333 = vpack.c.b16 %v2252, %v2252
  %v2334 = vpack.c.b16 %v2253, %v2253
  %v2335 = vpack.c.b16 %v2254, %v2254
  %v2336 = vpack.c.b16 %v2255, %v2255
  %v2337 = vpack.c.b16 %v2256, %v2256
  %v2338 = vpack.c.b16 %v2257, %v2257
  %v2339 = vpack.c.b16 %v2258, %v2258
  %v2340 = vpack.c.b16 %v2259, %v2259
  %v2341 = vpack.c.b16 %v2260, %v2260
  %v2342 = vpack.c.b16 %v2261, %v2261
  %v2343 = vpack.c.b16 %v2262, %v2262
  %v2344 = vpack.c.b16 %v2263, %v2263
  %v2345 = vpack.c.b16 %v2264, %v2264
  %v2346 = vpack.c.b16 %v2265, %v2265
  %v2347 = vpack.c.b16 %v2266, %v2266
  %v2348 = vpack.c.b16 %v2267, %v2267
  %v2349 = vpack.c.b16 %v2268, %v2268
  %v2350 = vpack.c.b16 %v2269, %v2269
  %v2351 = vpack.c.b16 %v2270, %v2270
  %v2352 = vpack.c.b16 %v2271, %v2271
  %v2353 = vpack.c.b16 %v2272, %v2272
  %v2354 = vpack.c.b16 %v2273, %v2273
  %v2355 = vpack.c.b16 %v2274, %v2274
  %v2356 = vpack.c.b16 %v2275, %v2275
  %v2357 = vpack.c.b16 %v2276, %v2276
  %v2358 = vpack.c.b16 %v2277, %v2277
  %v2359 = vpack.c.b16 %v2278, %v2278
  %v2360 = vpack.c.b16 %v2279, %v2279
  %v2361 = vpack.c.b16 %v2280, %v2280
  %v2362 = vpack.c.b16 %v2281, %v2281
  %v2363 = vpack.c.b16 %v2282, %v2282
  %v2364 = vpack.c.b16 %v2283, %v2283
  %v2365 = vpack.c.b16 %v2284, %v2284
  %v2366 = vpack.c.b16 %v2285, %v2285
  %v2367 = vpack.c.b16 %v2286, %v2286
  %v2368 = vpack.c.b16 %v2287, %v2287
  %v2369 = vpack.c.b16 %v2288, %v2288
  %v2370 = vpack.c.b16 %v2289, %v2289
  %v2371 = vpack.c.b16 %v2290, %v2290
  %v2372 = vpack.c.b16 %v2291, %v2291
  %v2373 = vpack.c.b16 %v2292, %v2292
  %v2374 = vpack.c.b16 %v2293, %v2293
  %v2375 = vpack.c.b16 %v2294, %v2294
  %v2376 = vpack.c.b16 %v2295, %v2295
  %v2377 = vpack.c.b16 %v2296, %v2296
  %v2378 = vpack.c.b16 %v2297, %v2297
  %v2379 = vpack.c.b16 %v2298, %v2298
  %v2380 = vpack.c.b16 %v2299, %v2299
  %v2381 = vpack.c.b16 %v2300, %v2300
  %v2382 = vpack.c.b16 %v2301, %v2301
  %v2383 = vpack.c.b16 %v2302, %v2302
  %v2384 = vpack.c.b16 %v2303, %v2303
  %v2385 = vpack.c.b16 %v2304, %v2304
  %v2386 = vpack.c.b16 %v2305, %v2305
  %v2387 = vpack.c.b16 %v2306, %v2306
  %v2388 = vpack.c.b16 %v2307, %v2307
  %v2389 = vpack.c.b16 %v2308, %v2308
  %v2390 = vpack.c.b16 %v2309, %v2309
  %v2391 = vpack.c.b16 %v2310, %v2310
  %2473 = vst [vmem:[#allocation2] sm:$0xf] %v2311
  %2474 = vst [vmem:[#allocation2 + $0x4] sm:$0xf] %v2312
  %2475 = vst [vmem:[#allocation2 + $0x8] sm:$0xf] %v2313
  %2476 = vst [vmem:[#allocation2 + $0xc] sm:$0xf] %v2314
  %2477 = vst [vmem:[#allocation2 + $0x10] sm:$0xf] %v2315
  %2478 = vst [vmem:[#allocation2 + $0x14] sm:$0xf] %v2316
  %2479 = vst [vmem:[#allocation2 + $0x18] sm:$0xf] %v2317
  %2480 = vst [vmem:[#allocation2 + $0x1c] sm:$0xf] %v2318
  %2481 = vst [vmem:[#allocation2 + $0x20] sm:$0xf] %v2319
  %2482 = vst [vmem:[#allocation2 + $0x24] sm:$0xf] %v2320
  %2483 = vst [vmem:[#allocation2 + $0x28] sm:$0xf] %v2321
  %2484 = vst [vmem:[#allocation2 + $0x2c] sm:$0xf] %v2322
  %2485 = vst [vmem:[#allocation2 + $0x30] sm:$0xf] %v2323
  %2486 = vst [vmem:[#allocation2 + $0x34] sm:$0xf] %v2324
  %2487 = vst [vmem:[#allocation2 + $0x38] sm:$0xf] %v2325
  %2488 = vst [vmem:[#allocation2 + $0x3c] sm:$0xf] %v2326
  %2489 = vst [vmem:[#allocation2 + $0x40] sm:$0xf] %v2327
  %2490 = vst [vmem:[#allocation2 + $0x44] sm:$0xf] %v2328
  %2491 = vst [vmem:[#allocation2 + $0x48] sm:$0xf] %v2329
  %2492 = vst [vmem:[#allocation2 + $0x4c] sm:$0xf] %v2330
  %2493 = vst [vmem:[#allocation2 + $0x50] sm:$0xf] %v2331
  %2494 = vst [vmem:[#allocation2 + $0x54] sm:$0xf] %v2332
  %2495 = vst [vmem:[#allocation2 + $0x58] sm:$0xf] %v2333
  %2496 = vst [vmem:[#allocation2 + $0x5c] sm:$0xf] %v2334
  %2497 = vst [vmem:[#allocation2 + $0x60] sm:$0xf] %v2335
  %2498 = vst [vmem:[#allocation2 + $0x64] sm:$0xf] %v2336
  %2499 = vst [vmem:[#allocation2 + $0x68] sm:$0xf] %v2337
  %2500 = vst [vmem:[#allocation2 + $0x6c] sm:$0xf] %v2338
  %2501 = vst [vmem:[#allocation2 + $0x70] sm:$0xf] %v2339
  %2502 = vst [vmem:[#allocation2 + $0x74] sm:$0xf] %v2340
  %2503 = vst [vmem:[#allocation2 + $0x78] sm:$0xf] %v2341
  %2504 = vst [vmem:[#allocation2 + $0x7c] sm:$0xf] %v2342
  %2505 = vst [vmem:[#allocation2 + $0x80] sm:$0xf] %v2343
  %2506 = vst [vmem:[#allocation2 + $0x84] sm:$0xf] %v2344
  %2507 = vst [vmem:[#allocation2 + $0x88] sm:$0xf] %v2345
  %2508 = vst [vmem:[#allocation2 + $0x8c] sm:$0xf] %v2346
  %2509 = vst [vmem:[#allocation2 + $0x90] sm:$0xf] %v2347
  %2510 = vst [vmem:[#allocation2 + $0x94] sm:$0xf] %v2348
  %2511 = vst [vmem:[#allocation2 + $0x98] sm:$0xf] %v2349
  %2512 = vst [vmem:[#allocation2 + $0x9c] sm:$0xf] %v2350
  %2513 = vst [vmem:[#allocation2 + $0xa0] sm:$0xf] %v2351
  %2514 = vst [vmem:[#allocation2 + $0xa4] sm:$0xf] %v2352
  %2515 = vst [vmem:[#allocation2 + $0xa8] sm:$0xf] %v2353
  %2516 = vst [vmem:[#allocation2 + $0xac] sm:$0xf] %v2354
  %2517 = vst [vmem:[#allocation2 + $0xb0] sm:$0xf] %v2355
  %2518 = vst [vmem:[#allocation2 + $0xb4] sm:$0xf] %v2356
  %2519 = vst [vmem:[#allocation2 + $0xb8] sm:$0xf] %v2357
  %2520 = vst [vmem:[#allocation2 + $0xbc] sm:$0xf] %v2358
  %2521 = vst [vmem:[#allocation2 + $0xc0] sm:$0xf] %v2359
  %2522 = vst [vmem:[#allocation2 + $0xc4] sm:$0xf] %v2360
  %2523 = vst [vmem:[#allocation2 + $0xc8] sm:$0xf] %v2361
  %2524 = vst [vmem:[#allocation2 + $0xcc] sm:$0xf] %v2362
  %2525 = vst [vmem:[#allocation2 + $0xd0] sm:$0xf] %v2363
  %2526 = vst [vmem:[#allocation2 + $0xd4] sm:$0xf] %v2364
  %2527 = vst [vmem:[#allocation2 + $0xd8] sm:$0xf] %v2365
  %2528 = vst [vmem:[#allocation2 + $0xdc] sm:$0xf] %v2366
  %2529 = vst [vmem:[#allocation2 + $0xe0] sm:$0xf] %v2367
  %2530 = vst [vmem:[#allocation2 + $0xe4] sm:$0xf] %v2368
  %2531 = vst [vmem:[#allocation2 + $0xe8] sm:$0xf] %v2369
  %2532 = vst [vmem:[#allocation2 + $0xec] sm:$0xf] %v2370
  %2533 = vst [vmem:[#allocation2 + $0xf0] sm:$0xf] %v2371
  %2534 = vst [vmem:[#allocation2 + $0xf4] sm:$0xf] %v2372
  %2535 = vst [vmem:[#allocation2 + $0xf8] sm:$0xf] %v2373
  %2536 = vst [vmem:[#allocation2 + $0xfc] sm:$0xf] %v2374
  %2537 = vst [vmem:[#allocation2 + $0x100] sm:$0xf] %v2375
  %2538 = vst [vmem:[#allocation2 + $0x104] sm:$0xf] %v2376
  %2539 = vst [vmem:[#allocation2 + $0x108] sm:$0xf] %v2377
  %2540 = vst [vmem:[#allocation2 + $0x10c] sm:$0xf] %v2378
  %2541 = vst [vmem:[#allocation2 + $0x110] sm:$0xf] %v2379
  %2542 = vst [vmem:[#allocation2 + $0x114] sm:$0xf] %v2380
  %2543 = vst [vmem:[#allocation2 + $0x118] sm:$0xf] %v2381
  %2544 = vst [vmem:[#allocation2 + $0x11c] sm:$0xf] %v2382
  %2545 = vst [vmem:[#allocation2 + $0x120] sm:$0xf] %v2383
  %2546 = vst [vmem:[#allocation2 + $0x124] sm:$0xf] %v2384
  %2547 = vst [vmem:[#allocation2 + $0x128] sm:$0xf] %v2385
  %2548 = vst [vmem:[#allocation2 + $0x12c] sm:$0xf] %v2386
  %2549 = vst [vmem:[#allocation2 + $0x130] sm:$0xf] %v2387
  %2550 = vst [vmem:[#allocation2 + $0x134] sm:$0xf] %v2388
  %2551 = vst [vmem:[#allocation2 + $0x138] sm:$0xf] %v2389
  %2552 = vst [vmem:[#allocation2 + $0x13c] sm:$0xf] %v2390
  %2553 = vst [vmem:[#allocation2 + $0x140] sm:$0xf] %v2391
  %2554 = vst [vmem:[#allocation2 + $0x144] sm:$0xf] 0
  %2555 = vst [vmem:[#allocation2 + $0x148] sm:$0xf] 0
  %v2556 = vld [vmem:[#allocation2] sm:$0xf]
  %v2557 = vld [vmem:[#allocation2 + $0x4] sm:$0xf]
  %v2558 = vld [vmem:[#allocation2 + $0x8] sm:$0xf]
  %v2559 = vld [vmem:[#allocation2 + $0xc] sm:$0xf]
  %v2560 = vld [vmem:[#allocation2 + $0x10] sm:$0xf]
  %v2561 = vld [vmem:[#allocation2 + $0x14] sm:$0xf]
  %v2562 = vld [vmem:[#allocation2 + $0x18] sm:$0xf]
  %v2563 = vld [vmem:[#allocation2 + $0x1c] sm:$0xf]
  %v2564 = vld [vmem:[#allocation2 + $0x20] sm:$0xf]
  %v2565 = vld [vmem:[#allocation2 + $0x24] sm:$0xf]
  %v2566 = vld [vmem:[#allocation2 + $0x28] sm:$0xf]
  %v2567 = vld [vmem:[#allocation2 + $0x2c] sm:$0xf]
  %v2568 = vld [vmem:[#allocation2 + $0x30] sm:$0xf]
  %v2569 = vld [vmem:[#allocation2 + $0x34] sm:$0xf]
  %v2570 = vld [vmem:[#allocation2 + $0x38] sm:$0xf]
  %v2571 = vld [vmem:[#allocation2 + $0x3c] sm:$0xf]
  %v2572 = vld [vmem:[#allocation2 + $0x40] sm:$0xf]
  %v2573 = vld [vmem:[#allocation2 + $0x44] sm:$0xf]
  %v2574 = vld [vmem:[#allocation2 + $0x48] sm:$0xf]
  %v2575 = vld [vmem:[#allocation2 + $0x4c] sm:$0xf]
  %v2576 = vld [vmem:[#allocation2 + $0x50] sm:$0x1]
  %v2577 = vld [vmem:[%s4] sm:$0xf]
  %v2578 = vld [vmem:[%s4 + $0x4] sm:$0xf]
  %v2579 = vld [vmem:[%s4 + $0x8] sm:$0xf]
  %v2580 = vld [vmem:[%s4 + $0xc] sm:$0xf]
  %v2581 = vld [vmem:[%s4 + $0x10] sm:$0xf]
  %v2582 = vld [vmem:[%s4 + $0x14] sm:$0xf]
  %v2583 = vld [vmem:[%s4 + $0x18] sm:$0xf]
  %v2584 = vld [vmem:[%s4 + $0x1c] sm:$0xf]
  %v2585 = vld [vmem:[%s4 + $0x20] sm:$0xf]
  %v2586 = vld [vmem:[%s4 + $0x24] sm:$0xf]
  %v2587 = vld [vmem:[%s4 + $0x28] sm:$0xf]
  %v2588 = vld [vmem:[%s4 + $0x2c] sm:$0xf]
  %v2589 = vld [vmem:[%s4 + $0x30] sm:$0xf]
  %v2590 = vld [vmem:[%s4 + $0x34] sm:$0xf]
  %v2591 = vld [vmem:[%s4 + $0x38] sm:$0xf]
  %v2592 = vld [vmem:[%s4 + $0x3c] sm:$0xf]
  %v2593 = vld [vmem:[#allocation2 + $0x50] sm:$0xe]
  %v2594 = vld [vmem:[#allocation2 + $0x54] sm:$0xf]
  %v2595 = vld [vmem:[#allocation2 + $0x58] sm:$0xf]
  %v2596 = vld [vmem:[#allocation2 + $0x5c] sm:$0xf]
  %v2597 = vld [vmem:[#allocation2 + $0x60] sm:$0xf]
  %v2598 = vld [vmem:[#allocation2 + $0x64] sm:$0xf]
  %v2599 = vld [vmem:[#allocation2 + $0x68] sm:$0xf]
  %v2600 = vld [vmem:[#allocation2 + $0x6c] sm:$0xf]
  %v2601 = vld [vmem:[#allocation2 + $0x70] sm:$0xf]
  %v2602 = vld [vmem:[#allocation2 + $0x74] sm:$0xf]
  %v2603 = vld [vmem:[#allocation2 + $0x78] sm:$0xf]
  %v2604 = vld [vmem:[#allocation2 + $0x7c] sm:$0xf]
  %v2605 = vld [vmem:[#allocation2 + $0x80] sm:$0xf]
  %v2606 = vld [vmem:[#allocation2 + $0x84] sm:$0xf]
  %v2607 = vld [vmem:[#allocation2 + $0x88] sm:$0xf]
  %v2608 = vld [vmem:[#allocation2 + $0x8c] sm:$0xf]
  %v2609 = vld [vmem:[#allocation2 + $0x90] sm:$0xf]
  %v2610 = vld [vmem:[#allocation2 + $0x94] sm:$0xf]
  %v2611 = vld [vmem:[#allocation2 + $0x98] sm:$0xf]
  %v2612 = vld [vmem:[#allocation2 + $0x9c] sm:$0xf]
  %v2613 = vld [vmem:[#allocation2 + $0xa0] sm:$0x3]
  %v2614 = vld [vmem:[%s4 + $0x40] sm:$0xf]
  %v2615 = vld [vmem:[%s4 + $0x44] sm:$0xf]
  %v2616 = vld [vmem:[%s4 + $0x48] sm:$0xf]
  %v2617 = vld [vmem:[%s4 + $0x4c] sm:$0xf]
  %v2618 = vld [vmem:[%s4 + $0x50] sm:$0xf]
  %v2619 = vld [vmem:[%s4 + $0x54] sm:$0xf]
  %v2620 = vld [vmem:[%s4 + $0x58] sm:$0xf]
  %v2621 = vld [vmem:[%s4 + $0x5c] sm:$0xf]
  %v2622 = vld [vmem:[%s4 + $0x60] sm:$0xf]
  %v2623 = vld [vmem:[%s4 + $0x64] sm:$0xf]
  %v2624 = vld [vmem:[%s4 + $0x68] sm:$0xf]
  %v2625 = vld [vmem:[%s4 + $0x6c] sm:$0xf]
  %v2626 = vld [vmem:[%s4 + $0x70] sm:$0xf]
  %v2627 = vld [vmem:[%s4 + $0x74] sm:$0xf]
  %v2628 = vld [vmem:[%s4 + $0x78] sm:$0xf]
  %v2629 = vld [vmem:[%s4 + $0x7c] sm:$0xf]
  %v2651 = vunpack.c.l.b16 %v2593
  %v2652 = vunpack.c.l.b16 %v2594
  %v2653 = vunpack.c.l.b16 %v2595
  %v2654 = vunpack.c.l.b16 %v2596
  %v2655 = vunpack.c.l.b16 %v2597
  %v2656 = vunpack.c.l.b16 %v2598
  %v2657 = vunpack.c.l.b16 %v2599
  %v2658 = vunpack.c.l.b16 %v2600
  %v2659 = vunpack.c.l.b16 %v2601
  %v2660 = vunpack.c.l.b16 %v2602
  %v2661 = vunpack.c.l.b16 %v2603
  %v2662 = vunpack.c.l.b16 %v2604
  %v2663 = vunpack.c.l.b16 %v2605
  %v2664 = vunpack.c.l.b16 %v2606
  %v2665 = vunpack.c.l.b16 %v2607
  %v2666 = vunpack.c.l.b16 %v2608
  %v2667 = vunpack.c.l.b16 %v2609
  %v2668 = vunpack.c.l.b16 %v2610
  %v2669 = vunpack.c.l.b16 %v2611
  %v2670 = vunpack.c.l.b16 %v2612
  %v2671 = vunpack.c.l.b16 %v2613
  %v2672 = vpack.c.b16 %v2652, %v2651
  %v2673 = vpack.c.b16 %v2654, %v2653
  %v2674 = vpack.c.b16 %v2656, %v2655
  %v2675 = vpack.c.b16 %v2658, %v2657
  %v2676 = vpack.c.b16 %v2660, %v2659
  %v2677 = vpack.c.b16 %v2662, %v2661
  %v2678 = vpack.c.b16 %v2664, %v2663
  %v2679 = vpack.c.b16 %v2666, %v2665
  %v2680 = vpack.c.b16 %v2668, %v2667
  %v2681 = vpack.c.b16 %v2670, %v2669
  %v2682 = vpack.c.b16 %v2671, %v2671
  %vm2683 = vcmask 1046528
  %v2684 = vrot.slane %v2672, 1
  %v2685 = vrot.slane %v2673, 1
  %v2686 = vsel %vm2683, %v2684, %v2685
  %v2687 = vrot.slane %v2674, 1
  %v2688 = vsel %vm2683, %v2685, %v2687
  %v2689 = vrot.slane %v2675, 1
  %v2690 = vsel %vm2683, %v2687, %v2689
  %v2691 = vrot.slane %v2676, 1
  %v2692 = vsel %vm2683, %v2689, %v2691
  %v2693 = vrot.slane %v2677, 1
  %v2694 = vsel %vm2683, %v2691, %v2693
  %v2695 = vrot.slane %v2678, 1
  %v2696 = vsel %vm2683, %v2693, %v2695
  %v2697 = vrot.slane %v2679, 1
  %v2698 = vsel %vm2683, %v2695, %v2697
  %v2699 = vrot.slane %v2680, 1
  %v2700 = vsel %vm2683, %v2697, %v2699
  %v2701 = vrot.slane %v2681, 1
  %v2702 = vsel %vm2683, %v2699, %v2701
  %v2703 = vrot.slane %v2682, 1
  %v2704 = vsel %vm2683, %v2701, %v2703
  %v2732 = vunpack.c.l.b16 %v2614
  %v2733 = vunpack.c.l.b16 %v2615
  %v2734 = vunpack.c.l.b16 %v2616
  %v2735 = vunpack.c.l.b16 %v2617
  %v2736 = vunpack.c.l.b16 %v2618
  %v2737 = vunpack.c.l.b16 %v2619
  %v2738 = vunpack.c.l.b16 %v2620
  %v2739 = vunpack.c.l.b16 %v2621
  %v2740 = vunpack.c.l.b16 %v2622
  %v2741 = vunpack.c.l.b16 %v2623
  %v2742 = vunpack.c.l.b16 %v2624
  %v2743 = vunpack.c.l.b16 %v2625
  %v2744 = vunpack.c.l.b16 %v2626
  %v2745 = vunpack.c.l.b16 %v2627
  %v2746 = vunpack.c.l.b16 %v2628
  %v2747 = vunpack.c.l.b16 %v2629
  %v2748 = vpack.c.b16 %v2733, %v2732
  %v2749 = vpack.c.b16 %v2735, %v2734
  %v2750 = vpack.c.b16 %v2737, %v2736
  %v2751 = vpack.c.b16 %v2739, %v2738
  %v2752 = vpack.c.b16 %v2741, %v2740
  %v2753 = vpack.c.b16 %v2743, %v2742
  %v2754 = vpack.c.b16 %v2745, %v2744
  %v2755 = vpack.c.b16 %v2747, %v2746
  %2764 = vmatprep.subr.bf16.mxu0 0
  %2765 = vmatpush1.bf16.msra.mxu0 %v2748
  %2766 = vmatprep.subr.bf16.mxu0 0
  %2767 = vmatpush1.bf16.msra.mxu0 %v2749
  %2768 = vmatprep.subr.bf16.mxu0 0
  %2769 = vmatpush1.bf16.msra.mxu0 %v2750
  %2770 = vmatprep.subr.bf16.mxu0 0
  %2771 = vmatpush1.bf16.msra.mxu0 %v2751
  %2772 = vmatprep.subr.bf16.mxu0 0
  %2773 = vmatpush1.bf16.msra.mxu0 %v2752
  %2774 = vmatprep.subr.bf16.mxu0 0
  %2775 = vmatpush1.bf16.msra.mxu0 %v2753
  %2776 = vmatprep.subr.bf16.mxu0 0
  %2777 = vmatpush1.bf16.msra.mxu0 %v2754
  %2778 = vmatprep.subr.bf16.mxu0 0
  %2779 = vmatpush1.bf16.msra.mxu0 %v2755
  %2780 = vmatprep.subr.bf16.mxu0 0
  %2781 = vmatpush1.bf16.msra.mxu0 0
  %2782 = vmatprep.subr.bf16.mxu0 0
  %2783 = vmatpush1.bf16.msra.mxu0 0
  %2784 = vmatprep.subr.bf16.mxu0 0
  %2785 = vmatpush1.bf16.msra.mxu0 0
  %2786 = vmatprep.subr.bf16.mxu0 0
  %2787 = vmatpush1.bf16.msra.mxu0 0
  %2788 = vmatprep.subr.bf16.mxu0 0
  %2789 = vmatpush1.bf16.msra.mxu0 0
  %2790 = vmatprep.subr.bf16.mxu0 0
  %2791 = vmatpush1.bf16.msra.mxu0 0
  %2792 = vmatprep.subr.bf16.mxu0 0
  %2793 = vmatpush1.bf16.msra.mxu0 0
  %2794 = vmatprep.subr.bf16.mxu0 0
  %2795 = vmatpush1.bf16.msra.mxu0 0
  %2796 = vmatprep.mubr.bf16.mxu0 0
  %2797 = vmatmul.mubr.bf16.gmra.mrb[0].mxu0 %v2686
  %v2798 = vpop.f32.mrb[0].mxu0
  %v2799 = vadd.f32 0.0, %v2798
  %v2800 = vpop.f32.mrb[0].mxu0
  %v2801 = vpop.f32.mrb[0].mxu0
  %v2802 = vadd.f32 0.0, %v2801
  %v2803 = vpop.f32.mrb[0].mxu0
  %2804 = vmatprep.mubr.bf16.mxu0 0
  %2805 = vmatmul.mubr.bf16.gmra.mrb[0].mxu0 %v2688
  %v2806 = vpop.f32.mrb[0].mxu0
  %v2807 = vadd.f32 0.0, %v2806
  %v2808 = vpop.f32.mrb[0].mxu0
  %v2809 = vpop.f32.mrb[0].mxu0
  %v2810 = vadd.f32 0.0, %v2809
  %v2811 = vpop.f32.mrb[0].mxu0
  %2812 = vmatprep.mubr.bf16.mxu0 0
  %2813 = vmatmul.mubr.bf16.gmra.mrb[0].mxu0 %v2690
  %v2814 = vpop.f32.mrb[0].mxu0
  %v2815 = vadd.f32 0.0, %v2814
  %v2816 = vpop.f32.mrb[0].mxu0
  %v2817 = vpop.f32.mrb[0].mxu0
  %v2818 = vadd.f32 0.0, %v2817
  %v2819 = vpop.f32.mrb[0].mxu0
  %2820 = vmatprep.mubr.bf16.mxu0 0
  %2821 = vmatmul.mubr.bf16.gmra.mrb[0].mxu0 %v2692
  %v2822 = vpop.f32.mrb[0].mxu0
  %v2823 = vadd.f32 0.0, %v2822
  %v2824 = vpop.f32.mrb[0].mxu0
  %v2825 = vpop.f32.mrb[0].mxu0
  %v2826 = vadd.f32 0.0, %v2825
  %v2827 = vpop.f32.mrb[0].mxu0
  %2828 = vmatprep.mubr.bf16.mxu0 0
  %2829 = vmatmul.mubr.bf16.gmra.mrb[0].mxu0 %v2694
  %v2830 = vpop.f32.mrb[0].mxu0
  %v2831 = vadd.f32 0.0, %v2830
  %v2832 = vpop.f32.mrb[0].mxu0
  %v2833 = vpop.f32.mrb[0].mxu0
  %v2834 = vadd.f32 0.0, %v2833
  %v2835 = vpop.f32.mrb[0].mxu0
  %2836 = vmatprep.mubr.bf16.mxu0 0
  %2837 = vmatmul.mubr.bf16.gmra.mrb[0].mxu0 %v2696
  %v2838 = vpop.f32.mrb[0].mxu0
  %v2839 = vadd.f32 0.0, %v2838
  %v2840 = vpop.f32.mrb[0].mxu0
  %v2841 = vpop.f32.mrb[0].mxu0
  %v2842 = vadd.f32 0.0, %v2841
  %v2843 = vpop.f32.mrb[0].mxu0
  %2844 = vmatprep.mubr.bf16.mxu0 0
  %2845 = vmatmul.mubr.bf16.gmra.mrb[0].mxu0 %v2698
  %v2846 = vpop.f32.mrb[0].mxu0
  %v2847 = vadd.f32 0.0, %v2846
  %v2848 = vpop.f32.mrb[0].mxu0
  %v2849 = vpop.f32.mrb[0].mxu0
  %v2850 = vadd.f32 0.0, %v2849
  %v2851 = vpop.f32.mrb[0].mxu0
  %2852 = vmatprep.mubr.bf16.mxu0 0
  %2853 = vmatmul.mubr.bf16.gmra.mrb[0].mxu0 %v2700
  %v2854 = vpop.f32.mrb[0].mxu0
  %v2855 = vadd.f32 0.0, %v2854
  %v2856 = vpop.f32.mrb[0].mxu0
  %v2857 = vpop.f32.mrb[0].mxu0
  %v2858 = vadd.f32 0.0, %v2857
  %v2859 = vpop.f32.mrb[0].mxu0
  %2860 = vmatprep.mubr.bf16.mxu0 0
  %2861 = vmatmul.mubr.bf16.gmra.mrb[0].mxu0 %v2702
  %v2862 = vpop.f32.mrb[0].mxu0
  %v2863 = vadd.f32 0.0, %v2862
  %v2864 = vpop.f32.mrb[0].mxu0
  %v2865 = vpop.f32.mrb[0].mxu0
  %v2866 = vadd.f32 0.0, %v2865
  %v2867 = vpop.f32.mrb[0].mxu0
  %2868 = vmatprep.mubr.bf16.mxu0 0
  %2869 = vmatmul.mubr.bf16.gmra.mrb[0].mxu0 %v2704
  %v2870 = vpop.f32.mrb[0].mxu0
  %v2871 = vadd.f32 0.0, %v2870
  %v2872 = vpop.f32.mrb[0].mxu0
  %v2873 = vpop.f32.mrb[0].mxu0
  %v2874 = vadd.f32 0.0, %v2873
  %v2875 = vpop.f32.mrb[0].mxu0
  %2876 = vmatprep.mubr.bf16.mxu0 0
  %2877 = vmatmul.mubr.bf16.gmra.mrb[0].mxu0 %v2703
  %v2878 = vpop.f32.mrb[0].mxu0
  %v2879 = vadd.f32 0.0, %v2878
  %v2880 = vpop.f32.mrb[0].mxu0
  %v2881 = vpop.f32.mrb[0].mxu0
  %v2882 = vpop.f32.mrb[0].mxu0
  %2883 = vdwg.mxu0
  %v2905 = vunpack.c.l.b16 %v2556
  %v2906 = vunpack.c.l.b16 %v2557
  %v2907 = vunpack.c.l.b16 %v2558
  %v2908 = vunpack.c.l.b16 %v2559
  %v2909 = vunpack.c.l.b16 %v2560
  %v2910 = vunpack.c.l.b16 %v2561
  %v2911 = vunpack.c.l.b16 %v2562
  %v2912 = vunpack.c.l.b16 %v2563
  %v2913 = vunpack.c.l.b16 %v2564
  %v2914 = vunpack.c.l.b16 %v2565
  %v2915 = vunpack.c.l.b16 %v2566
  %v2916 = vunpack.c.l.b16 %v2567
  %v2917 = vunpack.c.l.b16 %v2568
  %v2918 = vunpack.c.l.b16 %v2569
  %v2919 = vunpack.c.l.b16 %v2570
  %v2920 = vunpack.c.l.b16 %v2571
  %v2921 = vunpack.c.l.b16 %v2572
  %v2922 = vunpack.c.l.b16 %v2573
  %v2923 = vunpack.c.l.b16 %v2574
  %v2924 = vunpack.c.l.b16 %v2575
  %v2925 = vunpack.c.l.b16 %v2576
  %v2926 = vpack.c.b16 %v2906, %v2905
  %v2927 = vpack.c.b16 %v2908, %v2907
  %v2928 = vpack.c.b16 %v2910, %v2909
  %v2929 = vpack.c.b16 %v2912, %v2911
  %v2930 = vpack.c.b16 %v2914, %v2913
  %v2931 = vpack.c.b16 %v2916, %v2915
  %v2932 = vpack.c.b16 %v2918, %v2917
  %v2933 = vpack.c.b16 %v2920, %v2919
  %v2934 = vpack.c.b16 %v2922, %v2921
  %v2935 = vpack.c.b16 %v2924, %v2923
  %v2936 = vpack.c.b16 %v2925, %v2925
  %v2964 = vunpack.c.l.b16 %v2577
  %v2965 = vunpack.c.l.b16 %v2578
  %v2966 = vunpack.c.l.b16 %v2579
  %v2967 = vunpack.c.l.b16 %v2580
  %v2968 = vunpack.c.l.b16 %v2581
  %v2969 = vunpack.c.l.b16 %v2582
  %v2970 = vunpack.c.l.b16 %v2583
  %v2971 = vunpack.c.l.b16 %v2584
  %v2972 = vunpack.c.l.b16 %v2585
  %v2973 = vunpack.c.l.b16 %v2586
  %v2974 = vunpack.c.l.b16 %v2587
  %v2975 = vunpack.c.l.b16 %v2588
  %v2976 = vunpack.c.l.b16 %v2589
  %v2977 = vunpack.c.l.b16 %v2590
  %v2978 = vunpack.c.l.b16 %v2591
  %v2979 = vunpack.c.l.b16 %v2592
  %v2980 = vpack.c.b16 %v2965, %v2964
  %v2981 = vpack.c.b16 %v2967, %v2966
  %v2982 = vpack.c.b16 %v2969, %v2968
  %v2983 = vpack.c.b16 %v2971, %v2970
  %v2984 = vpack.c.b16 %v2973, %v2972
  %v2985 = vpack.c.b16 %v2975, %v2974
  %v2986 = vpack.c.b16 %v2977, %v2976
  %v2987 = vpack.c.b16 %v2979, %v2978
  %2996 = vmatprep.subr.bf16.mxu0 0
  %2997 = vmatpush1.bf16.msra.mxu0 %v2980
  %2998 = vmatprep.subr.bf16.mxu0 0
  %2999 = vmatpush1.bf16.msra.mxu0 %v2981
  %3000 = vmatprep.subr.bf16.mxu0 0
  %3001 = vmatpush1.bf16.msra.mxu0 %v2982
  %3002 = vmatprep.subr.bf16.mxu0 0
  %3003 = vmatpush1.bf16.msra.mxu0 %v2983
  %3004 = vmatprep.subr.bf16.mxu0 0
  %3005 = vmatpush1.bf16.msra.mxu0 %v2984
  %3006 = vmatprep.subr.bf16.mxu0 0
  %3007 = vmatpush1.bf16.msra.mxu0 %v2985
  %3008 = vmatprep.subr.bf16.mxu0 0
  %3009 = vmatpush1.bf16.msra.mxu0 %v2986
  %3010 = vmatprep.subr.bf16.mxu0 0
  %3011 = vmatpush1.bf16.msra.mxu0 %v2987
  %3012 = vmatprep.subr.bf16.mxu0 0
  %3013 = vmatpush1.bf16.msra.mxu0 0
  %3014 = vmatprep.subr.bf16.mxu0 0
  %3015 = vmatpush1.bf16.msra.mxu0 0
  %3016 = vmatprep.subr.bf16.mxu0 0
  %3017 = vmatpush1.bf16.msra.mxu0 0
  %3018 = vmatprep.subr.bf16.mxu0 0
  %3019 = vmatpush1.bf16.msra.mxu0 0
  %3020 = vmatprep.subr.bf16.mxu0 0
  %3021 = vmatpush1.bf16.msra.mxu0 0
  %3022 = vmatprep.subr.bf16.mxu0 0
  %3023 = vmatpush1.bf16.msra.mxu0 0
  %3024 = vmatprep.subr.bf16.mxu0 0
  %3025 = vmatpush1.bf16.msra.mxu0 0
  %3026 = vmatprep.subr.bf16.mxu0 0
  %3027 = vmatpush1.bf16.msra.mxu0 0
  %3028 = vmatprep.mubr.bf16.mxu0 0
  %3029 = vmatmul.mubr.bf16.gmra.mrb[0].mxu0 %v2926
  %v3030 = vpop.f32.mrb[0].mxu0
  %v3031 = vadd.f32 %v2799, %v3030
  %v3032 = vpop.f32.mrb[0].mxu0
  %v3033 = vpop.f32.mrb[0].mxu0
  %v3034 = vadd.f32 %v2802, %v3033
  %v3035 = vpop.f32.mrb[0].mxu0
  %3036 = vmatprep.mubr.bf16.mxu0 0
  %3037 = vmatmul.mubr.bf16.gmra.mrb[0].mxu0 %v2927
  %v3038 = vpop.f32.mrb[0].mxu0
  %v3039 = vadd.f32 %v2807, %v3038
  %v3040 = vpop.f32.mrb[0].mxu0
  %v3041 = vpop.f32.mrb[0].mxu0
  %v3042 = vadd.f32 %v2810, %v3041
  %v3043 = vpop.f32.mrb[0].mxu0
  %3044 = vmatprep.mubr.bf16.mxu0 0
  %3045 = vmatmul.mubr.bf16.gmra.mrb[0].mxu0 %v2928
  %v3046 = vpop.f32.mrb[0].mxu0
  %v3047 = vadd.f32 %v2815, %v3046
  %v3048 = vpop.f32.mrb[0].mxu0
  %v3049 = vpop.f32.mrb[0].mxu0
  %v3050 = vadd.f32 %v2818, %v3049
  %v3051 = vpop.f32.mrb[0].mxu0
  %3052 = vmatprep.mubr.bf16.mxu0 0
  %3053 = vmatmul.mubr.bf16.gmra.mrb[0].mxu0 %v2929
  %v3054 = vpop.f32.mrb[0].mxu0
  %v3055 = vadd.f32 %v2823, %v3054
  %v3056 = vpop.f32.mrb[0].mxu0
  %v3057 = vpop.f32.mrb[0].mxu0
  %v3058 = vadd.f32 %v2826, %v3057
  %v3059 = vpop.f32.mrb[0].mxu0
  %3060 = vmatprep.mubr.bf16.mxu0 0
  %3061 = vmatmul.mubr.bf16.gmra.mrb[0].mxu0 %v2930
  %v3062 = vpop.f32.mrb[0].mxu0
  %v3063 = vadd.f32 %v2831, %v3062
  %v3064 = vpop.f32.mrb[0].mxu0
  %v3065 = vpop.f32.mrb[0].mxu0
  %v3066 = vadd.f32 %v2834, %v3065
  %v3067 = vpop.f32.mrb[0].mxu0
  %3068 = vmatprep.mubr.bf16.mxu0 0
  %3069 = vmatmul.mubr.bf16.gmra.mrb[0].mxu0 %v2931
  %v3070 = vpop.f32.mrb[0].mxu0
  %v3071 = vadd.f32 %v2839, %v3070
  %v3072 = vpop.f32.mrb[0].mxu0
  %v3073 = vpop.f32.mrb[0].mxu0
  %v3074 = vadd.f32 %v2842, %v3073
  %v3075 = vpop.f32.mrb[0].mxu0
  %3076 = vmatprep.mubr.bf16.mxu0 0
  %3077 = vmatmul.mubr.bf16.gmra.mrb[0].mxu0 %v2932
  %v3078 = vpop.f32.mrb[0].mxu0
  %v3079 = vadd.f32 %v2847, %v3078
  %v3080 = vpop.f32.mrb[0].mxu0
  %v3081 = vpop.f32.mrb[0].mxu0
  %v3082 = vadd.f32 %v2850, %v3081
  %v3083 = vpop.f32.mrb[0].mxu0
  %3084 = vmatprep.mubr.bf16.mxu0 0
  %3085 = vmatmul.mubr.bf16.gmra.mrb[0].mxu0 %v2933
  %v3086 = vpop.f32.mrb[0].mxu0
  %v3087 = vadd.f32 %v2855, %v3086
  %v3088 = vpop.f32.mrb[0].mxu0
  %v3089 = vpop.f32.mrb[0].mxu0
  %v3090 = vadd.f32 %v2858, %v3089
  %v3091 = vpop.f32.mrb[0].mxu0
  %3092 = vmatprep.mubr.bf16.mxu0 0
  %3093 = vmatmul.mubr.bf16.gmra.mrb[0].mxu0 %v2934
  %v3094 = vpop.f32.mrb[0].mxu0
  %v3095 = vadd.f32 %v2863, %v3094
  %v3096 = vpop.f32.mrb[0].mxu0
  %v3097 = vpop.f32.mrb[0].mxu0
  %v3098 = vadd.f32 %v2866, %v3097
  %v3099 = vpop.f32.mrb[0].mxu0
  %3100 = vmatprep.mubr.bf16.mxu0 0
  %3101 = vmatmul.mubr.bf16.gmra.mrb[0].mxu0 %v2935
  %v3102 = vpop.f32.mrb[0].mxu0
  %v3103 = vadd.f32 %v2871, %v3102
  %v3104 = vpop.f32.mrb[0].mxu0
  %v3105 = vpop.f32.mrb[0].mxu0
  %v3106 = vadd.f32 %v2874, %v3105
  %v3107 = vpop.f32.mrb[0].mxu0
  %3108 = vmatprep.mubr.bf16.mxu0 0
  %3109 = vmatmul.mubr.bf16.gmra.mrb[0].mxu0 %v2936
  %v3110 = vpop.f32.mrb[0].mxu0
  %v3111 = vadd.f32 %v2879, %v3110
  %v3112 = vpop.f32.mrb[0].mxu0
  %v3113 = vpop.f32.mrb[0].mxu0
  %v3114 = vpop.f32.mrb[0].mxu0
  %3115 = vdwg.mxu0
  %v3116 = vld [vmem:[#allocation2 + $0x50] sm:$0x3]
  %v3117 = vld [vmem:[%s4 + $0x80] sm:$0xf]
  %v3118 = vld [vmem:[%s4 + $0x84] sm:$0xf]
  %v3119 = vld [vmem:[%s4 + $0x88] sm:$0xf]
  %v3120 = vld [vmem:[%s4 + $0x8c] sm:$0xf]
  %v3121 = vld [vmem:[%s4 + $0x90] sm:$0xf]
  %v3122 = vld [vmem:[%s4 + $0x94] sm:$0xf]
  %v3123 = vld [vmem:[%s4 + $0x98] sm:$0xf]
  %v3124 = vld [vmem:[%s4 + $0x9c] sm:$0xf]
  %v3125 = vld [vmem:[%s4 + $0xa0] sm:$0xf]
  %v3126 = vld [vmem:[%s4 + $0xa4] sm:$0xf]
  %v3127 = vld [vmem:[%s4 + $0xa8] sm:$0xf]
  %v3128 = vld [vmem:[%s4 + $0xac] sm:$0xf]
  %v3129 = vld [vmem:[%s4 + $0xb0] sm:$0xf]
  %v3130 = vld [vmem:[%s4 + $0xb4] sm:$0xf]
  %v3131 = vld [vmem:[%s4 + $0xb8] sm:$0xf]
  %v3132 = vld [vmem:[%s4 + $0xbc] sm:$0xf]
  %v3134 = vunpack.c.l.b16 %v3116
  %v3135 = vpack.c.b16 %v3134, %v3134
  %vm3136 = vsmask.f32 7424
  %v3138 = vshrl.u32 %v2926, 16
  %v3140 = vshll.u32 %v2926, 16
  %v3142 = vrot.slane %v3140, 1
  %v3143 = vor.u32 %v3138, %v3142
  %v3145 = vshll.u32 %v2927, 16
  %v3147 = vrot.slane %v3145, 1
  %v3148 = vsel %vm3136, %v3143, %v3147
  %v3149 = vshrl.u32 %v2927, 16
  %v3151 = vor.u32 %v3149, %v3147
  %v3153 = vshll.u32 %v2928, 16
  %v3155 = vrot.slane %v3153, 1
  %v3156 = vsel %vm3136, %v3151, %v3155
  %v3157 = vshrl.u32 %v2928, 16
  %v3159 = vor.u32 %v3157, %v3155
  %v3161 = vshll.u32 %v2929, 16
  %v3163 = vrot.slane %v3161, 1
  %v3164 = vsel %vm3136, %v3159, %v3163
  %v3165 = vshrl.u32 %v2929, 16
  %v3167 = vor.u32 %v3165, %v3163
  %v3169 = vshll.u32 %v2930, 16
  %v3171 = vrot.slane %v3169, 1
  %v3172 = vsel %vm3136, %v3167, %v3171
  %v3173 = vshrl.u32 %v2930, 16
  %v3175 = vor.u32 %v3173, %v3171
  %v3177 = vshll.u32 %v2931, 16
  %v3179 = vrot.slane %v3177, 1
  %v3180 = vsel %vm3136, %v3175, %v3179
  %v3181 = vshrl.u32 %v2931, 16
  %v3183 = vor.u32 %v3181, %v3179
  %v3185 = vshll.u32 %v2932, 16
  %v3187 = vrot.slane %v3185, 1
  %v3188 = vsel %vm3136, %v3183, %v3187
  %v3189 = vshrl.u32 %v2932, 16
  %v3191 = vor.u32 %v3189, %v3187
  %v3193 = vshll.u32 %v2933, 16
  %v3195 = vrot.slane %v3193, 1
  %v3196 = vsel %vm3136, %v3191, %v3195
  %v3197 = vshrl.u32 %v2933, 16
  %v3199 = vor.u32 %v3197, %v3195
  %v3201 = vshll.u32 %v2934, 16
  %v3203 = vrot.slane %v3201, 1
  %v3204 = vsel %vm3136, %v3199, %v3203
  %v3205 = vshrl.u32 %v2934, 16
  %v3207 = vor.u32 %v3205, %v3203
  %v3209 = vshll.u32 %v2935, 16
  %v3211 = vrot.slane %v3209, 1
  %v3212 = vsel %vm3136, %v3207, %v3211
  %v3213 = vshrl.u32 %v2935, 16
  %v3215 = vor.u32 %v3213, %v3211
  %v3217 = vshll.u32 %v3135, 16
  %v3219 = vrot.slane %v3217, 1
  %v3220 = vsel %vm3136, %v3215, %v3219
  %v3221 = vshrl.u32 %v3135, 16
  %v3223 = vor.u32 %v3221, %v3219
  %v3251 = vunpack.c.l.b16 %v3117
  %v3252 = vunpack.c.l.b16 %v3118
  %v3253 = vunpack.c.l.b16 %v3119
  %v3254 = vunpack.c.l.b16 %v3120
  %v3255 = vunpack.c.l.b16 %v3121
  %v3256 = vunpack.c.l.b16 %v3122
  %v3257 = vunpack.c.l.b16 %v3123
  %v3258 = vunpack.c.l.b16 %v3124
  %v3259 = vunpack.c.l.b16 %v3125
  %v3260 = vunpack.c.l.b16 %v3126
  %v3261 = vunpack.c.l.b16 %v3127
  %v3262 = vunpack.c.l.b16 %v3128
  %v3263 = vunpack.c.l.b16 %v3129
  %v3264 = vunpack.c.l.b16 %v3130
  %v3265 = vunpack.c.l.b16 %v3131
  %v3266 = vunpack.c.l.b16 %v3132
  %v3267 = vpack.c.b16 %v3252, %v3251
  %v3268 = vpack.c.b16 %v3254, %v3253
  %v3269 = vpack.c.b16 %v3256, %v3255
  %v3270 = vpack.c.b16 %v3258, %v3257
  %v3271 = vpack.c.b16 %v3260, %v3259
  %v3272 = vpack.c.b16 %v3262, %v3261
  %v3273 = vpack.c.b16 %v3264, %v3263
  %v3274 = vpack.c.b16 %v3266, %v3265
  %3283 = vmatprep.subr.bf16.mxu0 0
  %3284 = vmatpush1.bf16.msra.mxu0 %v3267
  %3285 = vmatprep.subr.bf16.mxu0 0
  %3286 = vmatpush1.bf16.msra.mxu0 %v3268
  %3287 = vmatprep.subr.bf16.mxu0 0
  %3288 = vmatpush1.bf16.msra.mxu0 %v3269
  %3289 = vmatprep.subr.bf16.mxu0 0
  %3290 = vmatpush1.bf16.msra.mxu0 %v3270
  %3291 = vmatprep.subr.bf16.mxu0 0
  %3292 = vmatpush1.bf16.msra.mxu0 %v3271
  %3293 = vmatprep.subr.bf16.mxu0 0
  %3294 = vmatpush1.bf16.msra.mxu0 %v3272
  %3295 = vmatprep.subr.bf16.mxu0 0
  %3296 = vmatpush1.bf16.msra.mxu0 %v3273
  %3297 = vmatprep.subr.bf16.mxu0 0
  %3298 = vmatpush1.bf16.msra.mxu0 %v3274
  %3299 = vmatprep.subr.bf16.mxu0 0
  %3300 = vmatpush1.bf16.msra.mxu0 0
  %3301 = vmatprep.subr.bf16.mxu0 0
  %3302 = vmatpush1.bf16.msra.mxu0 0
  %3303 = vmatprep.subr.bf16.mxu0 0
  %3304 = vmatpush1.bf16.msra.mxu0 0
  %3305 = vmatprep.subr.bf16.mxu0 0
  %3306 = vmatpush1.bf16.msra.mxu0 0
  %3307 = vmatprep.subr.bf16.mxu0 0
  %3308 = vmatpush1.bf16.msra.mxu0 0
  %3309 = vmatprep.subr.bf16.mxu0 0
  %3310 = vmatpush1.bf16.msra.mxu0 0
  %3311 = vmatprep.subr.bf16.mxu0 0
  %3312 = vmatpush1.bf16.msra.mxu0 0
  %3313 = vmatprep.subr.bf16.mxu0 0
  %3314 = vmatpush1.bf16.msra.mxu0 0
  %3315 = vmatprep.mubr.bf16.mxu0 0
  %3316 = vmatmul.mubr.bf16.gmra.mrb[0].mxu0 %v3148
  %v3317 = vpop.f32.mrb[0].mxu0
  %v3318 = vadd.f32 0.0, %v3317
  %v3319 = vpop.f32.mrb[0].mxu0
  %v3320 = vpop.f32.mrb[0].mxu0
  %v3321 = vadd.f32 0.0, %v3320
  %v3322 = vpop.f32.mrb[0].mxu0
  %3323 = vmatprep.mubr.bf16.mxu0 0
  %3324 = vmatmul.mubr.bf16.gmra.mrb[0].mxu0 %v3156
  %v3325 = vpop.f32.mrb[0].mxu0
  %v3326 = vadd.f32 0.0, %v3325
  %v3327 = vpop.f32.mrb[0].mxu0
  %v3328 = vpop.f32.mrb[0].mxu0
  %v3329 = vadd.f32 0.0, %v3328
  %v3330 = vpop.f32.mrb[0].mxu0
  %3331 = vmatprep.mubr.bf16.mxu0 0
  %3332 = vmatmul.mubr.bf16.gmra.mrb[0].mxu0 %v3164
  %v3333 = vpop.f32.mrb[0].mxu0
  %v3334 = vadd.f32 0.0, %v3333
  %v3335 = vpop.f32.mrb[0].mxu0
  %v3336 = vpop.f32.mrb[0].mxu0
  %v3337 = vadd.f32 0.0, %v3336
  %v3338 = vpop.f32.mrb[0].mxu0
  %3339 = vmatprep.mubr.bf16.mxu0 0
  %3340 = vmatmul.mubr.bf16.gmra.mrb[0].mxu0 %v3172
  %v3341 = vpop.f32.mrb[0].mxu0
  %v3342 = vadd.f32 0.0, %v3341
  %v3343 = vpop.f32.mrb[0].mxu0
  %v3344 = vpop.f32.mrb[0].mxu0
  %v3345 = vadd.f32 0.0, %v3344
  %v3346 = vpop.f32.mrb[0].mxu0
  %3347 = vmatprep.mubr.bf16.mxu0 0
  %3348 = vmatmul.mubr.bf16.gmra.mrb[0].mxu0 %v3180
  %v3349 = vpop.f32.mrb[0].mxu0
  %v3350 = vadd.f32 0.0, %v3349
  %v3351 = vpop.f32.mrb[0].mxu0
  %v3352 = vpop.f32.mrb[0].mxu0
  %v3353 = vadd.f32 0.0, %v3352
  %v3354 = vpop.f32.mrb[0].mxu0
  %3355 = vmatprep.mubr.bf16.mxu0 0
  %3356 = vmatmul.mubr.bf16.gmra.mrb[0].mxu0 %v3188
  %v3357 = vpop.f32.mrb[0].mxu0
  %v3358 = vadd.f32 0.0, %v3357
  %v3359 = vpop.f32.mrb[0].mxu0
  %v3360 = vpop.f32.mrb[0].mxu0
  %v3361 = vadd.f32 0.0, %v3360
  %v3362 = vpop.f32.mrb[0].mxu0
  %3363 = vmatprep.mubr.bf16.mxu0 0
  %3364 = vmatmul.mubr.bf16.gmra.mrb[0].mxu0 %v3196
  %v3365 = vpop.f32.mrb[0].mxu0
  %v3366 = vadd.f32 0.0, %v3365
  %v3367 = vpop.f32.mrb[0].mxu0
  %v3368 = vpop.f32.mrb[0].mxu0
  %v3369 = vadd.f32 0.0, %v3368
  %v3370 = vpop.f32.mrb[0].mxu0
  %3371 = vmatprep.mubr.bf16.mxu0 0
  %3372 = vmatmul.mubr.bf16.gmra.mrb[0].mxu0 %v3204
  %v3373 = vpop.f32.mrb[0].mxu0
  %v3374 = vadd.f32 0.0, %v3373
  %v3375 = vpop.f32.mrb[0].mxu0
  %v3376 = vpop.f32.mrb[0].mxu0
  %v3377 = vadd.f32 0.0, %v3376
  %v3378 = vpop.f32.mrb[0].mxu0
  %3379 = vmatprep.mubr.bf16.mxu0 0
  %3380 = vmatmul.mubr.bf16.gmra.mrb[0].mxu0 %v3212
  %v3381 = vpop.f32.mrb[0].mxu0
  %v3382 = vadd.f32 0.0, %v3381
  %v3383 = vpop.f32.mrb[0].mxu0
  %v3384 = vpop.f32.mrb[0].mxu0
  %v3385 = vadd.f32 0.0, %v3384
  %v3386 = vpop.f32.mrb[0].mxu0
  %3387 = vmatprep.mubr.bf16.mxu0 0
  %3388 = vmatmul.mubr.bf16.gmra.mrb[0].mxu0 %v3220
  %v3389 = vpop.f32.mrb[0].mxu0
  %v3390 = vadd.f32 0.0, %v3389
  %v3391 = vpop.f32.mrb[0].mxu0
  %v3392 = vpop.f32.mrb[0].mxu0
  %v3393 = vadd.f32 0.0, %v3392
  %v3394 = vpop.f32.mrb[0].mxu0
  %3395 = vmatprep.mubr.bf16.mxu0 0
  %3396 = vmatmul.mubr.bf16.gmra.mrb[0].mxu0 %v3223
  %v3397 = vpop.f32.mrb[0].mxu0
  %v3398 = vadd.f32 0.0, %v3397
  %v3399 = vpop.f32.mrb[0].mxu0
  %v3400 = vpop.f32.mrb[0].mxu0
  %v3401 = vpop.f32.mrb[0].mxu0
  %3402 = vdwg.mxu0
  %v3403 = vadd.f32 %v3031, %v3318
  %v3404 = vadd.f32 %v3034, %v3321
  %v3405 = vadd.f32 %v3039, %v3326
  %v3406 = vadd.f32 %v3042, %v3329
  %v3407 = vadd.f32 %v3047, %v3334
  %v3408 = vadd.f32 %v3050, %v3337
  %v3409 = vadd.f32 %v3055, %v3342
  %v3410 = vadd.f32 %v3058, %v3345
  %v3411 = vadd.f32 %v3063, %v3350
  %v3412 = vadd.f32 %v3066, %v3353
  %v3413 = vadd.f32 %v3071, %v3358
  %v3414 = vadd.f32 %v3074, %v3361
  %v3415 = vadd.f32 %v3079, %v3366
  %v3416 = vadd.f32 %v3082, %v3369
  %v3417 = vadd.f32 %v3087, %v3374
  %v3418 = vadd.f32 %v3090, %v3377
  %v3419 = vadd.f32 %v3095, %v3382
  %v3420 = vadd.f32 %v3098, %v3385
  %v3421 = vadd.f32 %v3103, %v3390
  %v3422 = vadd.f32 %v3106, %v3393
  %v3423 = vadd.f32 %v3111, %v3398
  %v3424 = vld [vmem:[#allocation2 + $0xa0] sm:$0xc]
  %v3425 = vld [vmem:[#allocation2 + $0xa4] sm:$0xf]
  %v3426 = vld [vmem:[#allocation2 + $0xa8] sm:$0xf]
  %v3427 = vld [vmem:[#allocation2 + $0xac] sm:$0xf]
  %v3428 = vld [vmem:[#allocation2 + $0xb0] sm:$0xf]
  %v3429 = vld [vmem:[#allocation2 + $0xb4] sm:$0xf]
  %v3430 = vld [vmem:[#allocation2 + $0xb8] sm:$0xf]
  %v3431 = vld [vmem:[#allocation2 + $0xbc] sm:$0xf]
  %v3432 = vld [vmem:[#allocation2 + $0xc0] sm:$0xf]
  %v3433 = vld [vmem:[#allocation2 + $0xc4] sm:$0xf]
  %v3434 = vld [vmem:[#allocation2 + $0xc8] sm:$0xf]
  %v3435 = vld [vmem:[#allocation2 + $0xcc] sm:$0xf]
  %v3436 = vld [vmem:[#allocation2 + $0xd0] sm:$0xf]
  %v3437 = vld [vmem:[#allocation2 + $0xd4] sm:$0xf]
  %v3438 = vld [vmem:[#allocation2 + $0xd8] sm:$0xf]
  %v3439 = vld [vmem:[#allocation2 + $0xdc] sm:$0xf]
  %v3440 = vld [vmem:[#allocation2 + $0xe0] sm:$0xf]
  %v3441 = vld [vmem:[#allocation2 + $0xe4] sm:$0xf]
  %v3442 = vld [vmem:[#allocation2 + $0xe8] sm:$0xf]
  %v3443 = vld [vmem:[#allocation2 + $0xec] sm:$0xf]
  %v3444 = vld [vmem:[#allocation2 + $0xf0] sm:$0x7]
  %v3445 = vld [vmem:[%s4 + $0xc0] sm:$0xf]
  %v3446 = vld [vmem:[%s4 + $0xc4] sm:$0xf]
  %v3447 = vld [vmem:[%s4 + $0xc8] sm:$0xf]
  %v3448 = vld [vmem:[%s4 + $0xcc] sm:$0xf]
  %v3449 = vld [vmem:[%s4 + $0xd0] sm:$0xf]
  %v3450 = vld [vmem:[%s4 + $0xd4] sm:$0xf]
  %v3451 = vld [vmem:[%s4 + $0xd8] sm:$0xf]
  %v3452 = vld [vmem:[%s4 + $0xdc] sm:$0xf]
  %v3453 = vld [vmem:[%s4 + $0xe0] sm:$0xf]
  %v3454 = vld [vmem:[%s4 + $0xe4] sm:$0xf]
  %v3455 = vld [vmem:[%s4 + $0xe8] sm:$0xf]
  %v3456 = vld [vmem:[%s4 + $0xec] sm:$0xf]
  %v3457 = vld [vmem:[%s4 + $0xf0] sm:$0xf]
  %v3458 = vld [vmem:[%s4 + $0xf4] sm:$0xf]
  %v3459 = vld [vmem:[%s4 + $0xf8] sm:$0xf]
  %v3460 = vld [vmem:[%s4 + $0xfc] sm:$0xf]
  %v3482 = vunpack.c.l.b16 %v3424
  %v3483 = vunpack.c.l.b16 %v3425
  %v3484 = vunpack.c.l.b16 %v3426
  %v3485 = vunpack.c.l.b16 %v3427
  %v3486 = vunpack.c.l.b16 %v3428
  %v3487 = vunpack.c.l.b16 %v3429
  %v3488 = vunpack.c.l.b16 %v3430
  %v3489 = vunpack.c.l.b16 %v3431
  %v3490 = vunpack.c.l.b16 %v3432
  %v3491 = vunpack.c.l.b16 %v3433
  %v3492 = vunpack.c.l.b16 %v3434
  %v3493 = vunpack.c.l.b16 %v3435
  %v3494 = vunpack.c.l.b16 %v3436
  %v3495 = vunpack.c.l.b16 %v3437
  %v3496 = vunpack.c.l.b16 %v3438
  %v3497 = vunpack.c.l.b16 %v3439
  %v3498 = vunpack.c.l.b16 %v3440
  %v3499 = vunpack.c.l.b16 %v3441
  %v3500 = vunpack.c.l.b16 %v3442
  %v3501 = vunpack.c.l.b16 %v3443
  %v3502 = vunpack.c.l.b16 %v3444
  %v3503 = vpack.c.b16 %v3483, %v3482
  %v3504 = vpack.c.b16 %v3485, %v3484
  %v3505 = vpack.c.b16 %v3487, %v3486
  %v3506 = vpack.c.b16 %v3489, %v3488
  %v3507 = vpack.c.b16 %v3491, %v3490
  %v3508 = vpack.c.b16 %v3493, %v3492
  %v3509 = vpack.c.b16 %v3495, %v3494
  %v3510 = vpack.c.b16 %v3497, %v3496
  %v3511 = vpack.c.b16 %v3499, %v3498
  %v3512 = vpack.c.b16 %v3501, %v3500
  %v3513 = vpack.c.b16 %v3502, %v3502
  %vm3514 = vcmask 1045504
  %v3515 = vrot.slane %v3503, 2
  %v3516 = vrot.slane %v3504, 2
  %v3517 = vsel %vm3514, %v3515, %v3516
  %v3518 = vrot.slane %v3505, 2
  %v3519 = vsel %vm3514, %v3516, %v3518
  %v3520 = vrot.slane %v3506, 2
  %v3521 = vsel %vm3514, %v3518, %v3520
  %v3522 = vrot.slane %v3507, 2
  %v3523 = vsel %vm3514, %v3520, %v3522
  %v3524 = vrot.slane %v3508, 2
  %v3525 = vsel %vm3514, %v3522, %v3524
  %v3526 = vrot.slane %v3509, 2
  %v3527 = vsel %vm3514, %v3524, %v3526
  %v3528 = vrot.slane %v3510, 2
  %v3529 = vsel %vm3514, %v3526, %v3528
  %v3530 = vrot.slane %v3511, 2
  %v3531 = vsel %vm3514, %v3528, %v3530
  %v3532 = vrot.slane %v3512, 2
  %v3533 = vsel %vm3514, %v3530, %v3532
  %v3534 = vrot.slane %v3513, 2
  %v3535 = vsel %vm3514, %v3532, %v3534
  %v3563 = vunpack.c.l.b16 %v3445
  %v3564 = vunpack.c.l.b16 %v3446
  %v3565 = vunpack.c.l.b16 %v3447
  %v3566 = vunpack.c.l.b16 %v3448
  %v3567 = vunpack.c.l.b16 %v3449
  %v3568 = vunpack.c.l.b16 %v3450
  %v3569 = vunpack.c.l.b16 %v3451
  %v3570 = vunpack.c.l.b16 %v3452
  %v3571 = vunpack.c.l.b16 %v3453
  %v3572 = vunpack.c.l.b16 %v3454
  %v3573 = vunpack.c.l.b16 %v3455
  %v3574 = vunpack.c.l.b16 %v3456
  %v3575 = vunpack.c.l.b16 %v3457
  %v3576 = vunpack.c.l.b16 %v3458
  %v3577 = vunpack.c.l.b16 %v3459
  %v3578 = vunpack.c.l.b16 %v3460
  %v3579 = vpack.c.b16 %v3564, %v3563
  %v3580 = vpack.c.b16 %v3566, %v3565
  %v3581 = vpack.c.b16 %v3568, %v3567
  %v3582 = vpack.c.b16 %v3570, %v3569
  %v3583 = vpack.c.b16 %v3572, %v3571
  %v3584 = vpack.c.b16 %v3574, %v3573
  %v3585 = vpack.c.b16 %v3576, %v3575
  %v3586 = vpack.c.b16 %v3578, %v3577
  %3595 = vmatprep.subr.bf16.mxu0 0
  %3596 = vmatpush1.bf16.msra.mxu0 %v3579
  %3597 = vmatprep.subr.bf16.mxu0 0
  %3598 = vmatpush1.bf16.msra.mxu0 %v3580
  %3599 = vmatprep.subr.bf16.mxu0 0
  %3600 = vmatpush1.bf16.msra.mxu0 %v3581
  %3601 = vmatprep.subr.bf16.mxu0 0
  %3602 = vmatpush1.bf16.msra.mxu0 %v3582
  %3603 = vmatprep.subr.bf16.mxu0 0
  %3604 = vmatpush1.bf16.msra.mxu0 %v3583
  %3605 = vmatprep.subr.bf16.mxu0 0
  %3606 = vmatpush1.bf16.msra.mxu0 %v3584
  %3607 = vmatprep.subr.bf16.mxu0 0
  %3608 = vmatpush1.bf16.msra.mxu0 %v3585
  %3609 = vmatprep.subr.bf16.mxu0 0
  %3610 = vmatpush1.bf16.msra.mxu0 %v3586
  %3611 = vmatprep.subr.bf16.mxu0 0
  %3612 = vmatpush1.bf16.msra.mxu0 0
  %3613 = vmatprep.subr.bf16.mxu0 0
  %3614 = vmatpush1.bf16.msra.mxu0 0
  %3615 = vmatprep.subr.bf16.mxu0 0
  %3616 = vmatpush1.bf16.msra.mxu0 0
  %3617 = vmatprep.subr.bf16.mxu0 0
  %3618 = vmatpush1.bf16.msra.mxu0 0
  %3619 = vmatprep.subr.bf16.mxu0 0
  %3620 = vmatpush1.bf16.msra.mxu0 0
  %3621 = vmatprep.subr.bf16.mxu0 0
  %3622 = vmatpush1.bf16.msra.mxu0 0
  %3623 = vmatprep.subr.bf16.mxu0 0
  %3624 = vmatpush1.bf16.msra.mxu0 0
  %3625 = vmatprep.subr.bf16.mxu0 0
  %3626 = vmatpush1.bf16.msra.mxu0 0
  %3627 = vmatprep.mubr.bf16.mxu0 0
  %3628 = vmatmul.mubr.bf16.gmra.mrb[0].mxu0 %v3517
  %v3629 = vpop.f32.mrb[0].mxu0
  %v3630 = vadd.f32 0.0, %v3629
  %v3631 = vpop.f32.mrb[0].mxu0
  %v3632 = vpop.f32.mrb[0].mxu0
  %v3633 = vadd.f32 0.0, %v3632
  %v3634 = vpop.f32.mrb[0].mxu0
  %3635 = vmatprep.mubr.bf16.mxu0 0
  %3636 = vmatmul.mubr.bf16.gmra.mrb[0].mxu0 %v3519
  %v3637 = vpop.f32.mrb[0].mxu0
  %v3638 = vadd.f32 0.0, %v3637
  %v3639 = vpop.f32.mrb[0].mxu0
  %v3640 = vpop.f32.mrb[0].mxu0
  %v3641 = vadd.f32 0.0, %v3640
  %v3642 = vpop.f32.mrb[0].mxu0
  %3643 = vmatprep.mubr.bf16.mxu0 0
  %3644 = vmatmul.mubr.bf16.gmra.mrb[0].mxu0 %v3521
  %v3645 = vpop.f32.mrb[0].mxu0
  %v3646 = vadd.f32 0.0, %v3645
  %v3647 = vpop.f32.mrb[0].mxu0
  %v3648 = vpop.f32.mrb[0].mxu0
  %v3649 = vadd.f32 0.0, %v3648
  %v3650 = vpop.f32.mrb[0].mxu0
  %3651 = vmatprep.mubr.bf16.mxu0 0
  %3652 = vmatmul.mubr.bf16.gmra.mrb[0].mxu0 %v3523
  %v3653 = vpop.f32.mrb[0].mxu0
  %v3654 = vadd.f32 0.0, %v3653
  %v3655 = vpop.f32.mrb[0].mxu0
  %v3656 = vpop.f32.mrb[0].mxu0
  %v3657 = vadd.f32 0.0, %v3656
  %v3658 = vpop.f32.mrb[0].mxu0
  %3659 = vmatprep.mubr.bf16.mxu0 0
  %3660 = vmatmul.mubr.bf16.gmra.mrb[0].mxu0 %v3525
  %v3661 = vpop.f32.mrb[0].mxu0
  %v3662 = vadd.f32 0.0, %v3661
  %v3663 = vpop.f32.mrb[0].mxu0
  %v3664 = vpop.f32.mrb[0].mxu0
  %v3665 = vadd.f32 0.0, %v3664
  %v3666 = vpop.f32.mrb[0].mxu0
  %3667 = vmatprep.mubr.bf16.mxu0 0
  %3668 = vmatmul.mubr.bf16.gmra.mrb[0].mxu0 %v3527
  %v3669 = vpop.f32.mrb[0].mxu0
  %v3670 = vadd.f32 0.0, %v3669
  %v3671 = vpop.f32.mrb[0].mxu0
  %v3672 = vpop.f32.mrb[0].mxu0
  %v3673 = vadd.f32 0.0, %v3672
  %v3674 = vpop.f32.mrb[0].mxu0
  %3675 = vmatprep.mubr.bf16.mxu0 0
  %3676 = vmatmul.mubr.bf16.gmra.mrb[0].mxu0 %v3529
  %v3677 = vpop.f32.mrb[0].mxu0
  %v3678 = vadd.f32 0.0, %v3677
  %v3679 = vpop.f32.mrb[0].mxu0
  %v3680 = vpop.f32.mrb[0].mxu0
  %v3681 = vadd.f32 0.0, %v3680
  %v3682 = vpop.f32.mrb[0].mxu0
  %3683 = vmatprep.mubr.bf16.mxu0 0
  %3684 = vmatmul.mubr.bf16.gmra.mrb[0].mxu0 %v3531
  %v3685 = vpop.f32.mrb[0].mxu0
  %v3686 = vadd.f32 0.0, %v3685
  %v3687 = vpop.f32.mrb[0].mxu0
  %v3688 = vpop.f32.mrb[0].mxu0
  %v3689 = vadd.f32 0.0, %v3688
  %v3690 = vpop.f32.mrb[0].mxu0
  %3691 = vmatprep.mubr.bf16.mxu0 0
  %3692 = vmatmul.mubr.bf16.gmra.mrb[0].mxu0 %v3533
  %v3693 = vpop.f32.mrb[0].mxu0
  %v3694 = vadd.f32 0.0, %v3693
  %v3695 = vpop.f32.mrb[0].mxu0
  %v3696 = vpop.f32.mrb[0].mxu0
  %v3697 = vadd.f32 0.0, %v3696
  %v3698 = vpop.f32.mrb[0].mxu0
  %3699 = vmatprep.mubr.bf16.mxu0 0
  %3700 = vmatmul.mubr.bf16.gmra.mrb[0].mxu0 %v3535
  %v3701 = vpop.f32.mrb[0].mxu0
  %v3702 = vadd.f32 0.0, %v3701
  %v3703 = vpop.f32.mrb[0].mxu0
  %v3704 = vpop.f32.mrb[0].mxu0
  %v3705 = vadd.f32 0.0, %v3704
  %v3706 = vpop.f32.mrb[0].mxu0
  %3707 = vmatprep.mubr.bf16.mxu0 0
  %3708 = vmatmul.mubr.bf16.gmra.mrb[0].mxu0 %v3534
  %v3709 = vpop.f32.mrb[0].mxu0
  %v3710 = vadd.f32 0.0, %v3709
  %v3711 = vpop.f32.mrb[0].mxu0
  %v3712 = vpop.f32.mrb[0].mxu0
  %v3713 = vpop.f32.mrb[0].mxu0
  %3714 = vdwg.mxu0
  %v3715 = vadd.f32 %v3403, %v3630
  %v3716 = vadd.f32 %v3404, %v3633
  %v3717 = vadd.f32 %v3405, %v3638
  %v3718 = vadd.f32 %v3406, %v3641
  %v3719 = vadd.f32 %v3407, %v3646
  %v3720 = vadd.f32 %v3408, %v3649
  %v3721 = vadd.f32 %v3409, %v3654
  %v3722 = vadd.f32 %v3410, %v3657
  %v3723 = vadd.f32 %v3411, %v3662
  %v3724 = vadd.f32 %v3412, %v3665
  %v3725 = vadd.f32 %v3413, %v3670
  %v3726 = vadd.f32 %v3414, %v3673
  %v3727 = vadd.f32 %v3415, %v3678
  %v3728 = vadd.f32 %v3416, %v3681
  %v3729 = vadd.f32 %v3417, %v3686
  %v3730 = vadd.f32 %v3418, %v3689
  %v3731 = vadd.f32 %v3419, %v3694
  %v3732 = vadd.f32 %v3420, %v3697
  %v3733 = vadd.f32 %v3421, %v3702
  %v3734 = vadd.f32 %v3422, %v3705
  %v3735 = vadd.f32 %v3423, %v3710
  %v3736 = vld [vmem:[#allocation2 + $0xf0] sm:$0x8]
  %v3737 = vld [vmem:[#allocation2 + $0xf4] sm:$0xf]
  %v3738 = vld [vmem:[#allocation2 + $0xf8] sm:$0xf]
  %v3739 = vld [vmem:[#allocation2 + $0xfc] sm:$0xf]
  %v3740 = vld [vmem:[#allocation2 + $0x100] sm:$0xf]
  %v3741 = vld [vmem:[#allocation2 + $0x104] sm:$0xf]
  %v3742 = vld [vmem:[#allocation2 + $0x108] sm:$0xf]
  %v3743 = vld [vmem:[#allocation2 + $0x10c] sm:$0xf]
  %v3744 = vld [vmem:[#allocation2 + $0x110] sm:$0xf]
  %v3745 = vld [vmem:[#allocation2 + $0x114] sm:$0xf]
  %v3746 = vld [vmem:[#allocation2 + $0x118] sm:$0xf]
  %v3747 = vld [vmem:[#allocation2 + $0x11c] sm:$0xf]
  %v3748 = vld [vmem:[#allocation2 + $0x120] sm:$0xf]
  %v3749 = vld [vmem:[#allocation2 + $0x124] sm:$0xf]
  %v3750 = vld [vmem:[#allocation2 + $0x128] sm:$0xf]
  %v3751 = vld [vmem:[#allocation2 + $0x12c] sm:$0xf]
  %v3752 = vld [vmem:[#allocation2 + $0x130] sm:$0xf]
  %v3753 = vld [vmem:[#allocation2 + $0x134] sm:$0xf]
  %v3754 = vld [vmem:[#allocation2 + $0x138] sm:$0xf]
  %v3755 = vld [vmem:[#allocation2 + $0x13c] sm:$0xf]
  %v3756 = vld [vmem:[#allocation2 + $0x140] sm:$0xf]
  %v3757 = vld [vmem:[%s4 + $0x100] sm:$0xf]
  %v3758 = vld [vmem:[%s4 + $0x104] sm:$0xf]
  %v3759 = vld [vmem:[%s4 + $0x108] sm:$0xf]
  %v3760 = vld [vmem:[%s4 + $0x10c] sm:$0xf]
  %v3761 = vld [vmem:[%s4 + $0x110] sm:$0xf]
  %v3762 = vld [vmem:[%s4 + $0x114] sm:$0xf]
  %v3763 = vld [vmem:[%s4 + $0x118] sm:$0xf]
  %v3764 = vld [vmem:[%s4 + $0x11c] sm:$0xf]
  %v3765 = vld [vmem:[%s4 + $0x120] sm:$0xf]
  %v3766 = vld [vmem:[%s4 + $0x124] sm:$0xf]
  %v3767 = vld [vmem:[%s4 + $0x128] sm:$0xf]
  %v3768 = vld [vmem:[%s4 + $0x12c] sm:$0xf]
  %v3769 = vld [vmem:[%s4 + $0x130] sm:$0xf]
  %v3770 = vld [vmem:[%s4 + $0x134] sm:$0xf]
  %v3771 = vld [vmem:[%s4 + $0x138] sm:$0xf]
  %v3772 = vld [vmem:[%s4 + $0x13c] sm:$0xf]
  %v3794 = vunpack.c.l.b16 %v3736
  %v3795 = vunpack.c.l.b16 %v3737
  %v3796 = vunpack.c.l.b16 %v3738
  %v3797 = vunpack.c.l.b16 %v3739
  %v3798 = vunpack.c.l.b16 %v3740
  %v3799 = vunpack.c.l.b16 %v3741
  %v3800 = vunpack.c.l.b16 %v3742
  %v3801 = vunpack.c.l.b16 %v3743
  %v3802 = vunpack.c.l.b16 %v3744
  %v3803 = vunpack.c.l.b16 %v3745
  %v3804 = vunpack.c.l.b16 %v3746
  %v3805 = vunpack.c.l.b16 %v3747
  %v3806 = vunpack.c.l.b16 %v3748
  %v3807 = vunpack.c.l.b16 %v3749
  %v3808 = vunpack.c.l.b16 %v3750
  %v3809 = vunpack.c.l.b16 %v3751
  %v3810 = vunpack.c.l.b16 %v3752
  %v3811 = vunpack.c.l.b16 %v3753
  %v3812 = vunpack.c.l.b16 %v3754
  %v3813 = vunpack.c.l.b16 %v3755
  %v3814 = vunpack.c.l.b16 %v3756
  %v3815 = vpack.c.b16 %v3795, %v3794
  %v3816 = vpack.c.b16 %v3797, %v3796
  %v3817 = vpack.c.b16 %v3799, %v3798
  %v3818 = vpack.c.b16 %v3801, %v3800
  %v3819 = vpack.c.b16 %v3803, %v3802
  %v3820 = vpack.c.b16 %v3805, %v3804
  %v3821 = vpack.c.b16 %v3807, %v3806
  %v3822 = vpack.c.b16 %v3809, %v3808
  %v3823 = vpack.c.b16 %v3811, %v3810
  %v3824 = vpack.c.b16 %v3813, %v3812
  %v3825 = vpack.c.b16 %v3814, %v3814
  %vm3826 = vcmask 1044480
  %v3827 = vrot.slane %v3815, 3
  %v3828 = vrot.slane %v3816, 3
  %v3829 = vsel %vm3826, %v3827, %v3828
  %v3830 = vrot.slane %v3817, 3
  %v3831 = vsel %vm3826, %v3828, %v3830
  %v3832 = vrot.slane %v3818, 3
  %v3833 = vsel %vm3826, %v3830, %v3832
  %v3834 = vrot.slane %v3819, 3
  %v3835 = vsel %vm3826, %v3832, %v3834
  %v3836 = vrot.slane %v3820, 3
  %v3837 = vsel %vm3826, %v3834, %v3836
  %v3838 = vrot.slane %v3821, 3
  %v3839 = vsel %vm3826, %v3836, %v3838
  %v3840 = vrot.slane %v3822, 3
  %v3841 = vsel %vm3826, %v3838, %v3840
  %v3842 = vrot.slane %v3823, 3
  %v3843 = vsel %vm3826, %v3840, %v3842
  %v3844 = vrot.slane %v3824, 3
  %v3845 = vsel %vm3826, %v3842, %v3844
  %v3846 = vrot.slane %v3825, 3
  %v3847 = vsel %vm3826, %v3844, %v3846
  %v3875 = vunpack.c.l.b16 %v3757
  %v3876 = vunpack.c.l.b16 %v3758
  %v3877 = vunpack.c.l.b16 %v3759
  %v3878 = vunpack.c.l.b16 %v3760
  %v3879 = vunpack.c.l.b16 %v3761
  %v3880 = vunpack.c.l.b16 %v3762
  %v3881 = vunpack.c.l.b16 %v3763
  %v3882 = vunpack.c.l.b16 %v3764
  %v3883 = vunpack.c.l.b16 %v3765
  %v3884 = vunpack.c.l.b16 %v3766
  %v3885 = vunpack.c.l.b16 %v3767
  %v3886 = vunpack.c.l.b16 %v3768
  %v3887 = vunpack.c.l.b16 %v3769
  %v3888 = vunpack.c.l.b16 %v3770
  %v3889 = vunpack.c.l.b16 %v3771
  %v3890 = vunpack.c.l.b16 %v3772
  %v3891 = vpack.c.b16 %v3876, %v3875
  %v3892 = vpack.c.b16 %v3878, %v3877
  %v3893 = vpack.c.b16 %v3880, %v3879
  %v3894 = vpack.c.b16 %v3882, %v3881
  %v3895 = vpack.c.b16 %v3884, %v3883
  %v3896 = vpack.c.b16 %v3886, %v3885
  %v3897 = vpack.c.b16 %v3888, %v3887
  %v3898 = vpack.c.b16 %v3890, %v3889
  %3907 = vmatprep.subr.bf16.mxu0 0
  %3908 = vmatpush1.bf16.msra.mxu0 %v3891
  %3909 = vmatprep.subr.bf16.mxu0 0
  %3910 = vmatpush1.bf16.msra.mxu0 %v3892
  %3911 = vmatprep.subr.bf16.mxu0 0
  %3912 = vmatpush1.bf16.msra.mxu0 %v3893
  %3913 = vmatprep.subr.bf16.mxu0 0
  %3914 = vmatpush1.bf16.msra.mxu0 %v3894
  %3915 = vmatprep.subr.bf16.mxu0 0
  %3916 = vmatpush1.bf16.msra.mxu0 %v3895
  %3917 = vmatprep.subr.bf16.mxu0 0
  %3918 = vmatpush1.bf16.msra.mxu0 %v3896
  %3919 = vmatprep.subr.bf16.mxu0 0
  %3920 = vmatpush1.bf16.msra.mxu0 %v3897
  %3921 = vmatprep.subr.bf16.mxu0 0
  %3922 = vmatpush1.bf16.msra.mxu0 %v3898
  %3923 = vmatprep.subr.bf16.mxu0 0
  %3924 = vmatpush1.bf16.msra.mxu0 0
  %3925 = vmatprep.subr.bf16.mxu0 0
  %3926 = vmatpush1.bf16.msra.mxu0 0
  %3927 = vmatprep.subr.bf16.mxu0 0
  %3928 = vmatpush1.bf16.msra.mxu0 0
  %3929 = vmatprep.subr.bf16.mxu0 0
  %3930 = vmatpush1.bf16.msra.mxu0 0
  %3931 = vmatprep.subr.bf16.mxu0 0
  %3932 = vmatpush1.bf16.msra.mxu0 0
  %3933 = vmatprep.subr.bf16.mxu0 0
  %3934 = vmatpush1.bf16.msra.mxu0 0
  %3935 = vmatprep.subr.bf16.mxu0 0
  %3936 = vmatpush1.bf16.msra.mxu0 0
  %3937 = vmatprep.subr.bf16.mxu0 0
  %3938 = vmatpush1.bf16.msra.mxu0 0
  %3939 = vmatprep.mubr.bf16.mxu0 0
  %3940 = vmatmul.mubr.bf16.gmra.mrb[0].mxu0 %v3829
  %v3941 = vpop.f32.mrb[0].mxu0
  %v3942 = vadd.f32 0.0, %v3941
  %v3943 = vpop.f32.mrb[0].mxu0
  %v3944 = vpop.f32.mrb[0].mxu0
  %v3945 = vadd.f32 0.0, %v3944
  %v3946 = vpop.f32.mrb[0].mxu0
  %3947 = vmatprep.mubr.bf16.mxu0 0
  %3948 = vmatmul.mubr.bf16.gmra.mrb[0].mxu0 %v3831
  %v3949 = vpop.f32.mrb[0].mxu0
  %v3950 = vadd.f32 0.0, %v3949
  %v3951 = vpop.f32.mrb[0].mxu0
  %v3952 = vpop.f32.mrb[0].mxu0
  %v3953 = vadd.f32 0.0, %v3952
  %v3954 = vpop.f32.mrb[0].mxu0
  %3955 = vmatprep.mubr.bf16.mxu0 0
  %3956 = vmatmul.mubr.bf16.gmra.mrb[0].mxu0 %v3833
  %v3957 = vpop.f32.mrb[0].mxu0
  %v3958 = vadd.f32 0.0, %v3957
  %v3959 = vpop.f32.mrb[0].mxu0
  %v3960 = vpop.f32.mrb[0].mxu0
  %v3961 = vadd.f32 0.0, %v3960
  %v3962 = vpop.f32.mrb[0].mxu0
  %3963 = vmatprep.mubr.bf16.mxu0 0
  %3964 = vmatmul.mubr.bf16.gmra.mrb[0].mxu0 %v3835
  %v3965 = vpop.f32.mrb[0].mxu0
  %v3966 = vadd.f32 0.0, %v3965
  %v3967 = vpop.f32.mrb[0].mxu0
  %v3968 = vpop.f32.mrb[0].mxu0
  %v3969 = vadd.f32 0.0, %v3968
  %v3970 = vpop.f32.mrb[0].mxu0
  %3971 = vmatprep.mubr.bf16.mxu0 0
  %3972 = vmatmul.mubr.bf16.gmra.mrb[0].mxu0 %v3837
  %v3973 = vpop.f32.mrb[0].mxu0
  %v3974 = vadd.f32 0.0, %v3973
  %v3975 = vpop.f32.mrb[0].mxu0
  %v3976 = vpop.f32.mrb[0].mxu0
  %v3977 = vadd.f32 0.0, %v3976
  %v3978 = vpop.f32.mrb[0].mxu0
  %3979 = vmatprep.mubr.bf16.mxu0 0
  %3980 = vmatmul.mubr.bf16.gmra.mrb[0].mxu0 %v3839
  %v3981 = vpop.f32.mrb[0].mxu0
  %v3982 = vadd.f32 0.0, %v3981
  %v3983 = vpop.f32.mrb[0].mxu0
  %v3984 = vpop.f32.mrb[0].mxu0
  %v3985 = vadd.f32 0.0, %v3984
  %v3986 = vpop.f32.mrb[0].mxu0
  %3987 = vmatprep.mubr.bf16.mxu0 0
  %3988 = vmatmul.mubr.bf16.gmra.mrb[0].mxu0 %v3841
  %v3989 = vpop.f32.mrb[0].mxu0
  %v3990 = vadd.f32 0.0, %v3989
  %v3991 = vpop.f32.mrb[0].mxu0
  %v3992 = vpop.f32.mrb[0].mxu0
  %v3993 = vadd.f32 0.0, %v3992
  %v3994 = vpop.f32.mrb[0].mxu0
  %3995 = vmatprep.mubr.bf16.mxu0 0
  %3996 = vmatmul.mubr.bf16.gmra.mrb[0].mxu0 %v3843
  %v3997 = vpop.f32.mrb[0].mxu0
  %v3998 = vadd.f32 0.0, %v3997
  %v3999 = vpop.f32.mrb[0].mxu0
  %v4000 = vpop.f32.mrb[0].mxu0
  %v4001 = vadd.f32 0.0, %v4000
  %v4002 = vpop.f32.mrb[0].mxu0
  %4003 = vmatprep.mubr.bf16.mxu0 0
  %4004 = vmatmul.mubr.bf16.gmra.mrb[0].mxu0 %v3845
  %v4005 = vpop.f32.mrb[0].mxu0
  %v4006 = vadd.f32 0.0, %v4005
  %v4007 = vpop.f32.mrb[0].mxu0
  %v4008 = vpop.f32.mrb[0].mxu0
  %v4009 = vadd.f32 0.0, %v4008
  %v4010 = vpop.f32.mrb[0].mxu0
  %4011 = vmatprep.mubr.bf16.mxu0 0
  %4012 = vmatmul.mubr.bf16.gmra.mrb[0].mxu0 %v3847
  %v4013 = vpop.f32.mrb[0].mxu0
  %v4014 = vadd.f32 0.0, %v4013
  %v4015 = vpop.f32.mrb[0].mxu0
  %v4016 = vpop.f32.mrb[0].mxu0
  %v4017 = vadd.f32 0.0, %v4016
  %v4018 = vpop.f32.mrb[0].mxu0
  %4019 = vmatprep.mubr.bf16.mxu0 0
  %4020 = vmatmul.mubr.bf16.gmra.mrb[0].mxu0 %v3846
  %v4021 = vpop.f32.mrb[0].mxu0
  %v4022 = vadd.f32 0.0, %v4021
  %v4023 = vpop.f32.mrb[0].mxu0
  %v4024 = vpop.f32.mrb[0].mxu0
  %v4025 = vpop.f32.mrb[0].mxu0
  %4026 = vdwg.mxu0
  %v4027 = vadd.f32 %v3715, %v3942
  %v4028 = vadd.f32 %v3716, %v3945
  %v4029 = vadd.f32 %v3717, %v3950
  %v4030 = vadd.f32 %v3718, %v3953
  %v4031 = vadd.f32 %v3719, %v3958
  %v4032 = vadd.f32 %v3720, %v3961
  %v4033 = vadd.f32 %v3721, %v3966
  %v4034 = vadd.f32 %v3722, %v3969
  %v4035 = vadd.f32 %v3723, %v3974
  %v4036 = vadd.f32 %v3724, %v3977
  %v4037 = vadd.f32 %v3725, %v3982
  %v4038 = vadd.f32 %v3726, %v3985
  %v4039 = vadd.f32 %v3727, %v3990
  %v4040 = vadd.f32 %v3728, %v3993
  %v4041 = vadd.f32 %v3729, %v3998
  %v4042 = vadd.f32 %v3730, %v4001
  %v4043 = vadd.f32 %v3731, %v4006
  %v4044 = vadd.f32 %v3732, %v4009
  %v4045 = vadd.f32 %v3733, %v4014
  %v4046 = vadd.f32 %v3734, %v4017
  %v4047 = vadd.f32 %v3735, %v4022
  %v4048 = vld [vmem:[#allocation2 + $0xf0] sm:$0xf]
  %v4049 = vld [vmem:[%s4 + $0x140] sm:$0xf]
  %v4050 = vld [vmem:[%s4 + $0x144] sm:$0xf]
  %v4051 = vld [vmem:[%s4 + $0x148] sm:$0xf]
  %v4052 = vld [vmem:[%s4 + $0x14c] sm:$0xf]
  %v4053 = vld [vmem:[%s4 + $0x150] sm:$0xf]
  %v4054 = vld [vmem:[%s4 + $0x154] sm:$0xf]
  %v4055 = vld [vmem:[%s4 + $0x158] sm:$0xf]
  %v4056 = vld [vmem:[%s4 + $0x15c] sm:$0xf]
  %v4057 = vld [vmem:[%s4 + $0x160] sm:$0xf]
  %v4058 = vld [vmem:[%s4 + $0x164] sm:$0xf]
  %v4059 = vld [vmem:[%s4 + $0x168] sm:$0xf]
  %v4060 = vld [vmem:[%s4 + $0x16c] sm:$0xf]
  %v4061 = vld [vmem:[%s4 + $0x170] sm:$0xf]
  %v4062 = vld [vmem:[%s4 + $0x174] sm:$0xf]
  %v4063 = vld [vmem:[%s4 + $0x178] sm:$0xf]
  %v4064 = vld [vmem:[%s4 + $0x17c] sm:$0xf]
  %v4066 = vunpack.c.l.b16 %v4048
  %v4067 = vpack.c.b16 %v4066, %v4066
  %vm4068 = vsmask.f32 5376
  %v4070 = vshrl.u32 %v3503, 16
  %v4072 = vrot.slane %v4070, 2
  %v4073 = vshll.u32 %v3503, 16
  %v4075 = vrot.slane %v4073, 3
  %v4076 = vor.u32 %v4072, %v4075
  %v4078 = vshrl.u32 %v3504, 16
  %v4080 = vrot.slane %v4078, 2
  %v4081 = vshll.u32 %v3504, 16
  %v4083 = vrot.slane %v4081, 3
  %v4084 = vor.u32 %v4080, %v4083
  %v4085 = vsel %vm4068, %v4076, %v4084
  %v4087 = vshrl.u32 %v3505, 16
  %v4089 = vrot.slane %v4087, 2
  %v4090 = vshll.u32 %v3505, 16
  %v4092 = vrot.slane %v4090, 3
  %v4093 = vor.u32 %v4089, %v4092
  %v4094 = vsel %vm4068, %v4084, %v4093
  %v4096 = vshrl.u32 %v3506, 16
  %v4098 = vrot.slane %v4096, 2
  %v4099 = vshll.u32 %v3506, 16
  %v4101 = vrot.slane %v4099, 3
  %v4102 = vor.u32 %v4098, %v4101
  %v4103 = vsel %vm4068, %v4093, %v4102
  %v4105 = vshrl.u32 %v3507, 16
  %v4107 = vrot.slane %v4105, 2
  %v4108 = vshll.u32 %v3507, 16
  %v4110 = vrot.slane %v4108, 3
  %v4111 = vor.u32 %v4107, %v4110
  %v4112 = vsel %vm4068, %v4102, %v4111
  %v4114 = vshrl.u32 %v3508, 16
  %v4116 = vrot.slane %v4114, 2
  %v4117 = vshll.u32 %v3508, 16
  %v4119 = vrot.slane %v4117, 3
  %v4120 = vor.u32 %v4116, %v4119
  %v4121 = vsel %vm4068, %v4111, %v4120
  %v4123 = vshrl.u32 %v3509, 16
  %v4125 = vrot.slane %v4123, 2
  %v4126 = vshll.u32 %v3509, 16
  %v4128 = vrot.slane %v4126, 3
  %v4129 = vor.u32 %v4125, %v4128
  %v4130 = vsel %vm4068, %v4120, %v4129
  %v4132 = vshrl.u32 %v3510, 16
  %v4134 = vrot.slane %v4132, 2
  %v4135 = vshll.u32 %v3510, 16
  %v4137 = vrot.slane %v4135, 3
  %v4138 = vor.u32 %v4134, %v4137
  %v4139 = vsel %vm4068, %v4129, %v4138
  %v4141 = vshrl.u32 %v3511, 16
  %v4143 = vrot.slane %v4141, 2
  %v4144 = vshll.u32 %v3511, 16
  %v4146 = vrot.slane %v4144, 3
  %v4147 = vor.u32 %v4143, %v4146
  %v4148 = vsel %vm4068, %v4138, %v4147
  %v4150 = vshrl.u32 %v3512, 16
  %v4152 = vrot.slane %v4150, 2
  %v4153 = vshll.u32 %v3512, 16
  %v4155 = vrot.slane %v4153, 3
  %v4156 = vor.u32 %v4152, %v4155
  %v4157 = vsel %vm4068, %v4147, %v4156
  %v4159 = vshrl.u32 %v4067, 16
  %v4161 = vrot.slane %v4159, 2
  %v4162 = vshll.u32 %v4067, 16
  %v4164 = vrot.slane %v4162, 3
  %v4165 = vor.u32 %v4161, %v4164
  %v4166 = vsel %vm4068, %v4156, %v4165
  %v4194 = vunpack.c.l.b16 %v4049
  %v4195 = vunpack.c.l.b16 %v4050
  %v4196 = vunpack.c.l.b16 %v4051
  %v4197 = vunpack.c.l.b16 %v4052
  %v4198 = vunpack.c.l.b16 %v4053
  %v4199 = vunpack.c.l.b16 %v4054
  %v4200 = vunpack.c.l.b16 %v4055
  %v4201 = vunpack.c.l.b16 %v4056
  %v4202 = vunpack.c.l.b16 %v4057
  %v4203 = vunpack.c.l.b16 %v4058
  %v4204 = vunpack.c.l.b16 %v4059
  %v4205 = vunpack.c.l.b16 %v4060
  %v4206 = vunpack.c.l.b16 %v4061
  %v4207 = vunpack.c.l.b16 %v4062
  %v4208 = vunpack.c.l.b16 %v4063
  %v4209 = vunpack.c.l.b16 %v4064
  %v4210 = vpack.c.b16 %v4195, %v4194
  %v4211 = vpack.c.b16 %v4197, %v4196
  %v4212 = vpack.c.b16 %v4199, %v4198
  %v4213 = vpack.c.b16 %v4201, %v4200
  %v4214 = vpack.c.b16 %v4203, %v4202
  %v4215 = vpack.c.b16 %v4205, %v4204
  %v4216 = vpack.c.b16 %v4207, %v4206
  %v4217 = vpack.c.b16 %v4209, %v4208
  %4226 = vmatprep.subr.bf16.mxu0 0
  %4227 = vmatpush1.bf16.msra.mxu0 %v4210
  %4228 = vmatprep.subr.bf16.mxu0 0
  %4229 = vmatpush1.bf16.msra.mxu0 %v4211
  %4230 = vmatprep.subr.bf16.mxu0 0
  %4231 = vmatpush1.bf16.msra.mxu0 %v4212
  %4232 = vmatprep.subr.bf16.mxu0 0
  %4233 = vmatpush1.bf16.msra.mxu0 %v4213
  %4234 = vmatprep.subr.bf16.mxu0 0
  %4235 = vmatpush1.bf16.msra.mxu0 %v4214
  %4236 = vmatprep.subr.bf16.mxu0 0
  %4237 = vmatpush1.bf16.msra.mxu0 %v4215
  %4238 = vmatprep.subr.bf16.mxu0 0
  %4239 = vmatpush1.bf16.msra.mxu0 %v4216
  %4240 = vmatprep.subr.bf16.mxu0 0
  %4241 = vmatpush1.bf16.msra.mxu0 %v4217
  %4242 = vmatprep.subr.bf16.mxu0 0
  %4243 = vmatpush1.bf16.msra.mxu0 0
  %4244 = vmatprep.subr.bf16.mxu0 0
  %4245 = vmatpush1.bf16.msra.mxu0 0
  %4246 = vmatprep.subr.bf16.mxu0 0
  %4247 = vmatpush1.bf16.msra.mxu0 0
  %4248 = vmatprep.subr.bf16.mxu0 0
  %4249 = vmatpush1.bf16.msra.mxu0 0
  %4250 = vmatprep.subr.bf16.mxu0 0
  %4251 = vmatpush1.bf16.msra.mxu0 0
  %4252 = vmatprep.subr.bf16.mxu0 0
  %4253 = vmatpush1.bf16.msra.mxu0 0
  %4254 = vmatprep.subr.bf16.mxu0 0
  %4255 = vmatpush1.bf16.msra.mxu0 0
  %4256 = vmatprep.subr.bf16.mxu0 0
  %4257 = vmatpush1.bf16.msra.mxu0 0
  %4258 = vmatprep.mubr.bf16.mxu0 0
  %4259 = vmatmul.mubr.bf16.gmra.mrb[0].mxu0 %v4085
  %v4260 = vpop.f32.mrb[0].mxu0
  %v4261 = vadd.f32 0.0, %v4260
  %v4262 = vpop.f32.mrb[0].mxu0
  %v4263 = vpop.f32.mrb[0].mxu0
  %v4264 = vadd.f32 0.0, %v4263
  %v4265 = vpop.f32.mrb[0].mxu0
  %4266 = vmatprep.mubr.bf16.mxu0 0
  %4267 = vmatmul.mubr.bf16.gmra.mrb[0].mxu0 %v4094
  %v4268 = vpop.f32.mrb[0].mxu0
  %v4269 = vadd.f32 0.0, %v4268
  %v4270 = vpop.f32.mrb[0].mxu0
  %v4271 = vpop.f32.mrb[0].mxu0
  %v4272 = vadd.f32 0.0, %v4271
  %v4273 = vpop.f32.mrb[0].mxu0
  %4274 = vmatprep.mubr.bf16.mxu0 0
  %4275 = vmatmul.mubr.bf16.gmra.mrb[0].mxu0 %v4103
  %v4276 = vpop.f32.mrb[0].mxu0
  %v4277 = vadd.f32 0.0, %v4276
  %v4278 = vpop.f32.mrb[0].mxu0
  %v4279 = vpop.f32.mrb[0].mxu0
  %v4280 = vadd.f32 0.0, %v4279
  %v4281 = vpop.f32.mrb[0].mxu0
  %4282 = vmatprep.mubr.bf16.mxu0 0
  %4283 = vmatmul.mubr.bf16.gmra.mrb[0].mxu0 %v4112
  %v4284 = vpop.f32.mrb[0].mxu0
  %v4285 = vadd.f32 0.0, %v4284
  %v4286 = vpop.f32.mrb[0].mxu0
  %v4287 = vpop.f32.mrb[0].mxu0
  %v4288 = vadd.f32 0.0, %v4287
  %v4289 = vpop.f32.mrb[0].mxu0
  %4290 = vmatprep.mubr.bf16.mxu0 0
  %4291 = vmatmul.mubr.bf16.gmra.mrb[0].mxu0 %v4121
  %v4292 = vpop.f32.mrb[0].mxu0
  %v4293 = vadd.f32 0.0, %v4292
  %v4294 = vpop.f32.mrb[0].mxu0
  %v4295 = vpop.f32.mrb[0].mxu0
  %v4296 = vadd.f32 0.0, %v4295
  %v4297 = vpop.f32.mrb[0].mxu0
  %4298 = vmatprep.mubr.bf16.mxu0 0
  %4299 = vmatmul.mubr.bf16.gmra.mrb[0].mxu0 %v4130
  %v4300 = vpop.f32.mrb[0].mxu0
  %v4301 = vadd.f32 0.0, %v4300
  %v4302 = vpop.f32.mrb[0].mxu0
  %v4303 = vpop.f32.mrb[0].mxu0
  %v4304 = vadd.f32 0.0, %v4303
  %v4305 = vpop.f32.mrb[0].mxu0
  %4306 = vmatprep.mubr.bf16.mxu0 0
  %4307 = vmatmul.mubr.bf16.gmra.mrb[0].mxu0 %v4139
  %v4308 = vpop.f32.mrb[0].mxu0
  %v4309 = vadd.f32 0.0, %v4308
  %v4310 = vpop.f32.mrb[0].mxu0
  %v4311 = vpop.f32.mrb[0].mxu0
  %v4312 = vadd.f32 0.0, %v4311
  %v4313 = vpop.f32.mrb[0].mxu0
  %4314 = vmatprep.mubr.bf16.mxu0 0
  %4315 = vmatmul.mubr.bf16.gmra.mrb[0].mxu0 %v4148
  %v4316 = vpop.f32.mrb[0].mxu0
  %v4317 = vadd.f32 0.0, %v4316
  %v4318 = vpop.f32.mrb[0].mxu0
  %v4319 = vpop.f32.mrb[0].mxu0
  %v4320 = vadd.f32 0.0, %v4319
  %v4321 = vpop.f32.mrb[0].mxu0
  %4322 = vmatprep.mubr.bf16.mxu0 0
  %4323 = vmatmul.mubr.bf16.gmra.mrb[0].mxu0 %v4157
  %v4324 = vpop.f32.mrb[0].mxu0
  %v4325 = vadd.f32 0.0, %v4324
  %v4326 = vpop.f32.mrb[0].mxu0
  %v4327 = vpop.f32.mrb[0].mxu0
  %v4328 = vadd.f32 0.0, %v4327
  %v4329 = vpop.f32.mrb[0].mxu0
  %4330 = vmatprep.mubr.bf16.mxu0 0
  %4331 = vmatmul.mubr.bf16.gmra.mrb[0].mxu0 %v4166
  %v4332 = vpop.f32.mrb[0].mxu0
  %v4333 = vadd.f32 0.0, %v4332
  %v4334 = vpop.f32.mrb[0].mxu0
  %v4335 = vpop.f32.mrb[0].mxu0
  %v4336 = vadd.f32 0.0, %v4335
  %v4337 = vpop.f32.mrb[0].mxu0
  %4338 = vmatprep.mubr.bf16.mxu0 0
  %4339 = vmatmul.mubr.bf16.gmra.mrb[0].mxu0 %v4165
  %v4340 = vpop.f32.mrb[0].mxu0
  %v4341 = vadd.f32 0.0, %v4340
  %v4342 = vpop.f32.mrb[0].mxu0
  %v4343 = vpop.f32.mrb[0].mxu0
  %v4344 = vpop.f32.mrb[0].mxu0
  %4345 = vdwg.mxu0
  %v4346 = vadd.f32 %v4027, %v4261
  %v4347 = vadd.f32 %v4028, %v4264
  %v4348 = vadd.f32 %v4029, %v4269
  %v4349 = vadd.f32 %v4030, %v4272
  %v4350 = vadd.f32 %v4031, %v4277
  %v4351 = vadd.f32 %v4032, %v4280
  %v4352 = vadd.f32 %v4033, %v4285
  %v4353 = vadd.f32 %v4034, %v4288
  %v4354 = vadd.f32 %v4035, %v4293
  %v4355 = vadd.f32 %v4036, %v4296
  %v4356 = vadd.f32 %v4037, %v4301
  %v4357 = vadd.f32 %v4038, %v4304
  %v4358 = vadd.f32 %v4039, %v4309
  %v4359 = vadd.f32 %v4040, %v4312
  %v4360 = vadd.f32 %v4041, %v4317
  %v4361 = vadd.f32 %v4042, %v4320
  %v4362 = vadd.f32 %v4043, %v4325
  %v4363 = vadd.f32 %v4044, %v4328
  %v4364 = vadd.f32 %v4045, %v4333
  %v4365 = vadd.f32 %v4046, %v4336
  %v4366 = vadd.f32 %v4047, %v4341
  %v4367 = vld [vmem:[#allocation2 + $0x4] sm:$0xf]
  %v4368 = vld [vmem:[#allocation2 + $0x8] sm:$0xf]
  %v4369 = vld [vmem:[#allocation2 + $0xc] sm:$0xf]
  %v4370 = vld [vmem:[#allocation2 + $0x10] sm:$0xf]
  %v4371 = vld [vmem:[#allocation2 + $0x14] sm:$0xf]
  %v4372 = vld [vmem:[#allocation2 + $0x18] sm:$0xf]
  %v4373 = vld [vmem:[#allocation2 + $0x1c] sm:$0xf]
  %v4374 = vld [vmem:[#allocation2 + $0x20] sm:$0xf]
  %v4375 = vld [vmem:[#allocation2 + $0x24] sm:$0xf]
  %v4376 = vld [vmem:[#allocation2 + $0x28] sm:$0xf]
  %v4377 = vld [vmem:[#allocation2 + $0x2c] sm:$0xf]
  %v4378 = vld [vmem:[#allocation2 + $0x30] sm:$0xf]
  %v4379 = vld [vmem:[#allocation2 + $0x34] sm:$0xf]
  %v4380 = vld [vmem:[#allocation2 + $0x38] sm:$0xf]
  %v4381 = vld [vmem:[#allocation2 + $0x3c] sm:$0xf]
  %v4382 = vld [vmem:[#allocation2 + $0x40] sm:$0xf]
  %v4383 = vld [vmem:[#allocation2 + $0x44] sm:$0xf]
  %v4384 = vld [vmem:[#allocation2 + $0x48] sm:$0xf]
  %v4385 = vld [vmem:[#allocation2 + $0x4c] sm:$0xf]
  %v4386 = vld [vmem:[#allocation2 + $0x50] sm:$0xf]
  %v4387 = vld [vmem:[#allocation2 + $0x54] sm:$0x3]
  %v4388 = vld [vmem:[%s4 + $0x180] sm:$0xf]
  %v4389 = vld [vmem:[%s4 + $0x184] sm:$0xf]
  %v4390 = vld [vmem:[%s4 + $0x188] sm:$0xf]
  %v4391 = vld [vmem:[%s4 + $0x18c] sm:$0xf]
  %v4392 = vld [vmem:[%s4 + $0x190] sm:$0xf]
  %v4393 = vld [vmem:[%s4 + $0x194] sm:$0xf]
  %v4394 = vld [vmem:[%s4 + $0x198] sm:$0xf]
  %v4395 = vld [vmem:[%s4 + $0x19c] sm:$0xf]
  %v4396 = vld [vmem:[%s4 + $0x1a0] sm:$0xf]
  %v4397 = vld [vmem:[%s4 + $0x1a4] sm:$0xf]
  %v4398 = vld [vmem:[%s4 + $0x1a8] sm:$0xf]
  %v4399 = vld [vmem:[%s4 + $0x1ac] sm:$0xf]
  %v4400 = vld [vmem:[%s4 + $0x1b0] sm:$0xf]
  %v4401 = vld [vmem:[%s4 + $0x1b4] sm:$0xf]
  %v4402 = vld [vmem:[%s4 + $0x1b8] sm:$0xf]
  %v4403 = vld [vmem:[%s4 + $0x1bc] sm:$0xf]
  %v4425 = vunpack.c.l.b16 %v4367
  %v4426 = vunpack.c.l.b16 %v4368
  %v4427 = vunpack.c.l.b16 %v4369
  %v4428 = vunpack.c.l.b16 %v4370
  %v4429 = vunpack.c.l.b16 %v4371
  %v4430 = vunpack.c.l.b16 %v4372
  %v4431 = vunpack.c.l.b16 %v4373
  %v4432 = vunpack.c.l.b16 %v4374
  %v4433 = vunpack.c.l.b16 %v4375
  %v4434 = vunpack.c.l.b16 %v4376
  %v4435 = vunpack.c.l.b16 %v4377
  %v4436 = vunpack.c.l.b16 %v4378
  %v4437 = vunpack.c.l.b16 %v4379
  %v4438 = vunpack.c.l.b16 %v4380
  %v4439 = vunpack.c.l.b16 %v4381
  %v4440 = vunpack.c.l.b16 %v4382
  %v4441 = vunpack.c.l.b16 %v4383
  %v4442 = vunpack.c.l.b16 %v4384
  %v4443 = vunpack.c.l.b16 %v4385
  %v4444 = vunpack.c.l.b16 %v4386
  %v4445 = vunpack.c.l.b16 %v4387
  %v4446 = vpack.c.b16 %v4426, %v4425
  %v4447 = vpack.c.b16 %v4428, %v4427
  %v4448 = vpack.c.b16 %v4430, %v4429
  %v4449 = vpack.c.b16 %v4432, %v4431
  %v4450 = vpack.c.b16 %v4434, %v4433
  %v4451 = vpack.c.b16 %v4436, %v4435
  %v4452 = vpack.c.b16 %v4438, %v4437
  %v4453 = vpack.c.b16 %v4440, %v4439
  %v4454 = vpack.c.b16 %v4442, %v4441
  %v4455 = vpack.c.b16 %v4444, %v4443
  %v4456 = vpack.c.b16 %v4445, %v4445
  %v4458 = vshrl.u32 %v4446, 16
  %v4460 = vshll.u32 %v4446, 16
  %v4462 = vrot.slane %v4460, 1
  %v4463 = vor.u32 %v4458, %v4462
  %v4465 = vshll.u32 %v4447, 16
  %v4467 = vrot.slane %v4465, 1
  %v4468 = vsel %vm3136, %v4463, %v4467
  %v4469 = vshrl.u32 %v4447, 16
  %v4471 = vor.u32 %v4469, %v4467
  %v4473 = vshll.u32 %v4448, 16
  %v4475 = vrot.slane %v4473, 1
  %v4476 = vsel %vm3136, %v4471, %v4475
  %v4477 = vshrl.u32 %v4448, 16
  %v4479 = vor.u32 %v4477, %v4475
  %v4481 = vshll.u32 %v4449, 16
  %v4483 = vrot.slane %v4481, 1
  %v4484 = vsel %vm3136, %v4479, %v4483
  %v4485 = vshrl.u32 %v4449, 16
  %v4487 = vor.u32 %v4485, %v4483
  %v4489 = vshll.u32 %v4450, 16
  %v4491 = vrot.slane %v4489, 1
  %v4492 = vsel %vm3136, %v4487, %v4491
  %v4493 = vshrl.u32 %v4450, 16
  %v4495 = vor.u32 %v4493, %v4491
  %v4497 = vshll.u32 %v4451, 16
  %v4499 = vrot.slane %v4497, 1
  %v4500 = vsel %vm3136, %v4495, %v4499
  %v4501 = vshrl.u32 %v4451, 16
  %v4503 = vor.u32 %v4501, %v4499
  %v4505 = vshll.u32 %v4452, 16
  %v4507 = vrot.slane %v4505, 1
  %v4508 = vsel %vm3136, %v4503, %v4507
  %v4509 = vshrl.u32 %v4452, 16
  %v4511 = vor.u32 %v4509, %v4507
  %v4513 = vshll.u32 %v4453, 16
  %v4515 = vrot.slane %v4513, 1
  %v4516 = vsel %vm3136, %v4511, %v4515
  %v4517 = vshrl.u32 %v4453, 16
  %v4519 = vor.u32 %v4517, %v4515
  %v4521 = vshll.u32 %v4454, 16
  %v4523 = vrot.slane %v4521, 1
  %v4524 = vsel %vm3136, %v4519, %v4523
  %v4525 = vshrl.u32 %v4454, 16
  %v4527 = vor.u32 %v4525, %v4523
  %v4529 = vshll.u32 %v4455, 16
  %v4531 = vrot.slane %v4529, 1
  %v4532 = vsel %vm3136, %v4527, %v4531
  %v4533 = vshrl.u32 %v4455, 16
  %v4535 = vor.u32 %v4533, %v4531
  %v4537 = vshll.u32 %v4456, 16
  %v4539 = vrot.slane %v4537, 1
  %v4540 = vsel %vm3136, %v4535, %v4539
  %v4541 = vshrl.u32 %v4456, 16
  %v4543 = vor.u32 %v4541, %v4539
  %v4571 = vunpack.c.l.b16 %v4388
  %v4572 = vunpack.c.l.b16 %v4389
  %v4573 = vunpack.c.l.b16 %v4390
  %v4574 = vunpack.c.l.b16 %v4391
  %v4575 = vunpack.c.l.b16 %v4392
  %v4576 = vunpack.c.l.b16 %v4393
  %v4577 = vunpack.c.l.b16 %v4394
  %v4578 = vunpack.c.l.b16 %v4395
  %v4579 = vunpack.c.l.b16 %v4396
  %v4580 = vunpack.c.l.b16 %v4397
  %v4581 = vunpack.c.l.b16 %v4398
  %v4582 = vunpack.c.l.b16 %v4399
  %v4583 = vunpack.c.l.b16 %v4400
  %v4584 = vunpack.c.l.b16 %v4401
  %v4585 = vunpack.c.l.b16 %v4402
  %v4586 = vunpack.c.l.b16 %v4403
  %v4587 = vpack.c.b16 %v4572, %v4571
  %v4588 = vpack.c.b16 %v4574, %v4573
  %v4589 = vpack.c.b16 %v4576, %v4575
  %v4590 = vpack.c.b16 %v4578, %v4577
  %v4591 = vpack.c.b16 %v4580, %v4579
  %v4592 = vpack.c.b16 %v4582, %v4581
  %v4593 = vpack.c.b16 %v4584, %v4583
  %v4594 = vpack.c.b16 %v4586, %v4585
  %4603 = vmatprep.subr.bf16.mxu0 0
  %4604 = vmatpush1.bf16.msra.mxu0 %v4587
  %4605 = vmatprep.subr.bf16.mxu0 0
  %4606 = vmatpush1.bf16.msra.mxu0 %v4588
  %4607 = vmatprep.subr.bf16.mxu0 0
  %4608 = vmatpush1.bf16.msra.mxu0 %v4589
  %4609 = vmatprep.subr.bf16.mxu0 0
  %4610 = vmatpush1.bf16.msra.mxu0 %v4590
  %4611 = vmatprep.subr.bf16.mxu0 0
  %4612 = vmatpush1.bf16.msra.mxu0 %v4591
  %4613 = vmatprep.subr.bf16.mxu0 0
  %4614 = vmatpush1.bf16.msra.mxu0 %v4592
  %4615 = vmatprep.subr.bf16.mxu0 0
  %4616 = vmatpush1.bf16.msra.mxu0 %v4593
  %4617 = vmatprep.subr.bf16.mxu0 0
  %4618 = vmatpush1.bf16.msra.mxu0 %v4594
  %4619 = vmatprep.subr.bf16.mxu0 0
  %4620 = vmatpush1.bf16.msra.mxu0 0
  %4621 = vmatprep.subr.bf16.mxu0 0
  %4622 = vmatpush1.bf16.msra.mxu0 0
  %4623 = vmatprep.subr.bf16.mxu0 0
  %4624 = vmatpush1.bf16.msra.mxu0 0
  %4625 = vmatprep.subr.bf16.mxu0 0
  %4626 = vmatpush1.bf16.msra.mxu0 0
  %4627 = vmatprep.subr.bf16.mxu0 0
  %4628 = vmatpush1.bf16.msra.mxu0 0
  %4629 = vmatprep.subr.bf16.mxu0 0
  %4630 = vmatpush1.bf16.msra.mxu0 0
  %4631 = vmatprep.subr.bf16.mxu0 0
  %4632 = vmatpush1.bf16.msra.mxu0 0
  %4633 = vmatprep.subr.bf16.mxu0 0
  %4634 = vmatpush1.bf16.msra.mxu0 0
  %4635 = vmatprep.mubr.bf16.mxu0 0
  %4636 = vmatmul.mubr.bf16.gmra.mrb[0].mxu0 %v4468
  %v4637 = vpop.f32.mrb[0].mxu0
  %v4638 = vadd.f32 0.0, %v4637
  %v4639 = vpop.f32.mrb[0].mxu0
  %v4640 = vpop.f32.mrb[0].mxu0
  %v4641 = vadd.f32 0.0, %v4640
  %v4642 = vpop.f32.mrb[0].mxu0
  %4643 = vmatprep.mubr.bf16.mxu0 0
  %4644 = vmatmul.mubr.bf16.gmra.mrb[0].mxu0 %v4476
  %v4645 = vpop.f32.mrb[0].mxu0
  %v4646 = vadd.f32 0.0, %v4645
  %v4647 = vpop.f32.mrb[0].mxu0
  %v4648 = vpop.f32.mrb[0].mxu0
  %v4649 = vadd.f32 0.0, %v4648
  %v4650 = vpop.f32.mrb[0].mxu0
  %4651 = vmatprep.mubr.bf16.mxu0 0
  %4652 = vmatmul.mubr.bf16.gmra.mrb[0].mxu0 %v4484
  %v4653 = vpop.f32.mrb[0].mxu0
  %v4654 = vadd.f32 0.0, %v4653
  %v4655 = vpop.f32.mrb[0].mxu0
  %v4656 = vpop.f32.mrb[0].mxu0
  %v4657 = vadd.f32 0.0, %v4656
  %v4658 = vpop.f32.mrb[0].mxu0
  %4659 = vmatprep.mubr.bf16.mxu0 0
  %4660 = vmatmul.mubr.bf16.gmra.mrb[0].mxu0 %v4492
  %v4661 = vpop.f32.mrb[0].mxu0
  %v4662 = vadd.f32 0.0, %v4661
  %v4663 = vpop.f32.mrb[0].mxu0
  %v4664 = vpop.f32.mrb[0].mxu0
  %v4665 = vadd.f32 0.0, %v4664
  %v4666 = vpop.f32.mrb[0].mxu0
  %4667 = vmatprep.mubr.bf16.mxu0 0
  %4668 = vmatmul.mubr.bf16.gmra.mrb[0].mxu0 %v4500
  %v4669 = vpop.f32.mrb[0].mxu0
  %v4670 = vadd.f32 0.0, %v4669
  %v4671 = vpop.f32.mrb[0].mxu0
  %v4672 = vpop.f32.mrb[0].mxu0
  %v4673 = vadd.f32 0.0, %v4672
  %v4674 = vpop.f32.mrb[0].mxu0
  %4675 = vmatprep.mubr.bf16.mxu0 0
  %4676 = vmatmul.mubr.bf16.gmra.mrb[0].mxu0 %v4508
  %v4677 = vpop.f32.mrb[0].mxu0
  %v4678 = vadd.f32 0.0, %v4677
  %v4679 = vpop.f32.mrb[0].mxu0
  %v4680 = vpop.f32.mrb[0].mxu0
  %v4681 = vadd.f32 0.0, %v4680
  %v4682 = vpop.f32.mrb[0].mxu0
  %4683 = vmatprep.mubr.bf16.mxu0 0
  %4684 = vmatmul.mubr.bf16.gmra.mrb[0].mxu0 %v4516
  %v4685 = vpop.f32.mrb[0].mxu0
  %v4686 = vadd.f32 0.0, %v4685
  %v4687 = vpop.f32.mrb[0].mxu0
  %v4688 = vpop.f32.mrb[0].mxu0
  %v4689 = vadd.f32 0.0, %v4688
  %v4690 = vpop.f32.mrb[0].mxu0
  %4691 = vmatprep.mubr.bf16.mxu0 0
  %4692 = vmatmul.mubr.bf16.gmra.mrb[0].mxu0 %v4524
  %v4693 = vpop.f32.mrb[0].mxu0
  %v4694 = vadd.f32 0.0, %v4693
  %v4695 = vpop.f32.mrb[0].mxu0
  %v4696 = vpop.f32.mrb[0].mxu0
  %v4697 = vadd.f32 0.0, %v4696
  %v4698 = vpop.f32.mrb[0].mxu0
  %4699 = vmatprep.mubr.bf16.mxu0 0
  %4700 = vmatmul.mubr.bf16.gmra.mrb[0].mxu0 %v4532
  %v4701 = vpop.f32.mrb[0].mxu0
  %v4702 = vadd.f32 0.0, %v4701
  %v4703 = vpop.f32.mrb[0].mxu0
  %v4704 = vpop.f32.mrb[0].mxu0
  %v4705 = vadd.f32 0.0, %v4704
  %v4706 = vpop.f32.mrb[0].mxu0
  %4707 = vmatprep.mubr.bf16.mxu0 0
  %4708 = vmatmul.mubr.bf16.gmra.mrb[0].mxu0 %v4540
  %v4709 = vpop.f32.mrb[0].mxu0
  %v4710 = vadd.f32 0.0, %v4709
  %v4711 = vpop.f32.mrb[0].mxu0
  %v4712 = vpop.f32.mrb[0].mxu0
  %v4713 = vadd.f32 0.0, %v4712
  %v4714 = vpop.f32.mrb[0].mxu0
  %4715 = vmatprep.mubr.bf16.mxu0 0
  %4716 = vmatmul.mubr.bf16.gmra.mrb[0].mxu0 %v4543
  %v4717 = vpop.f32.mrb[0].mxu0
  %v4718 = vadd.f32 0.0, %v4717
  %v4719 = vpop.f32.mrb[0].mxu0
  %v4720 = vpop.f32.mrb[0].mxu0
  %v4721 = vpop.f32.mrb[0].mxu0
  %4722 = vdwg.mxu0
  %v4723 = vadd.f32 %v4346, %v4638
  %v4724 = vadd.f32 %v4347, %v4641
  %v4725 = vadd.f32 %v4348, %v4646
  %v4726 = vadd.f32 %v4349, %v4649
  %v4727 = vadd.f32 %v4350, %v4654
  %v4728 = vadd.f32 %v4351, %v4657
  %v4729 = vadd.f32 %v4352, %v4662
  %v4730 = vadd.f32 %v4353, %v4665
  %v4731 = vadd.f32 %v4354, %v4670
  %v4732 = vadd.f32 %v4355, %v4673
  %v4733 = vadd.f32 %v4356, %v4678
  %v4734 = vadd.f32 %v4357, %v4681
  %v4735 = vadd.f32 %v4358, %v4686
  %v4736 = vadd.f32 %v4359, %v4689
  %v4737 = vadd.f32 %v4360, %v4694
  %v4738 = vadd.f32 %v4361, %v4697
  %v4739 = vadd.f32 %v4362, %v4702
  %v4740 = vadd.f32 %v4363, %v4705
  %v4741 = vadd.f32 %v4364, %v4710
  %v4742 = vadd.f32 %v4365, %v4713
  %v4743 = vadd.f32 %v4366, %v4718
  %v4744 = vld [vmem:[#allocation2 + $0x54] sm:$0xe]
  %v4745 = vld [vmem:[#allocation2 + $0x58] sm:$0xf]
  %v4746 = vld [vmem:[#allocation2 + $0x5c] sm:$0xf]
  %v4747 = vld [vmem:[#allocation2 + $0x60] sm:$0xf]
  %v4748 = vld [vmem:[#allocation2 + $0x64] sm:$0xf]
  %v4749 = vld [vmem:[#allocation2 + $0x68] sm:$0xf]
  %v4750 = vld [vmem:[#allocation2 + $0x6c] sm:$0xf]
  %v4751 = vld [vmem:[#allocation2 + $0x70] sm:$0xf]
  %v4752 = vld [vmem:[#allocation2 + $0x74] sm:$0xf]
  %v4753 = vld [vmem:[#allocation2 + $0x78] sm:$0xf]
  %v4754 = vld [vmem:[#allocation2 + $0x7c] sm:$0xf]
  %v4755 = vld [vmem:[#allocation2 + $0x80] sm:$0xf]
  %v4756 = vld [vmem:[#allocation2 + $0x84] sm:$0xf]
  %v4757 = vld [vmem:[#allocation2 + $0x88] sm:$0xf]
  %v4758 = vld [vmem:[#allocation2 + $0x8c] sm:$0xf]
  %v4759 = vld [vmem:[#allocation2 + $0x90] sm:$0xf]
  %v4760 = vld [vmem:[#allocation2 + $0x94] sm:$0xf]
  %v4761 = vld [vmem:[#allocation2 + $0x98] sm:$0xf]
  %v4762 = vld [vmem:[#allocation2 + $0x9c] sm:$0xf]
  %v4763 = vld [vmem:[#allocation2 + $0xa0] sm:$0xf]
  %v4764 = vld [vmem:[#allocation2 + $0xa4] sm:$0x7]
  %v4765 = vld [vmem:[%s4 + $0x1c0] sm:$0xf]
  %v4766 = vld [vmem:[%s4 + $0x1c4] sm:$0xf]
  %v4767 = vld [vmem:[%s4 + $0x1c8] sm:$0xf]
  %v4768 = vld [vmem:[%s4 + $0x1cc] sm:$0xf]
  %v4769 = vld [vmem:[%s4 + $0x1d0] sm:$0xf]
  %v4770 = vld [vmem:[%s4 + $0x1d4] sm:$0xf]
  %v4771 = vld [vmem:[%s4 + $0x1d8] sm:$0xf]
  %v4772 = vld [vmem:[%s4 + $0x1dc] sm:$0xf]
  %v4773 = vld [vmem:[%s4 + $0x1e0] sm:$0xf]
  %v4774 = vld [vmem:[%s4 + $0x1e4] sm:$0xf]
  %v4775 = vld [vmem:[%s4 + $0x1e8] sm:$0xf]
  %v4776 = vld [vmem:[%s4 + $0x1ec] sm:$0xf]
  %v4777 = vld [vmem:[%s4 + $0x1f0] sm:$0xf]
  %v4778 = vld [vmem:[%s4 + $0x1f4] sm:$0xf]
  %v4779 = vld [vmem:[%s4 + $0x1f8] sm:$0xf]
  %v4780 = vld [vmem:[%s4 + $0x1fc] sm:$0xf]
  %v4802 = vunpack.c.l.b16 %v4744
  %v4803 = vunpack.c.l.b16 %v4745
  %v4804 = vunpack.c.l.b16 %v4746
  %v4805 = vunpack.c.l.b16 %v4747
  %v4806 = vunpack.c.l.b16 %v4748
  %v4807 = vunpack.c.l.b16 %v4749
  %v4808 = vunpack.c.l.b16 %v4750
  %v4809 = vunpack.c.l.b16 %v4751
  %v4810 = vunpack.c.l.b16 %v4752
  %v4811 = vunpack.c.l.b16 %v4753
  %v4812 = vunpack.c.l.b16 %v4754
  %v4813 = vunpack.c.l.b16 %v4755
  %v4814 = vunpack.c.l.b16 %v4756
  %v4815 = vunpack.c.l.b16 %v4757
  %v4816 = vunpack.c.l.b16 %v4758
  %v4817 = vunpack.c.l.b16 %v4759
  %v4818 = vunpack.c.l.b16 %v4760
  %v4819 = vunpack.c.l.b16 %v4761
  %v4820 = vunpack.c.l.b16 %v4762
  %v4821 = vunpack.c.l.b16 %v4763
  %v4822 = vunpack.c.l.b16 %v4764
  %v4823 = vpack.c.b16 %v4803, %v4802
  %v4824 = vpack.c.b16 %v4805, %v4804
  %v4825 = vpack.c.b16 %v4807, %v4806
  %v4826 = vpack.c.b16 %v4809, %v4808
  %v4827 = vpack.c.b16 %v4811, %v4810
  %v4828 = vpack.c.b16 %v4813, %v4812
  %v4829 = vpack.c.b16 %v4815, %v4814
  %v4830 = vpack.c.b16 %v4817, %v4816
  %v4831 = vpack.c.b16 %v4819, %v4818
  %v4832 = vpack.c.b16 %v4821, %v4820
  %v4833 = vpack.c.b16 %v4822, %v4822
  %vm4834 = vsmask.f32 6400
  %v4836 = vshrl.u32 %v4823, 16
  %v4838 = vrot.slane %v4836, 1
  %v4839 = vshll.u32 %v4823, 16
  %v4841 = vrot.slane %v4839, 2
  %v4842 = vor.u32 %v4838, %v4841
  %v4844 = vshrl.u32 %v4824, 16
  %v4846 = vrot.slane %v4844, 1
  %v4847 = vshll.u32 %v4824, 16
  %v4849 = vrot.slane %v4847, 2
  %v4850 = vor.u32 %v4846, %v4849
  %v4851 = vsel %vm4834, %v4842, %v4850
  %v4853 = vshrl.u32 %v4825, 16
  %v4855 = vrot.slane %v4853, 1
  %v4856 = vshll.u32 %v4825, 16
  %v4858 = vrot.slane %v4856, 2
  %v4859 = vor.u32 %v4855, %v4858
  %v4860 = vsel %vm4834, %v4850, %v4859
  %v4862 = vshrl.u32 %v4826, 16
  %v4864 = vrot.slane %v4862, 1
  %v4865 = vshll.u32 %v4826, 16
  %v4867 = vrot.slane %v4865, 2
  %v4868 = vor.u32 %v4864, %v4867
  %v4869 = vsel %vm4834, %v4859, %v4868
  %v4871 = vshrl.u32 %v4827, 16
  %v4873 = vrot.slane %v4871, 1
  %v4874 = vshll.u32 %v4827, 16
  %v4876 = vrot.slane %v4874, 2
  %v4877 = vor.u32 %v4873, %v4876
  %v4878 = vsel %vm4834, %v4868, %v4877
  %v4880 = vshrl.u32 %v4828, 16
  %v4882 = vrot.slane %v4880, 1
  %v4883 = vshll.u32 %v4828, 16
  %v4885 = vrot.slane %v4883, 2
  %v4886 = vor.u32 %v4882, %v4885
  %v4887 = vsel %vm4834, %v4877, %v4886
  %v4889 = vshrl.u32 %v4829, 16
  %v4891 = vrot.slane %v4889, 1
  %v4892 = vshll.u32 %v4829, 16
  %v4894 = vrot.slane %v4892, 2
  %v4895 = vor.u32 %v4891, %v4894
  %v4896 = vsel %vm4834, %v4886, %v4895
  %v4898 = vshrl.u32 %v4830, 16
  %v4900 = vrot.slane %v4898, 1
  %v4901 = vshll.u32 %v4830, 16
  %v4903 = vrot.slane %v4901, 2
  %v4904 = vor.u32 %v4900, %v4903
  %v4905 = vsel %vm4834, %v4895, %v4904
  %v4907 = vshrl.u32 %v4831, 16
  %v4909 = vrot.slane %v4907, 1
  %v4910 = vshll.u32 %v4831, 16
  %v4912 = vrot.slane %v4910, 2
  %v4913 = vor.u32 %v4909, %v4912
  %v4914 = vsel %vm4834, %v4904, %v4913
  %v4916 = vshrl.u32 %v4832, 16
  %v4918 = vrot.slane %v4916, 1
  %v4919 = vshll.u32 %v4832, 16
  %v4921 = vrot.slane %v4919, 2
  %v4922 = vor.u32 %v4918, %v4921
  %v4923 = vsel %vm4834, %v4913, %v4922
  %v4925 = vshrl.u32 %v4833, 16
  %v4927 = vrot.slane %v4925, 1
  %v4928 = vshll.u32 %v4833, 16
  %v4930 = vrot.slane %v4928, 2
  %v4931 = vor.u32 %v4927, %v4930
  %v4932 = vsel %vm4834, %v4922, %v4931
  %v4960 = vunpack.c.l.b16 %v4765
  %v4961 = vunpack.c.l.b16 %v4766
  %v4962 = vunpack.c.l.b16 %v4767
  %v4963 = vunpack.c.l.b16 %v4768
  %v4964 = vunpack.c.l.b16 %v4769
  %v4965 = vunpack.c.l.b16 %v4770
  %v4966 = vunpack.c.l.b16 %v4771
  %v4967 = vunpack.c.l.b16 %v4772
  %v4968 = vunpack.c.l.b16 %v4773
  %v4969 = vunpack.c.l.b16 %v4774
  %v4970 = vunpack.c.l.b16 %v4775
  %v4971 = vunpack.c.l.b16 %v4776
  %v4972 = vunpack.c.l.b16 %v4777
  %v4973 = vunpack.c.l.b16 %v4778
  %v4974 = vunpack.c.l.b16 %v4779
  %v4975 = vunpack.c.l.b16 %v4780
  %v4976 = vpack.c.b16 %v4961, %v4960
  %v4977 = vpack.c.b16 %v4963, %v4962
  %v4978 = vpack.c.b16 %v4965, %v4964
  %v4979 = vpack.c.b16 %v4967, %v4966
  %v4980 = vpack.c.b16 %v4969, %v4968
  %v4981 = vpack.c.b16 %v4971, %v4970
  %v4982 = vpack.c.b16 %v4973, %v4972
  %v4983 = vpack.c.b16 %v4975, %v4974
  %4992 = vmatprep.subr.bf16.mxu0 0
  %4993 = vmatpush1.bf16.msra.mxu0 %v4976
  %4994 = vmatprep.subr.bf16.mxu0 0
  %4995 = vmatpush1.bf16.msra.mxu0 %v4977
  %4996 = vmatprep.subr.bf16.mxu0 0
  %4997 = vmatpush1.bf16.msra.mxu0 %v4978
  %4998 = vmatprep.subr.bf16.mxu0 0
  %4999 = vmatpush1.bf16.msra.mxu0 %v4979
  %5000 = vmatprep.subr.bf16.mxu0 0
  %5001 = vmatpush1.bf16.msra.mxu0 %v4980
  %5002 = vmatprep.subr.bf16.mxu0 0
  %5003 = vmatpush1.bf16.msra.mxu0 %v4981
  %5004 = vmatprep.subr.bf16.mxu0 0
  %5005 = vmatpush1.bf16.msra.mxu0 %v4982
  %5006 = vmatprep.subr.bf16.mxu0 0
  %5007 = vmatpush1.bf16.msra.mxu0 %v4983
  %5008 = vmatprep.subr.bf16.mxu0 0
  %5009 = vmatpush1.bf16.msra.mxu0 0
  %5010 = vmatprep.subr.bf16.mxu0 0
  %5011 = vmatpush1.bf16.msra.mxu0 0
  %5012 = vmatprep.subr.bf16.mxu0 0
  %5013 = vmatpush1.bf16.msra.mxu0 0
  %5014 = vmatprep.subr.bf16.mxu0 0
  %5015 = vmatpush1.bf16.msra.mxu0 0
  %5016 = vmatprep.subr.bf16.mxu0 0
  %5017 = vmatpush1.bf16.msra.mxu0 0
  %5018 = vmatprep.subr.bf16.mxu0 0
  %5019 = vmatpush1.bf16.msra.mxu0 0
  %5020 = vmatprep.subr.bf16.mxu0 0
  %5021 = vmatpush1.bf16.msra.mxu0 0
  %5022 = vmatprep.subr.bf16.mxu0 0
  %5023 = vmatpush1.bf16.msra.mxu0 0
  %5024 = vmatprep.mubr.bf16.mxu0 0
  %5025 = vmatmul.mubr.bf16.gmra.mrb[0].mxu0 %v4851
  %v5026 = vpop.f32.mrb[0].mxu0
  %v5027 = vadd.f32 0.0, %v5026
  %v5028 = vpop.f32.mrb[0].mxu0
  %v5029 = vpop.f32.mrb[0].mxu0
  %v5030 = vadd.f32 0.0, %v5029
  %v5031 = vpop.f32.mrb[0].mxu0
  %5032 = vmatprep.mubr.bf16.mxu0 0
  %5033 = vmatmul.mubr.bf16.gmra.mrb[0].mxu0 %v4860
  %v5034 = vpop.f32.mrb[0].mxu0
  %v5035 = vadd.f32 0.0, %v5034
  %v5036 = vpop.f32.mrb[0].mxu0
  %v5037 = vpop.f32.mrb[0].mxu0
  %v5038 = vadd.f32 0.0, %v5037
  %v5039 = vpop.f32.mrb[0].mxu0
  %5040 = vmatprep.mubr.bf16.mxu0 0
  %5041 = vmatmul.mubr.bf16.gmra.mrb[0].mxu0 %v4869
  %v5042 = vpop.f32.mrb[0].mxu0
  %v5043 = vadd.f32 0.0, %v5042
  %v5044 = vpop.f32.mrb[0].mxu0
  %v5045 = vpop.f32.mrb[0].mxu0
  %v5046 = vadd.f32 0.0, %v5045
  %v5047 = vpop.f32.mrb[0].mxu0
  %5048 = vmatprep.mubr.bf16.mxu0 0
  %5049 = vmatmul.mubr.bf16.gmra.mrb[0].mxu0 %v4878
  %v5050 = vpop.f32.mrb[0].mxu0
  %v5051 = vadd.f32 0.0, %v5050
  %v5052 = vpop.f32.mrb[0].mxu0
  %v5053 = vpop.f32.mrb[0].mxu0
  %v5054 = vadd.f32 0.0, %v5053
  %v5055 = vpop.f32.mrb[0].mxu0
  %5056 = vmatprep.mubr.bf16.mxu0 0
  %5057 = vmatmul.mubr.bf16.gmra.mrb[0].mxu0 %v4887
  %v5058 = vpop.f32.mrb[0].mxu0
  %v5059 = vadd.f32 0.0, %v5058
  %v5060 = vpop.f32.mrb[0].mxu0
  %v5061 = vpop.f32.mrb[0].mxu0
  %v5062 = vadd.f32 0.0, %v5061
  %v5063 = vpop.f32.mrb[0].mxu0
  %5064 = vmatprep.mubr.bf16.mxu0 0
  %5065 = vmatmul.mubr.bf16.gmra.mrb[0].mxu0 %v4896
  %v5066 = vpop.f32.mrb[0].mxu0
  %v5067 = vadd.f32 0.0, %v5066
  %v5068 = vpop.f32.mrb[0].mxu0
  %v5069 = vpop.f32.mrb[0].mxu0
  %v5070 = vadd.f32 0.0, %v5069
  %v5071 = vpop.f32.mrb[0].mxu0
  %5072 = vmatprep.mubr.bf16.mxu0 0
  %5073 = vmatmul.mubr.bf16.gmra.mrb[0].mxu0 %v4905
  %v5074 = vpop.f32.mrb[0].mxu0
  %v5075 = vadd.f32 0.0, %v5074
  %v5076 = vpop.f32.mrb[0].mxu0
  %v5077 = vpop.f32.mrb[0].mxu0
  %v5078 = vadd.f32 0.0, %v5077
  %v5079 = vpop.f32.mrb[0].mxu0
  %5080 = vmatprep.mubr.bf16.mxu0 0
  %5081 = vmatmul.mubr.bf16.gmra.mrb[0].mxu0 %v4914
  %v5082 = vpop.f32.mrb[0].mxu0
  %v5083 = vadd.f32 0.0, %v5082
  %v5084 = vpop.f32.mrb[0].mxu0
  %v5085 = vpop.f32.mrb[0].mxu0
  %v5086 = vadd.f32 0.0, %v5085
  %v5087 = vpop.f32.mrb[0].mxu0
  %5088 = vmatprep.mubr.bf16.mxu0 0
  %5089 = vmatmul.mubr.bf16.gmra.mrb[0].mxu0 %v4923
  %v5090 = vpop.f32.mrb[0].mxu0
  %v5091 = vadd.f32 0.0, %v5090
  %v5092 = vpop.f32.mrb[0].mxu0
  %v5093 = vpop.f32.mrb[0].mxu0
  %v5094 = vadd.f32 0.0, %v5093
  %v5095 = vpop.f32.mrb[0].mxu0
  %5096 = vmatprep.mubr.bf16.mxu0 0
  %5097 = vmatmul.mubr.bf16.gmra.mrb[0].mxu0 %v4932
  %v5098 = vpop.f32.mrb[0].mxu0
  %v5099 = vadd.f32 0.0, %v5098
  %v5100 = vpop.f32.mrb[0].mxu0
  %v5101 = vpop.f32.mrb[0].mxu0
  %v5102 = vadd.f32 0.0, %v5101
  %v5103 = vpop.f32.mrb[0].mxu0
  %5104 = vmatprep.mubr.bf16.mxu0 0
  %5105 = vmatmul.mubr.bf16.gmra.mrb[0].mxu0 %v4931
  %v5106 = vpop.f32.mrb[0].mxu0
  %v5107 = vadd.f32 0.0, %v5106
  %v5108 = vpop.f32.mrb[0].mxu0
  %v5109 = vpop.f32.mrb[0].mxu0
  %v5110 = vpop.f32.mrb[0].mxu0
  %5111 = vdwg.mxu0
  %v5112 = vadd.f32 %v4723, %v5027
  %v5113 = vadd.f32 %v4724, %v5030
  %v5114 = vadd.f32 %v4725, %v5035
  %v5115 = vadd.f32 %v4726, %v5038
  %v5116 = vadd.f32 %v4727, %v5043
  %v5117 = vadd.f32 %v4728, %v5046
  %v5118 = vadd.f32 %v4729, %v5051
  %v5119 = vadd.f32 %v4730, %v5054
  %v5120 = vadd.f32 %v4731, %v5059
  %v5121 = vadd.f32 %v4732, %v5062
  %v5122 = vadd.f32 %v4733, %v5067
  %v5123 = vadd.f32 %v4734, %v5070
  %v5124 = vadd.f32 %v4735, %v5075
  %v5125 = vadd.f32 %v4736, %v5078
  %v5126 = vadd.f32 %v4737, %v5083
  %v5127 = vadd.f32 %v4738, %v5086
  %v5128 = vadd.f32 %v4739, %v5091
  %v5129 = vadd.f32 %v4740, %v5094
  %v5130 = vadd.f32 %v4741, %v5099
  %v5131 = vadd.f32 %v4742, %v5102
  %v5132 = vadd.f32 %v4743, %v5107
  %v5133 = vld [vmem:[#allocation2 + $0x4] sm:$0xe]
  %v5134 = vld [vmem:[%s4 + $0x200] sm:$0xf]
  %v5135 = vld [vmem:[%s4 + $0x204] sm:$0xf]
  %v5136 = vld [vmem:[%s4 + $0x208] sm:$0xf]
  %v5137 = vld [vmem:[%s4 + $0x20c] sm:$0xf]
  %v5138 = vld [vmem:[%s4 + $0x210] sm:$0xf]
  %v5139 = vld [vmem:[%s4 + $0x214] sm:$0xf]
  %v5140 = vld [vmem:[%s4 + $0x218] sm:$0xf]
  %v5141 = vld [vmem:[%s4 + $0x21c] sm:$0xf]
  %v5142 = vld [vmem:[%s4 + $0x220] sm:$0xf]
  %v5143 = vld [vmem:[%s4 + $0x224] sm:$0xf]
  %v5144 = vld [vmem:[%s4 + $0x228] sm:$0xf]
  %v5145 = vld [vmem:[%s4 + $0x22c] sm:$0xf]
  %v5146 = vld [vmem:[%s4 + $0x230] sm:$0xf]
  %v5147 = vld [vmem:[%s4 + $0x234] sm:$0xf]
  %v5148 = vld [vmem:[%s4 + $0x238] sm:$0xf]
  %v5149 = vld [vmem:[%s4 + $0x23c] sm:$0xf]
  %v5151 = vunpack.c.l.b16 %v5133
  %v5152 = vpack.c.b16 %v4426, %v5151
  %v5153 = vrot.slane %v5152, 1
  %v5154 = vrot.slane %v4447, 1
  %v5155 = vsel %vm2683, %v5153, %v5154
  %v5156 = vrot.slane %v4448, 1
  %v5157 = vsel %vm2683, %v5154, %v5156
  %v5158 = vrot.slane %v4449, 1
  %v5159 = vsel %vm2683, %v5156, %v5158
  %v5160 = vrot.slane %v4450, 1
  %v5161 = vsel %vm2683, %v5158, %v5160
  %v5162 = vrot.slane %v4451, 1
  %v5163 = vsel %vm2683, %v5160, %v5162
  %v5164 = vrot.slane %v4452, 1
  %v5165 = vsel %vm2683, %v5162, %v5164
  %v5166 = vrot.slane %v4453, 1
  %v5167 = vsel %vm2683, %v5164, %v5166
  %v5168 = vrot.slane %v4454, 1
  %v5169 = vsel %vm2683, %v5166, %v5168
  %v5170 = vrot.slane %v4455, 1
  %v5171 = vsel %vm2683, %v5168, %v5170
  %v5172 = vrot.slane %v4456, 1
  %v5173 = vsel %vm2683, %v5170, %v5172
  %v5201 = vunpack.c.l.b16 %v5134
  %v5202 = vunpack.c.l.b16 %v5135
  %v5203 = vunpack.c.l.b16 %v5136
  %v5204 = vunpack.c.l.b16 %v5137
  %v5205 = vunpack.c.l.b16 %v5138
  %v5206 = vunpack.c.l.b16 %v5139
  %v5207 = vunpack.c.l.b16 %v5140
  %v5208 = vunpack.c.l.b16 %v5141
  %v5209 = vunpack.c.l.b16 %v5142
  %v5210 = vunpack.c.l.b16 %v5143
  %v5211 = vunpack.c.l.b16 %v5144
  %v5212 = vunpack.c.l.b16 %v5145
  %v5213 = vunpack.c.l.b16 %v5146
  %v5214 = vunpack.c.l.b16 %v5147
  %v5215 = vunpack.c.l.b16 %v5148
  %v5216 = vunpack.c.l.b16 %v5149
  %v5217 = vpack.c.b16 %v5202, %v5201
  %v5218 = vpack.c.b16 %v5204, %v5203
  %v5219 = vpack.c.b16 %v5206, %v5205
  %v5220 = vpack.c.b16 %v5208, %v5207
  %v5221 = vpack.c.b16 %v5210, %v5209
  %v5222 = vpack.c.b16 %v5212, %v5211
  %v5223 = vpack.c.b16 %v5214, %v5213
  %v5224 = vpack.c.b16 %v5216, %v5215
  %5233 = vmatprep.subr.bf16.mxu0 0
  %5234 = vmatpush1.bf16.msra.mxu0 %v5217
  %5235 = vmatprep.subr.bf16.mxu0 0
  %5236 = vmatpush1.bf16.msra.mxu0 %v5218
  %5237 = vmatprep.subr.bf16.mxu0 0
  %5238 = vmatpush1.bf16.msra.mxu0 %v5219
  %5239 = vmatprep.subr.bf16.mxu0 0
  %5240 = vmatpush1.bf16.msra.mxu0 %v5220
  %5241 = vmatprep.subr.bf16.mxu0 0
  %5242 = vmatpush1.bf16.msra.mxu0 %v5221
  %5243 = vmatprep.subr.bf16.mxu0 0
  %5244 = vmatpush1.bf16.msra.mxu0 %v5222
  %5245 = vmatprep.subr.bf16.mxu0 0
  %5246 = vmatpush1.bf16.msra.mxu0 %v5223
  %5247 = vmatprep.subr.bf16.mxu0 0
  %5248 = vmatpush1.bf16.msra.mxu0 %v5224
  %5249 = vmatprep.subr.bf16.mxu0 0
  %5250 = vmatpush1.bf16.msra.mxu0 0
  %5251 = vmatprep.subr.bf16.mxu0 0
  %5252 = vmatpush1.bf16.msra.mxu0 0
  %5253 = vmatprep.subr.bf16.mxu0 0
  %5254 = vmatpush1.bf16.msra.mxu0 0
  %5255 = vmatprep.subr.bf16.mxu0 0
  %5256 = vmatpush1.bf16.msra.mxu0 0
  %5257 = vmatprep.subr.bf16.mxu0 0
  %5258 = vmatpush1.bf16.msra.mxu0 0
  %5259 = vmatprep.subr.bf16.mxu0 0
  %5260 = vmatpush1.bf16.msra.mxu0 0
  %5261 = vmatprep.subr.bf16.mxu0 0
  %5262 = vmatpush1.bf16.msra.mxu0 0
  %5263 = vmatprep.subr.bf16.mxu0 0
  %5264 = vmatpush1.bf16.msra.mxu0 0
  %5265 = vmatprep.mubr.bf16.mxu0 0
  %5266 = vmatmul.mubr.bf16.gmra.mrb[0].mxu0 %v5155
  %v5267 = vpop.f32.mrb[0].mxu0
  %v5268 = vadd.f32 0.0, %v5267
  %v5269 = vpop.f32.mrb[0].mxu0
  %v5270 = vpop.f32.mrb[0].mxu0
  %v5271 = vadd.f32 0.0, %v5270
  %v5272 = vpop.f32.mrb[0].mxu0
  %5273 = vmatprep.mubr.bf16.mxu0 0
  %5274 = vmatmul.mubr.bf16.gmra.mrb[0].mxu0 %v5157
  %v5275 = vpop.f32.mrb[0].mxu0
  %v5276 = vadd.f32 0.0, %v5275
  %v5277 = vpop.f32.mrb[0].mxu0
  %v5278 = vpop.f32.mrb[0].mxu0
  %v5279 = vadd.f32 0.0, %v5278
  %v5280 = vpop.f32.mrb[0].mxu0
  %5281 = vmatprep.mubr.bf16.mxu0 0
  %5282 = vmatmul.mubr.bf16.gmra.mrb[0].mxu0 %v5159
  %v5283 = vpop.f32.mrb[0].mxu0
  %v5284 = vadd.f32 0.0, %v5283
  %v5285 = vpop.f32.mrb[0].mxu0
  %v5286 = vpop.f32.mrb[0].mxu0
  %v5287 = vadd.f32 0.0, %v5286
  %v5288 = vpop.f32.mrb[0].mxu0
  %5289 = vmatprep.mubr.bf16.mxu0 0
  %5290 = vmatmul.mubr.bf16.gmra.mrb[0].mxu0 %v5161
  %v5291 = vpop.f32.mrb[0].mxu0
  %v5292 = vadd.f32 0.0, %v5291
  %v5293 = vpop.f32.mrb[0].mxu0
  %v5294 = vpop.f32.mrb[0].mxu0
  %v5295 = vadd.f32 0.0, %v5294
  %v5296 = vpop.f32.mrb[0].mxu0
  %5297 = vmatprep.mubr.bf16.mxu0 0
  %5298 = vmatmul.mubr.bf16.gmra.mrb[0].mxu0 %v5163
  %v5299 = vpop.f32.mrb[0].mxu0
  %v5300 = vadd.f32 0.0, %v5299
  %v5301 = vpop.f32.mrb[0].mxu0
  %v5302 = vpop.f32.mrb[0].mxu0
  %v5303 = vadd.f32 0.0, %v5302
  %v5304 = vpop.f32.mrb[0].mxu0
  %5305 = vmatprep.mubr.bf16.mxu0 0
  %5306 = vmatmul.mubr.bf16.gmra.mrb[0].mxu0 %v5165
  %v5307 = vpop.f32.mrb[0].mxu0
  %v5308 = vadd.f32 0.0, %v5307
  %v5309 = vpop.f32.mrb[0].mxu0
  %v5310 = vpop.f32.mrb[0].mxu0
  %v5311 = vadd.f32 0.0, %v5310
  %v5312 = vpop.f32.mrb[0].mxu0
  %5313 = vmatprep.mubr.bf16.mxu0 0
  %5314 = vmatmul.mubr.bf16.gmra.mrb[0].mxu0 %v5167
  %v5315 = vpop.f32.mrb[0].mxu0
  %v5316 = vadd.f32 0.0, %v5315
  %v5317 = vpop.f32.mrb[0].mxu0
  %v5318 = vpop.f32.mrb[0].mxu0
  %v5319 = vadd.f32 0.0, %v5318
  %v5320 = vpop.f32.mrb[0].mxu0
  %5321 = vmatprep.mubr.bf16.mxu0 0
  %5322 = vmatmul.mubr.bf16.gmra.mrb[0].mxu0 %v5169
  %v5323 = vpop.f32.mrb[0].mxu0
  %v5324 = vadd.f32 0.0, %v5323
  %v5325 = vpop.f32.mrb[0].mxu0
  %v5326 = vpop.f32.mrb[0].mxu0
  %v5327 = vadd.f32 0.0, %v5326
  %v5328 = vpop.f32.mrb[0].mxu0
  %5329 = vmatprep.mubr.bf16.mxu0 0
  %5330 = vmatmul.mubr.bf16.gmra.mrb[0].mxu0 %v5171
  %v5331 = vpop.f32.mrb[0].mxu0
  %v5332 = vadd.f32 0.0, %v5331
  %v5333 = vpop.f32.mrb[0].mxu0
  %v5334 = vpop.f32.mrb[0].mxu0
  %v5335 = vadd.f32 0.0, %v5334
  %v5336 = vpop.f32.mrb[0].mxu0
  %5337 = vmatprep.mubr.bf16.mxu0 0
  %5338 = vmatmul.mubr.bf16.gmra.mrb[0].mxu0 %v5173
  %v5339 = vpop.f32.mrb[0].mxu0
  %v5340 = vadd.f32 0.0, %v5339
  %v5341 = vpop.f32.mrb[0].mxu0
  %v5342 = vpop.f32.mrb[0].mxu0
  %v5343 = vadd.f32 0.0, %v5342
  %v5344 = vpop.f32.mrb[0].mxu0
  %5345 = vmatprep.mubr.bf16.mxu0 0
  %5346 = vmatmul.mubr.bf16.gmra.mrb[0].mxu0 %v5172
  %v5347 = vpop.f32.mrb[0].mxu0
  %v5348 = vadd.f32 0.0, %v5347
  %v5349 = vpop.f32.mrb[0].mxu0
  %v5350 = vpop.f32.mrb[0].mxu0
  %v5351 = vpop.f32.mrb[0].mxu0
  %5352 = vdwg.mxu0
  %v5353 = vadd.f32 %v5112, %v5268
  %v5354 = vadd.f32 %v5113, %v5271
  %v5355 = vadd.f32 %v5114, %v5276
  %v5356 = vadd.f32 %v5115, %v5279
  %v5357 = vadd.f32 %v5116, %v5284
  %v5358 = vadd.f32 %v5117, %v5287
  %v5359 = vadd.f32 %v5118, %v5292
  %v5360 = vadd.f32 %v5119, %v5295
  %v5361 = vadd.f32 %v5120, %v5300
  %v5362 = vadd.f32 %v5121, %v5303
  %v5363 = vadd.f32 %v5122, %v5308
  %v5364 = vadd.f32 %v5123, %v5311
  %v5365 = vadd.f32 %v5124, %v5316
  %v5366 = vadd.f32 %v5125, %v5319
  %v5367 = vadd.f32 %v5126, %v5324
  %v5368 = vadd.f32 %v5127, %v5327
  %v5369 = vadd.f32 %v5128, %v5332
  %v5370 = vadd.f32 %v5129, %v5335
  %v5371 = vadd.f32 %v5130, %v5340
  %v5372 = vadd.f32 %v5131, %v5343
  %v5373 = vadd.f32 %v5132, %v5348
  %v5374 = vld [vmem:[%s1 + $0x1e6] sm:$0xff]
  %v5375 = vld [vmem:[%s1 + $0x1ee] sm:$0xff]
  %v5376 = vld [vmem:[%s1 + $0x1f6] sm:$0xff]
  %v5377 = vld [vmem:[%s1 + $0x1fe] sm:$0xff]
  %v5378 = vld [vmem:[%s1 + $0x206] sm:$0xff]
  %v5379 = vld [vmem:[%s1 + $0x20e] sm:$0xff]
  %v5380 = vld [vmem:[%s1 + $0x216] sm:$0xff]
  %v5381 = vld [vmem:[%s1 + $0x21e] sm:$0xff]
  %v5382 = vld [vmem:[%s1 + $0x226] sm:$0xff]
  %v5383 = vld [vmem:[%s1 + $0x22e] sm:$0xff]
  %v5384 = vld [vmem:[%s1 + $0x236] sm:$0xff]
  %v5385 = vld [vmem:[%s1 + $0x23e] sm:$0xff]
  %v5386 = vld [vmem:[%s1 + $0x246] sm:$0xff]
  %v5387 = vld [vmem:[%s1 + $0x24e] sm:$0xff]
  %v5388 = vld [vmem:[%s1 + $0x256] sm:$0xff]
  %v5389 = vld [vmem:[%s1 + $0x25e] sm:$0xff]
  %v5390 = vld [vmem:[%s1 + $0x266] sm:$0xff]
  %v5391 = vld [vmem:[%s1 + $0x26e] sm:$0xff]
  %v5392 = vld [vmem:[%s1 + $0x276] sm:$0xff]
  %v5393 = vld [vmem:[%s1 + $0x27e] sm:$0xff]
  %v5394 = vld [vmem:[%s1 + $0x286] sm:$0x3]
  %v5395 = vld [vmem:[%s5] sm:$0x7]
  %v5396 = vlaneseq
  %v5397 = vshrl.u32 %v5396, 7
  %v5398 = vsub.s32 0, %v5397
  %v5399 = vrot.slane %v5395, %v5398
  %v5400 = vadd.f32 %v5353, %v5399
  %v5401 = vadd.f32 %v5354, %v5399
  %v5402 = vadd.f32 %v5355, %v5399
  %v5403 = vadd.f32 %v5356, %v5399
  %v5404 = vadd.f32 %v5357, %v5399
  %v5405 = vadd.f32 %v5358, %v5399
  %v5406 = vadd.f32 %v5359, %v5399
  %v5407 = vadd.f32 %v5360, %v5399
  %v5408 = vadd.f32 %v5361, %v5399
  %v5409 = vadd.f32 %v5362, %v5399
  %v5410 = vadd.f32 %v5363, %v5399
  %v5411 = vadd.f32 %v5364, %v5399
  %v5412 = vadd.f32 %v5365, %v5399
  %v5413 = vadd.f32 %v5366, %v5399
  %v5414 = vadd.f32 %v5367, %v5399
  %v5415 = vadd.f32 %v5368, %v5399
  %v5416 = vadd.f32 %v5369, %v5399
  %v5417 = vadd.f32 %v5370, %v5399
  %v5418 = vadd.f32 %v5371, %v5399
  %v5419 = vadd.f32 %v5372, %v5399
  %v5420 = vadd.f32 %v5373, %v5399
  %5422 = vset.pattern.permute.xlu0 0
  %5423 = vperm.xlu0 %5422, %v5374
  %v5424 = vpop.permute.xlu0 %5423
  %5427 = vset.pattern.permute.xlu0 0
  %5428 = vperm.xlu0 %5427, %v5375
  %v5429 = vpop.permute.xlu0 %5428
  %5432 = vset.pattern.permute.xlu0 0
  %5433 = vperm.xlu0 %5432, %v5376
  %v5434 = vpop.permute.xlu0 %5433
  %5437 = vset.pattern.permute.xlu0 0
  %5438 = vperm.xlu0 %5437, %v5377
  %v5439 = vpop.permute.xlu0 %5438
  %5442 = vset.pattern.permute.xlu0 0
  %5443 = vperm.xlu0 %5442, %v5378
  %v5444 = vpop.permute.xlu0 %5443
  %5447 = vset.pattern.permute.xlu0 0
  %5448 = vperm.xlu0 %5447, %v5379
  %v5449 = vpop.permute.xlu0 %5448
  %5452 = vset.pattern.permute.xlu0 0
  %5453 = vperm.xlu0 %5452, %v5380
  %v5454 = vpop.permute.xlu0 %5453
  %5457 = vset.pattern.permute.xlu0 0
  %5458 = vperm.xlu0 %5457, %v5381
  %v5459 = vpop.permute.xlu0 %5458
  %5462 = vset.pattern.permute.xlu0 0
  %5463 = vperm.xlu0 %5462, %v5382
  %v5464 = vpop.permute.xlu0 %5463
  %5467 = vset.pattern.permute.xlu0 0
  %5468 = vperm.xlu0 %5467, %v5383
  %v5469 = vpop.permute.xlu0 %5468
  %5472 = vset.pattern.permute.xlu0 0
  %5473 = vperm.xlu0 %5472, %v5384
  %v5474 = vpop.permute.xlu0 %5473
  %5477 = vset.pattern.permute.xlu0 0
  %5478 = vperm.xlu0 %5477, %v5385
  %v5479 = vpop.permute.xlu0 %5478
  %5482 = vset.pattern.permute.xlu0 0
  %5483 = vperm.xlu0 %5482, %v5386
  %v5484 = vpop.permute.xlu0 %5483
  %5487 = vset.pattern.permute.xlu0 0
  %5488 = vperm.xlu0 %5487, %v5387
  %v5489 = vpop.permute.xlu0 %5488
  %5492 = vset.pattern.permute.xlu0 0
  %5493 = vperm.xlu0 %5492, %v5388
  %v5494 = vpop.permute.xlu0 %5493
  %5497 = vset.pattern.permute.xlu0 0
  %5498 = vperm.xlu0 %5497, %v5389
  %v5499 = vpop.permute.xlu0 %5498
  %5502 = vset.pattern.permute.xlu0 0
  %5503 = vperm.xlu0 %5502, %v5390
  %v5504 = vpop.permute.xlu0 %5503
  %5507 = vset.pattern.permute.xlu0 0
  %5508 = vperm.xlu0 %5507, %v5391
  %v5509 = vpop.permute.xlu0 %5508
  %5512 = vset.pattern.permute.xlu0 0
  %5513 = vperm.xlu0 %5512, %v5392
  %v5514 = vpop.permute.xlu0 %5513
  %5517 = vset.pattern.permute.xlu0 0
  %5518 = vperm.xlu0 %5517, %v5393
  %v5519 = vpop.permute.xlu0 %5518
  %5522 = vset.pattern.permute.xlu0 0
  %5523 = vperm.xlu0 %5522, %v5394
  %v5524 = vpop.permute.xlu0 %5523
  %v5526 = vmul.f32 %v5400, %v5424
  %v5527 = vmul.f32 %v5401, %v5429
  %v5528 = vmul.f32 %v5402, %v5434
  %v5529 = vmul.f32 %v5403, %v5439
  %v5530 = vmul.f32 %v5404, %v5444
  %v5531 = vmul.f32 %v5405, %v5449
  %v5532 = vmul.f32 %v5406, %v5454
  %v5533 = vmul.f32 %v5407, %v5459
  %v5534 = vmul.f32 %v5408, %v5464
  %v5535 = vmul.f32 %v5409, %v5469
  %v5536 = vmul.f32 %v5410, %v5474
  %v5537 = vmul.f32 %v5411, %v5479
  %v5538 = vmul.f32 %v5412, %v5484
  %v5539 = vmul.f32 %v5413, %v5489
  %v5540 = vmul.f32 %v5414, %v5494
  %v5541 = vmul.f32 %v5415, %v5499
  %v5542 = vmul.f32 %v5416, %v5504
  %v5543 = vmul.f32 %v5417, %v5509
  %v5544 = vmul.f32 %v5418, %v5514
  %v5545 = vmul.f32 %v5419, %v5519
  %v5546 = vmul.f32 %v5420, %v5524
  %v5547 = vadd.f32 %v5526, %v5527
  %v5548 = vadd.f32 %v5547, %v5528
  %v5549 = vadd.f32 %v5548, %v5529
  %v5550 = vadd.f32 %v5549, %v5530
  %v5551 = vadd.f32 %v5550, %v5531
  %v5552 = vadd.f32 %v5551, %v5532
  %v5553 = vadd.f32 %v5552, %v5533
  %v5554 = vadd.f32 %v5553, %v5534
  %v5555 = vadd.f32 %v5554, %v5535
  %v5556 = vadd.f32 %v5555, %v5536
  %v5557 = vadd.f32 %v5556, %v5537
  %v5558 = vadd.f32 %v5557, %v5538
  %v5559 = vadd.f32 %v5558, %v5539
  %v5560 = vadd.f32 %v5559, %v5540
  %v5561 = vadd.f32 %v5560, %v5541
  %v5562 = vadd.f32 %v5561, %v5542
  %v5563 = vadd.f32 %v5562, %v5543
  %v5564 = vadd.f32 %v5563, %v5544
  %v5565 = vadd.f32 %v5564, %v5545
  %v5566 = vsel %vm538, %v5546, 0.0
  %v5567 = vadd.f32 %v5565, %v5566
  %v5568 = vrot.slane %v5567, 4
  %v5569 = vadd.f32 %v5567, %v5568
  %v5570 = vrot.slane %v5569, 2
  %v5571 = vadd.f32 %v5569, %v5570
  %v5572 = vrot.slane %v5571, 1
  %v5573 = vadd.f32 %v5571, %v5572
  %v5574 = vmul.f32 %v5573, 0.0078125
  %v5575 = vmul.f32 %v5526, %v5400
  %v5576 = vmul.f32 %v5527, %v5401
  %v5577 = vmul.f32 %v5528, %v5402
  %v5578 = vmul.f32 %v5529, %v5403
  %v5579 = vmul.f32 %v5530, %v5404
  %v5580 = vmul.f32 %v5531, %v5405
  %v5581 = vmul.f32 %v5532, %v5406
  %v5582 = vmul.f32 %v5533, %v5407
  %v5583 = vmul.f32 %v5534, %v5408
  %v5584 = vmul.f32 %v5535, %v5409
  %v5585 = vmul.f32 %v5536, %v5410
  %v5586 = vmul.f32 %v5537, %v5411
  %v5587 = vmul.f32 %v5538, %v5412
  %v5588 = vmul.f32 %v5539, %v5413
  %v5589 = vmul.f32 %v5540, %v5414
  %v5590 = vmul.f32 %v5541, %v5415
  %v5591 = vmul.f32 %v5542, %v5416
  %v5592 = vmul.f32 %v5543, %v5417
  %v5593 = vmul.f32 %v5544, %v5418
  %v5594 = vmul.f32 %v5545, %v5419
  %v5595 = vmul.f32 %v5546, %v5420
  %v5596 = vadd.f32 %v5575, %v5576
  %v5597 = vadd.f32 %v5596, %v5577
  %v5598 = vadd.f32 %v5597, %v5578
  %v5599 = vadd.f32 %v5598, %v5579
  %v5600 = vadd.f32 %v5599, %v5580
  %v5601 = vadd.f32 %v5600, %v5581
  %v5602 = vadd.f32 %v5601, %v5582
  %v5603 = vadd.f32 %v5602, %v5583
  %v5604 = vadd.f32 %v5603, %v5584
  %v5605 = vadd.f32 %v5604, %v5585
  %v5606 = vadd.f32 %v5605, %v5586
  %v5607 = vadd.f32 %v5606, %v5587
  %v5608 = vadd.f32 %v5607, %v5588
  %v5609 = vadd.f32 %v5608, %v5589
  %v5610 = vadd.f32 %v5609, %v5590
  %v5611 = vadd.f32 %v5610, %v5591
  %v5612 = vadd.f32 %v5611, %v5592
  %v5613 = vadd.f32 %v5612, %v5593
  %v5614 = vadd.f32 %v5613, %v5594
  %v5615 = vsel %vm538, %v5595, 0.0
  %v5616 = vadd.f32 %v5614, %v5615
  %v5617 = vrot.slane %v5616, 4
  %v5618 = vadd.f32 %v5616, %v5617
  %v5619 = vrot.slane %v5618, 2
  %v5620 = vadd.f32 %v5618, %v5619
  %v5621 = vrot.slane %v5620, 1
  %v5622 = vadd.f32 %v5620, %v5621
  %v5623 = vmul.f32 %v5622, 0.0078125
  %v5624 = vmul.f32 %v5574, %v5574
  %v5625 = vsub.f32 %v5623, %v5624
  %v5626 = vmax.f32 %v5625, 0.0
  %v5627 = vadd.f32 %v5626, 1e-05
  %v5628 = vrsqrt.pop %v5627
  %v5629 = vmul.f32 %v5395, %v5628
  %v5630 = vmul.f32 %v5574, %v5629
  %v5632 = vrot.slane %v5630, 7
  %v5634 = vsub.f32 %v5395, %v5632
  %v5635 = vlaneseq
  %v5636 = vshrl.u32 %v5635, 7
  %v5637 = vsub.s32 1, %v5636
  %v5638 = vrot.slane %v5629, %v5637
  %v5639 = vmul.f32 %v5400, %v5638
  %v5640 = vmul.f32 %v5401, %v5638
  %v5641 = vmul.f32 %v5402, %v5638
  %v5642 = vmul.f32 %v5403, %v5638
  %v5643 = vmul.f32 %v5404, %v5638
  %v5644 = vmul.f32 %v5405, %v5638
  %v5645 = vmul.f32 %v5406, %v5638
  %v5646 = vmul.f32 %v5407, %v5638
  %v5647 = vmul.f32 %v5408, %v5638
  %v5648 = vmul.f32 %v5409, %v5638
  %v5649 = vmul.f32 %v5410, %v5638
  %v5650 = vmul.f32 %v5411, %v5638
  %v5651 = vmul.f32 %v5412, %v5638
  %v5652 = vmul.f32 %v5413, %v5638
  %v5653 = vmul.f32 %v5414, %v5638
  %v5654 = vmul.f32 %v5415, %v5638
  %v5655 = vmul.f32 %v5416, %v5638
  %v5656 = vmul.f32 %v5417, %v5638
  %v5657 = vmul.f32 %v5418, %v5638
  %v5658 = vmul.f32 %v5419, %v5638
  %v5659 = vmul.f32 %v5420, %v5638
  %v5660 = vlaneseq
  %v5661 = vshrl.u32 %v5660, 7
  %v5662 = vsub.s32 2, %v5661
  %v5663 = vrot.slane %v5634, %v5662
  %v5664 = vadd.f32 %v5639, %v5663
  %v5665 = vadd.f32 %v5640, %v5663
  %v5666 = vadd.f32 %v5641, %v5663
  %v5667 = vadd.f32 %v5642, %v5663
  %v5668 = vadd.f32 %v5643, %v5663
  %v5669 = vadd.f32 %v5644, %v5663
  %v5670 = vadd.f32 %v5645, %v5663
  %v5671 = vadd.f32 %v5646, %v5663
  %v5672 = vadd.f32 %v5647, %v5663
  %v5673 = vadd.f32 %v5648, %v5663
  %v5674 = vadd.f32 %v5649, %v5663
  %v5675 = vadd.f32 %v5650, %v5663
  %v5676 = vadd.f32 %v5651, %v5663
  %v5677 = vadd.f32 %v5652, %v5663
  %v5678 = vadd.f32 %v5653, %v5663
  %v5679 = vadd.f32 %v5654, %v5663
  %v5680 = vadd.f32 %v5655, %v5663
  %v5681 = vadd.f32 %v5656, %v5663
  %v5682 = vadd.f32 %v5657, %v5663
  %v5683 = vadd.f32 %v5658, %v5663
  %v5684 = vadd.f32 %v5659, %v5663
  %vm5685 = vcmp.ge.f32.partialorder %v5664, 0.0
  %vm5686 = vcmp.ge.f32.partialorder %v5665, 0.0
  %vm5687 = vcmp.ge.f32.partialorder %v5666, 0.0
  %vm5688 = vcmp.ge.f32.partialorder %v5667, 0.0
  %vm5689 = vcmp.ge.f32.partialorder %v5668, 0.0
  %vm5690 = vcmp.ge.f32.partialorder %v5669, 0.0
  %vm5691 = vcmp.ge.f32.partialorder %v5670, 0.0
  %vm5692 = vcmp.ge.f32.partialorder %v5671, 0.0
  %vm5693 = vcmp.ge.f32.partialorder %v5672, 0.0
  %vm5694 = vcmp.ge.f32.partialorder %v5673, 0.0
  %vm5695 = vcmp.ge.f32.partialorder %v5674, 0.0
  %vm5696 = vcmp.ge.f32.partialorder %v5675, 0.0
  %vm5697 = vcmp.ge.f32.partialorder %v5676, 0.0
  %vm5698 = vcmp.ge.f32.partialorder %v5677, 0.0
  %vm5699 = vcmp.ge.f32.partialorder %v5678, 0.0
  %vm5700 = vcmp.ge.f32.partialorder %v5679, 0.0
  %vm5701 = vcmp.ge.f32.partialorder %v5680, 0.0
  %vm5702 = vcmp.ge.f32.partialorder %v5681, 0.0
  %vm5703 = vcmp.ge.f32.partialorder %v5682, 0.0
  %vm5704 = vcmp.ge.f32.partialorder %v5683, 0.0
  %vm5705 = vcmp.ge.f32.partialorder %v5684, 0.0
  %v5706 = vmul.f32 %v5664, 0.01
  %v5707 = vmul.f32 %v5665, 0.01
  %v5708 = vmul.f32 %v5666, 0.01
  %v5709 = vmul.f32 %v5667, 0.01
  %v5710 = vmul.f32 %v5668, 0.01
  %v5711 = vmul.f32 %v5669, 0.01
  %v5712 = vmul.f32 %v5670, 0.01
  %v5713 = vmul.f32 %v5671, 0.01
  %v5714 = vmul.f32 %v5672, 0.01
  %v5715 = vmul.f32 %v5673, 0.01
  %v5716 = vmul.f32 %v5674, 0.01
  %v5717 = vmul.f32 %v5675, 0.01
  %v5718 = vmul.f32 %v5676, 0.01
  %v5719 = vmul.f32 %v5677, 0.01
  %v5720 = vmul.f32 %v5678, 0.01
  %v5721 = vmul.f32 %v5679, 0.01
  %v5722 = vmul.f32 %v5680, 0.01
  %v5723 = vmul.f32 %v5681, 0.01
  %v5724 = vmul.f32 %v5682, 0.01
  %v5725 = vmul.f32 %v5683, 0.01
  %v5726 = vmul.f32 %v5684, 0.01
  %v5727 = vsel %vm5685, %v5664, %v5706
  %v5728 = vsel %vm5686, %v5665, %v5707
  %v5729 = vsel %vm5687, %v5666, %v5708
  %v5730 = vsel %vm5688, %v5667, %v5709
  %v5731 = vsel %vm5689, %v5668, %v5710
  %v5732 = vsel %vm5690, %v5669, %v5711
  %v5733 = vsel %vm5691, %v5670, %v5712
  %v5734 = vsel %vm5692, %v5671, %v5713
  %v5735 = vsel %vm5693, %v5672, %v5714
  %v5736 = vsel %vm5694, %v5673, %v5715
  %v5737 = vsel %vm5695, %v5674, %v5716
  %v5738 = vsel %vm5696, %v5675, %v5717
  %v5739 = vsel %vm5697, %v5676, %v5718
  %v5740 = vsel %vm5698, %v5677, %v5719
  %v5741 = vsel %vm5699, %v5678, %v5720
  %v5742 = vsel %vm5700, %v5679, %v5721
  %v5743 = vsel %vm5701, %v5680, %v5722
  %v5744 = vsel %vm5702, %v5681, %v5723
  %v5745 = vsel %vm5703, %v5682, %v5724
  %v5746 = vsel %vm5704, %v5683, %v5725
  %v5747 = vsel %vm5705, %v5684, %v5726
  %5748 = vst [vmem:[%s6] sm:$0xff] %v5727
  %5749 = vst [vmem:[%s6 + $0x8] sm:$0xff] %v5728
  %5750 = vst [vmem:[%s6 + $0x10] sm:$0xff] %v5729
  %5751 = vst [vmem:[%s6 + $0x18] sm:$0xff] %v5730
  %5752 = vst [vmem:[%s6 + $0x20] sm:$0xff] %v5731
  %5753 = vst [vmem:[%s6 + $0x28] sm:$0xff] %v5732
  %5754 = vst [vmem:[%s6 + $0x30] sm:$0xff] %v5733
  %5755 = vst [vmem:[%s6 + $0x38] sm:$0xff] %v5734
  %5756 = vst [vmem:[%s6 + $0x40] sm:$0xff] %v5735
  %5757 = vst [vmem:[%s6 + $0x48] sm:$0xff] %v5736
  %5758 = vst [vmem:[%s6 + $0x50] sm:$0xff] %v5737
  %5759 = vst [vmem:[%s6 + $0x58] sm:$0xff] %v5738
  %5760 = vst [vmem:[%s6 + $0x60] sm:$0xff] %v5739
  %5761 = vst [vmem:[%s6 + $0x68] sm:$0xff] %v5740
  %5762 = vst [vmem:[%s6 + $0x70] sm:$0xff] %v5741
  %5763 = vst [vmem:[%s6 + $0x78] sm:$0xff] %v5742
  %5764 = vst [vmem:[%s6 + $0x80] sm:$0xff] %v5743
  %5765 = vst [vmem:[%s6 + $0x88] sm:$0xff] %v5744
  %5766 = vst [vmem:[%s6 + $0x90] sm:$0xff] %v5745
  %5767 = vst [vmem:[%s6 + $0x98] sm:$0xff] %v5746
  %5768 = vst [vmem:[%s6 + $0xa0] sm:$0x3] %v5747
  // Predicated region
  $region26: #{head_block_pallas.1} parent=0 // pred_check
    _
  $region27: #{head_block_pallas.1} parent=0 // pred_check_branch
    %5770 = sbr.rel (0) target = $region29
  $region28: #{head_block_pallas.1} parent=0 // pred_region
    _
  $region29: #{head_block_pallas.1} parent=0 // pred_fallthru
    _
  // Predicated region
  $region30: #{head_block_pallas.1} parent=0 // pred_check
    _
  $region31: #{head_block_pallas.1} parent=0 // pred_check_branch
    %5772 = sbr.rel (0) target = $region33
  $region32: #{head_block_pallas.1} parent=0 // pred_region
    _
  $region33: #{head_block_pallas.1} parent=0 // pred_fallthru
    _

</llo_original>
